<compile_context>
chip_gen: v7x
topology: tpu7x:2x2x1
jax: 0.10.0
libtpu: 0.0.40
codegen_flags: <defaults>
</compile_context>

<pallas_src>
import functools
import numpy as np
import jax
import jax.numpy as jnp
from jax.experimental import pallas as pl
from jax.experimental.pallas import tpu as pltpu  # noqa: F401  (kept for parity / future scratch use)


# ---------------------------------------------------------------------------
# BatchNorm(train) + ELU helper (one-pass stats; used by kernel and reference)
# ---------------------------------------------------------------------------
def _bn_elu(y, gamma, beta):
    eps = 1e-5
    inv_n = 1.0 / y.shape[0]
    mu = jnp.sum(y, axis=0, keepdims=True) * inv_n
    ex2 = jnp.sum(y * y, axis=0, keepdims=True) * inv_n
    var = ex2 - mu * mu                                   # biased (training BN)
    yn = (y - mu) * jax.lax.rsqrt(var + eps) * gamma + beta
    # ELU(alpha=1); clamp exp argument so the discarded branch never overflows.
    return jnp.where(yn > 0, yn, jnp.exp(jnp.minimum(yn, 0.0)) - 1.0)


# ---------------------------------------------------------------------------
# Fused kernel: layout conversion + GRU time loop + encoder_head + predictor
# ---------------------------------------------------------------------------
def fused_kernel(x_ref,
                 wih_r_ref, wih_z_ref, wih_n_ref,
                 bi_r_ref, bi_z_ref, bi_n_ref, bhn_ref,
                 whh_r_ref, whh_z_ref, whh_n_ref,
                 w1_ref, b1_ref, g1_ref, be1_ref,
                 w2_ref, b2_ref, g2_ref, be2_ref,
                 w3_ref, b3_ref, g3_ref, be3_ref,
                 w4_ref, b4_ref, g4_ref, be4_ref,
                 out_x_ref, out_xp_ref, *, B, S, H, out_size):
    f32 = jnp.float32
    bf16 = jnp.bfloat16

    # ---- Phase 0: batch-major -> time-major INSIDE the kernel (no wrapper HLO)
    # row t*B + b of x_tm == (batch b, time t).  Static middle-index ref slices.
    x_tm = jnp.concatenate([x_ref[:, t, :] for t in range(S)], axis=0)  # (S*B, I)
    xb = x_tm.astype(bf16)

    # ---- Phase 1: hoisted input projection, one matmul per gate (lane-0 aligned)
    gi_r = jnp.dot(xb, wih_r_ref[...], preferred_element_type=f32) + bi_r_ref[...]
    gi_z = jnp.dot(xb, wih_z_ref[...], preferred_element_type=f32) + bi_z_ref[...]
    gi_n = jnp.dot(xb, wih_n_ref[...], preferred_element_type=f32) + bi_n_ref[...]

    whh_r = whh_r_ref[...]          # (H, H) bf16, per-gate -> no lane slicing in loop
    whh_z = whh_z_ref[...]
    whh_n = whh_n_ref[...]
    bhn = bhn_ref[...]              # (1, H) f32, recurrent bias of n gate only

    # ---- Phase 2: serial GRU recurrence (torch gate order r, z, n), unrolled,
    #      hidden state kept in vregs (no per-step VMEM stores).
    h = jnp.zeros((B, H), f32)
    hs = []
    for t in range(S):
        lo = t * B
        hb = h.astype(bf16)
        a_r = jnp.dot(hb, whh_r, preferred_element_type=f32)
        a_z = jnp.dot(hb, whh_z, preferred_element_type=f32)
        a_n = jnp.dot(hb, whh_n, preferred_element_type=f32)
        r = jax.nn.sigmoid(gi_r[lo:lo + B, :] + a_r)
        z = jax.nn.sigmoid(gi_z[lo:lo + B, :] + a_z)
        n = jnp.tanh(gi_n[lo:lo + B, :] + r * (a_n + bhn))
        h = n + z * (h - n)                      # == (1 - z) * n + z * h
        hs.append(h)

    # ---- Phase 2b: time-major -> batch-major exactly once, on the hidden state
    # (BN / row-wise MLP are permutation invariant; batch-major rows b*S + t
    #  make the final output stores plain reshapes).
    hf_tm = jnp.concatenate(hs, axis=0).reshape(S, B, H)                  # (S, B, H)
    hf = jnp.concatenate([hf_tm[:, b, :] for b in range(B)], axis=0)      # (B*S, H)

    # ---- Phase 3: encoder_head (Linear -> BN(train) -> ELU) x 2 -------------
    y1 = jnp.dot(hf.astype(bf16), w1_ref[...], preferred_element_type=f32) + b1_ref[...]
    y1 = _bn_elu(y1, g1_ref[...], be1_ref[...])
    y2 = jnp.dot(y1.astype(bf16), w2_ref[...], preferred_element_type=f32) + b2_ref[...]
    xo = _bn_elu(y2, g2_ref[...], be2_ref[...])

    # ---- Phase 4: predictor on cat([x, Z]); Z @ W3_z pre-folded into b3 -----
    y3 = jnp.dot(xo.astype(bf16), w3_ref[...], preferred_element_type=f32) + b3_ref[...]
    y3 = _bn_elu(y3, g3_ref[...], be3_ref[...])
    y4 = jnp.dot(y3.astype(bf16), w4_ref[...], preferred_element_type=f32) + b4_ref[...]
    xp = _bn_elu(y4, g4_ref[...], be4_ref[...])

    # ---- Outputs written directly in (B, S, out) form: zero wrapper reshapes
    out_x_ref[...] = xo.reshape(B, S, out_size)
    out_xp_ref[...] = xp.reshape(B, S, out_size)


# ---------------------------------------------------------------------------
# Forward: the jitted wrapper is exactly one pallas_call, nothing else.
# ---------------------------------------------------------------------------
@functools.partial(jax.jit, static_argnames=("out_size",))
def rnn_energy_net_forward(x, pp, out_size):
    B, S, I = x.shape
    H = pp["whh_r"].shape[0]
    mid = pp["w1"].shape[1]
    N = B * S
    O = out_size

    kernel = functools.partial(fused_kernel, B=B, S=S, H=H, out_size=O)

    flops = 2 * N * (I * 3 * H + H * 3 * H + H * mid + mid * O + 2 * O * O)
    transcendentals = N * (3 * H + mid + 3 * O)
    param_bytes = sum(int(np.prod(v.shape)) * v.dtype.itemsize for v in pp.values())
    bytes_accessed = 4 * (x.size + 2 * N * O) + param_bytes

    out_x, out_xp = pl.pallas_call(
        kernel,
        out_shape=(jax.ShapeDtypeStruct((B, S, O), jnp.float32),
                   jax.ShapeDtypeStruct((B, S, O), jnp.float32)),
        cost_estimate=pl.CostEstimate(flops=flops,
                                      transcendentals=transcendentals,
                                      bytes_accessed=bytes_accessed),
    )(x,
      pp["wih_r"], pp["wih_z"], pp["wih_n"],
      pp["bi_r"], pp["bi_z"], pp["bi_n"], pp["bhn"],
      pp["whh_r"], pp["whh_z"], pp["whh_n"],
      pp["w1"], pp["b1"], pp["g1"], pp["be1"],
      pp["w2"], pp["b2"], pp["g2"], pp["be2"],
      pp["w3"], pp["b3"], pp["g3"], pp["be3"],
      pp["w4"], pp["b4"], pp["g4"], pp["be4"])
    return out_x, out_xp


# ---------------------------------------------------------------------------
# One-time parameter preparation (per-gate split, bias folds, bf16 weight cast)
# ---------------------------------------------------------------------------
def prepare_params(p):
    H = p["whh"].shape[0]
    bf = jnp.bfloat16
    wih, whh, bih, bhh = p["wih"], p["whh"], p["bih"], p["bhh"]
    return {
        # GRU, split per gate (r, z, n); weights bf16 as MXU operands
        "wih_r": wih[:, :H].astype(bf),
        "wih_z": wih[:, H:2 * H].astype(bf),
        "wih_n": wih[:, 2 * H:].astype(bf),
        "whh_r": whh[:, :H].astype(bf),
        "whh_z": whh[:, H:2 * H].astype(bf),
        "whh_n": whh[:, 2 * H:].astype(bf),
        # r/z recurrent biases pre-summed into the input-projection biases (f32)
        "bi_r": bih[:, :H] + bhh[:, :H],
        "bi_z": bih[:, H:2 * H] + bhh[:, H:2 * H],
        "bi_n": bih[:, 2 * H:],
        "bhn": bhh[:, 2 * H:],
        # encoder_head
        "w1": p["w1"].astype(bf), "b1": p["b1"], "g1": p["g1"], "be1": p["be1"],
        "w2": p["w2"].astype(bf), "b2": p["b2"], "g2": p["g2"], "be2": p["be2"],
        # predictor; Z @ W3_z folded into b3 once (f32)
        "w3": p["w3"].astype(bf),
        "b3": p["b3"] + p["Z"] @ p["w3z"],
        "g3": p["g3"], "be3": p["be3"],
        "w4": p["w4"].astype(bf), "b4": p["b4"], "g4": p["g4"], "be4": p["be4"],
    }


# ---------------------------------------------------------------------------
# Pure-JAX reference (same math / parameter layout; matmul dtype selectable so
# the kernel's bf16-MXU-operand policy can be checked tightly, and the full-f32
# module output can bound the total bf16 drift)
# ---------------------------------------------------------------------------
def reference_forward(x, p, out_size, *, matmul_dtype=jnp.float32):
    B, S, _ = x.shape
    H = p["whh"].shape[0]

    def mm(a, b):
        return jnp.dot(a.astype(matmul_dtype), b.astype(matmul_dtype),
                       preferred_element_type=jnp.float32)

    h = jnp.zeros((B, H), jnp.float32)
    outs = []
    for t in range(S):
        gi = mm(x[:, t, :], p["wih"]) + p["bih"]
        gh = mm(h, p["whh"]) + p["bhh"]
        r = jax.nn.sigmoid(gi[:, :H] + gh[:, :H])
        z = jax.nn.sigmoid(gi[:, H:2 * H] + gh[:, H:2 * H])
        n = jnp.tanh(gi[:, 2 * H:] + r * gh[:, 2 * H:])
        h = (1.0 - z) * n + z * h
        outs.append(h)
    hf = jnp.stack(outs, axis=1).reshape(B * S, -1)          # batch-major rows b*S+t

    y1 = _bn_elu(mm(hf, p["w1"]) + p["b1"], p["g1"], p["be1"])
    xo = _bn_elu(mm(y1, p["w2"]) + p["b2"], p["g2"], p["be2"])
    zc = p["Z"] @ p["w3z"]                                   # f32, matches the fold
    y3 = _bn_elu(mm(xo, p["w3"]) + zc + p["b3"], p["g3"], p["be3"])
    xp = _bn_elu(mm(y3, p["w4"]) + p["b4"], p["g4"], p["be4"])
    return xo.reshape(B, S, -1), xp.reshape(B, S, -1)


# ---------------------------------------------------------------------------
# Deterministic synthetic parameters (torch-shaped semantics)
# ---------------------------------------------------------------------------
def make_params(key, input_size, latent_size, output_size, z_size):
    mid = (latent_size + output_size) // 2
    ks = jax.random.split(key, 14)

    def u(k, shape, fan_in):
        bound = 1.0 / np.sqrt(fan_in)
        return jax.random.uniform(k, shape, jnp.float32, -bound, bound)

    return {
        # GRU weights, gate order (r, z, n), concatenated along the gate dim
        "wih": u(ks[0], (input_size, 3 * latent_size), latent_size),
        "whh": u(ks[1], (latent_size, 3 * latent_size), latent_size),
        "bih": u(ks[2], (1, 3 * latent_size), latent_size),
        "bhh": u(ks[3], (1, 3 * latent_size), latent_size),
        # encoder_head
        "w1": u(ks[4], (latent_size, mid), latent_size),
        "b1": u(ks[5], (1, mid), latent_size),
        "g1": jnp.ones((1, mid), jnp.float32),
        "be1": jnp.zeros((1, mid), jnp.float32),
        "w2": u(ks[6], (mid, output_size), mid),
        "b2": u(ks[7], (1, output_size), mid),
        "g2": jnp.ones((1, output_size), jnp.float32),
        "be2": jnp.zeros((1, output_size), jnp.float32),
        # learned Z (torch.randn(z_size))
        "Z": jax.random.normal(ks[8], (1, z_size), jnp.float32),
        # predictor: Linear(output+z, output) split into x-part and z-part
        "w3": u(ks[9], (output_size, output_size), output_size + z_size),
        "w3z": u(ks[10], (z_size, output_size), output_size + z_size),
        "b3": u(ks[11], (1, output_size), output_size + z_size),
        "g3": jnp.ones((1, output_size), jnp.float32),
        "be3": jnp.zeros((1, output_size), jnp.float32),
        "w4": u(ks[12], (output_size, output_size), output_size),
        "b4": u(ks[13], (1, output_size), output_size),
        "g4": jnp.ones((1, output_size), jnp.float32),
        "be4": jnp.zeros((1, output_size), jnp.float32),
    }


if __name__ == "__main__":
    B, S = 8, 8
    input_size, latent_size, output_size, z_size = 16, 32, 16, 8

    key = jax.random.PRNGKey(0)
    kx, kp = jax.random.split(key)
    x = jax.random.normal(kx, (B, S, input_size), jnp.float32)
    params = make_params(kp, input_size, latent_size, output_size, z_size)

    # One-time constant folding / layout prep (NOT inside the per-call forward).
    prepared = prepare_params(params)

    x_out, xp_out = rnn_energy_net_forward(x, prepared, output_size)
    jax.block_until_ready((x_out, xp_out))

    # Primary check: reference with the same bf16-MXU-operand / f32-accumulate
    # precision policy as the kernel (implementation equivalence).
    x_ref, xp_ref = reference_forward(x, params, output_size, matmul_dtype=jnp.bfloat16)
    np.testing.assert_allclose(np.asarray(x_out), np.asarray(x_ref), rtol=1e-2, atol=1e-2)
    np.testing.assert_allclose(np.asarray(xp_out), np.asarray(xp_ref), rtol=1e-2, atol=1e-2)

    # Sanity check: total drift vs. the full-f32 module forward stays small.
    x_f32, xp_f32 = reference_forward(x, params, output_size, matmul_dtype=jnp.float32)
    np.testing.assert_allclose(np.asarray(x_out), np.asarray(x_f32), rtol=1e-1, atol=1e-1)
    np.testing.assert_allclose(np.asarray(xp_out), np.asarray(xp_f32), rtol=1e-1, atol=1e-1)

    assert x_out.shape == (B, S, output_size) and xp_out.shape == (B, S, output_size)
    print("KERNEL_OK")
</pallas_src>

<mosaic_0001>
module attributes {stable_mosaic.version = 11 : i64} {
  func.func @fused_kernel(%arg0: memref<8x8x16xf32, #tpu.memory_space<vmem>>, %arg1: memref<16x32xbf16, #tpu.memory_space<vmem>>, %arg2: memref<16x32xbf16, #tpu.memory_space<vmem>>, %arg3: memref<16x32xbf16, #tpu.memory_space<vmem>>, %arg4: memref<1x32xf32, #tpu.memory_space<vmem>>, %arg5: memref<1x32xf32, #tpu.memory_space<vmem>>, %arg6: memref<1x32xf32, #tpu.memory_space<vmem>>, %arg7: memref<1x32xf32, #tpu.memory_space<vmem>>, %arg8: memref<32x32xbf16, #tpu.memory_space<vmem>>, %arg9: memref<32x32xbf16, #tpu.memory_space<vmem>>, %arg10: memref<32x32xbf16, #tpu.memory_space<vmem>>, %arg11: memref<32x24xbf16, #tpu.memory_space<vmem>>, %arg12: memref<1x24xf32, #tpu.memory_space<vmem>>, %arg13: memref<1x24xf32, #tpu.memory_space<vmem>>, %arg14: memref<1x24xf32, #tpu.memory_space<vmem>>, %arg15: memref<24x16xbf16, #tpu.memory_space<vmem>>, %arg16: memref<1x16xf32, #tpu.memory_space<vmem>>, %arg17: memref<1x16xf32, #tpu.memory_space<vmem>>, %arg18: memref<1x16xf32, #tpu.memory_space<vmem>>, %arg19: memref<16x16xbf16, #tpu.memory_space<vmem>>, %arg20: memref<1x16xf32, #tpu.memory_space<vmem>>, %arg21: memref<1x16xf32, #tpu.memory_space<vmem>>, %arg22: memref<1x16xf32, #tpu.memory_space<vmem>>, %arg23: memref<16x16xbf16, #tpu.memory_space<vmem>>, %arg24: memref<1x16xf32, #tpu.memory_space<vmem>>, %arg25: memref<1x16xf32, #tpu.memory_space<vmem>>, %arg26: memref<1x16xf32, #tpu.memory_space<vmem>>, %arg27: memref<8x8x16xf32, #tpu.memory_space<vmem>>, %arg28: memref<8x8x16xf32, #tpu.memory_space<vmem>>) attributes {dimension_semantics = [], scalar_prefetch = 0 : i64, scratch_operands = 0 : i64, tpu.core_type = #tpu.core_type<tc>} {
    %c0 = arith.constant 0 : index
    %c0_0 = arith.constant 0 : index
    %c0_1 = arith.constant 0 : index
    %0 = vector.load %arg0[%c0, %c0_0, %c0_1] : memref<8x8x16xf32, #tpu.memory_space<vmem>>, vector<8x1x16xf32>
    %1 = vector.shape_cast %0 : vector<8x1x16xf32> to vector<8x16xf32>
    %c0_2 = arith.constant 0 : index
    %c1 = arith.constant 1 : index
    %c0_3 = arith.constant 0 : index
    %2 = vector.load %arg0[%c0_2, %c1, %c0_3] : memref<8x8x16xf32, #tpu.memory_space<vmem>>, vector<8x1x16xf32>
    %3 = vector.shape_cast %2 : vector<8x1x16xf32> to vector<8x16xf32>
    %c0_4 = arith.constant 0 : index
    %c2 = arith.constant 2 : index
    %c0_5 = arith.constant 0 : index
    %4 = vector.load %arg0[%c0_4, %c2, %c0_5] : memref<8x8x16xf32, #tpu.memory_space<vmem>>, vector<8x1x16xf32>
    %5 = vector.shape_cast %4 : vector<8x1x16xf32> to vector<8x16xf32>
    %c0_6 = arith.constant 0 : index
    %c3 = arith.constant 3 : index
    %c0_7 = arith.constant 0 : index
    %6 = vector.load %arg0[%c0_6, %c3, %c0_7] : memref<8x8x16xf32, #tpu.memory_space<vmem>>, vector<8x1x16xf32>
    %7 = vector.shape_cast %6 : vector<8x1x16xf32> to vector<8x16xf32>
    %c0_8 = arith.constant 0 : index
    %c4 = arith.constant 4 : index
    %c0_9 = arith.constant 0 : index
    %8 = vector.load %arg0[%c0_8, %c4, %c0_9] : memref<8x8x16xf32, #tpu.memory_space<vmem>>, vector<8x1x16xf32>
    %9 = vector.shape_cast %8 : vector<8x1x16xf32> to vector<8x16xf32>
    %c0_10 = arith.constant 0 : index
    %c5 = arith.constant 5 : index
    %c0_11 = arith.constant 0 : index
    %10 = vector.load %arg0[%c0_10, %c5, %c0_11] : memref<8x8x16xf32, #tpu.memory_space<vmem>>, vector<8x1x16xf32>
    %11 = vector.shape_cast %10 : vector<8x1x16xf32> to vector<8x16xf32>
    %c0_12 = arith.constant 0 : index
    %c6 = arith.constant 6 : index
    %c0_13 = arith.constant 0 : index
    %12 = vector.load %arg0[%c0_12, %c6, %c0_13] : memref<8x8x16xf32, #tpu.memory_space<vmem>>, vector<8x1x16xf32>
    %13 = vector.shape_cast %12 : vector<8x1x16xf32> to vector<8x16xf32>
    %c0_14 = arith.constant 0 : index
    %c7 = arith.constant 7 : index
    %c0_15 = arith.constant 0 : index
    %14 = vector.load %arg0[%c0_14, %c7, %c0_15] : memref<8x8x16xf32, #tpu.memory_space<vmem>>, vector<8x1x16xf32>
    %15 = vector.shape_cast %14 : vector<8x1x16xf32> to vector<8x16xf32>
    %16 = tpu.concatenate %1, %3, %5, %7, %9, %11, %13, %15 in 0 : vector<8x16xf32>, vector<8x16xf32>, vector<8x16xf32>, vector<8x16xf32>, vector<8x16xf32>, vector<8x16xf32>, vector<8x16xf32>, vector<8x16xf32> -> vector<64x16xf32>
    %17 = arith.truncf %16 : vector<64x16xf32> to vector<64x16xbf16>
    %c0_16 = arith.constant 0 : index
    %c0_17 = arith.constant 0 : index
    %18 = vector.load %arg1[%c0_16, %c0_17] : memref<16x32xbf16, #tpu.memory_space<vmem>>, vector<16x32xbf16>
    %cst = arith.constant dense<0.000000e+00> : vector<64x32xf32>
    %19 = tpu.matmul %17, %18, %cst {dimension_numbers = #tpu.dot_dimension_numbers<[1], [0], [0], [1], [0, 0, 1, 1], [], []>} : vector<64x16xbf16>, vector<16x32xbf16>, vector<64x32xf32> -> vector<64x32xf32>
    %c0_18 = arith.constant 0 : index
    %c0_19 = arith.constant 0 : index
    %20 = vector.load %arg4[%c0_18, %c0_19] : memref<1x32xf32, #tpu.memory_space<vmem>>, vector<1x32xf32>
    %21 = vector.broadcast %20 : vector<1x32xf32> to vector<64x32xf32>
    %22 = arith.addf %19, %21 : vector<64x32xf32>
    %c0_20 = arith.constant 0 : index
    %c0_21 = arith.constant 0 : index
    %23 = vector.load %arg2[%c0_20, %c0_21] : memref<16x32xbf16, #tpu.memory_space<vmem>>, vector<16x32xbf16>
    %cst_22 = arith.constant dense<0.000000e+00> : vector<64x32xf32>
    %24 = tpu.matmul %17, %23, %cst_22 {dimension_numbers = #tpu.dot_dimension_numbers<[1], [0], [0], [1], [0, 0, 1, 1], [], []>} : vector<64x16xbf16>, vector<16x32xbf16>, vector<64x32xf32> -> vector<64x32xf32>
    %c0_23 = arith.constant 0 : index
    %c0_24 = arith.constant 0 : index
    %25 = vector.load %arg5[%c0_23, %c0_24] : memref<1x32xf32, #tpu.memory_space<vmem>>, vector<1x32xf32>
    %26 = vector.broadcast %25 : vector<1x32xf32> to vector<64x32xf32>
    %27 = arith.addf %24, %26 : vector<64x32xf32>
    %c0_25 = arith.constant 0 : index
    %c0_26 = arith.constant 0 : index
    %28 = vector.load %arg3[%c0_25, %c0_26] : memref<16x32xbf16, #tpu.memory_space<vmem>>, vector<16x32xbf16>
    %cst_27 = arith.constant dense<0.000000e+00> : vector<64x32xf32>
    %29 = tpu.matmul %17, %28, %cst_27 {dimension_numbers = #tpu.dot_dimension_numbers<[1], [0], [0], [1], [0, 0, 1, 1], [], []>} : vector<64x16xbf16>, vector<16x32xbf16>, vector<64x32xf32> -> vector<64x32xf32>
    %c0_28 = arith.constant 0 : index
    %c0_29 = arith.constant 0 : index
    %30 = vector.load %arg6[%c0_28, %c0_29] : memref<1x32xf32, #tpu.memory_space<vmem>>, vector<1x32xf32>
    %31 = vector.broadcast %30 : vector<1x32xf32> to vector<64x32xf32>
    %32 = arith.addf %29, %31 : vector<64x32xf32>
    %c0_30 = arith.constant 0 : index
    %c0_31 = arith.constant 0 : index
    %33 = vector.load %arg8[%c0_30, %c0_31] : memref<32x32xbf16, #tpu.memory_space<vmem>>, vector<32x32xbf16>
    %c0_32 = arith.constant 0 : index
    %c0_33 = arith.constant 0 : index
    %34 = vector.load %arg9[%c0_32, %c0_33] : memref<32x32xbf16, #tpu.memory_space<vmem>>, vector<32x32xbf16>
    %c0_34 = arith.constant 0 : index
    %c0_35 = arith.constant 0 : index
    %35 = vector.load %arg10[%c0_34, %c0_35] : memref<32x32xbf16, #tpu.memory_space<vmem>>, vector<32x32xbf16>
    %c0_36 = arith.constant 0 : index
    %c0_37 = arith.constant 0 : index
    %36 = vector.load %arg7[%c0_36, %c0_37] : memref<1x32xf32, #tpu.memory_space<vmem>>, vector<1x32xf32>
    %cst_38 = arith.constant 0.000000e+00 : f32
    %37 = vector.broadcast %cst_38 : f32 to vector<8x32xf32>
    %38 = arith.truncf %37 : vector<8x32xf32> to vector<8x32xbf16>
    %cst_39 = arith.constant dense<0.000000e+00> : vector<8x32xf32>
    %39 = tpu.matmul %38, %33, %cst_39 {dimension_numbers = #tpu.dot_dimension_numbers<[1], [0], [0], [1], [0, 0, 1, 1], [], []>} : vector<8x32xbf16>, vector<32x32xbf16>, vector<8x32xf32> -> vector<8x32xf32>
    %cst_40 = arith.constant dense<0.000000e+00> : vector<8x32xf32>
    %40 = tpu.matmul %38, %34, %cst_40 {dimension_numbers = #tpu.dot_dimension_numbers<[1], [0], [0], [1], [0, 0, 1, 1], [], []>} : vector<8x32xbf16>, vector<32x32xbf16>, vector<8x32xf32> -> vector<8x32xf32>
    %cst_41 = arith.constant dense<0.000000e+00> : vector<8x32xf32>
    %41 = tpu.matmul %38, %35, %cst_41 {dimension_numbers = #tpu.dot_dimension_numbers<[1], [0], [0], [1], [0, 0, 1, 1], [], []>} : vector<8x32xbf16>, vector<32x32xbf16>, vector<8x32xf32> -> vector<8x32xf32>
    %42 = vector.extract_strided_slice %22 {offsets = [0, 0], sizes = [8, 32], strides = [1, 1]} : vector<64x32xf32> to vector<8x32xf32>
    %43 = arith.addf %42, %39 : vector<8x32xf32>
    %44 = arith.negf %43 : vector<8x32xf32>
    %45 = math.exp %44 : vector<8x32xf32>
    %cst_42 = arith.constant 1.000000e+00 : f32
    %46 = vector.broadcast %cst_42 : f32 to vector<8x32xf32>
    %47 = arith.addf %46, %45 : vector<8x32xf32>
    %48 = arith.divf %46, %47 : vector<8x32xf32>
    %49 = vector.extract_strided_slice %27 {offsets = [0, 0], sizes = [8, 32], strides = [1, 1]} : vector<64x32xf32> to vector<8x32xf32>
    %50 = arith.addf %49, %40 : vector<8x32xf32>
    %51 = arith.negf %50 : vector<8x32xf32>
    %52 = math.exp %51 : vector<8x32xf32>
    %cst_43 = arith.constant 1.000000e+00 : f32
    %53 = vector.broadcast %cst_43 : f32 to vector<8x32xf32>
    %54 = arith.addf %53, %52 : vector<8x32xf32>
    %55 = arith.divf %53, %54 : vector<8x32xf32>
    %56 = vector.extract_strided_slice %32 {offsets = [0, 0], sizes = [8, 32], strides = [1, 1]} : vector<64x32xf32> to vector<8x32xf32>
    %57 = vector.broadcast %36 : vector<1x32xf32> to vector<8x32xf32>
    %58 = arith.addf %41, %57 : vector<8x32xf32>
    %59 = arith.mulf %48, %58 : vector<8x32xf32>
    %60 = arith.addf %56, %59 : vector<8x32xf32>
    %61 = math.tanh %60 : vector<8x32xf32>
    %62 = arith.subf %37, %61 : vector<8x32xf32>
    %63 = arith.mulf %55, %62 : vector<8x32xf32>
    %64 = arith.addf %61, %63 : vector<8x32xf32>
    %65 = arith.truncf %64 : vector<8x32xf32> to vector<8x32xbf16>
    %cst_44 = arith.constant dense<0.000000e+00> : vector<8x32xf32>
    %66 = tpu.matmul %65, %33, %cst_44 {dimension_numbers = #tpu.dot_dimension_numbers<[1], [0], [0], [1], [0, 0, 1, 1], [], []>} : vector<8x32xbf16>, vector<32x32xbf16>, vector<8x32xf32> -> vector<8x32xf32>
    %cst_45 = arith.constant dense<0.000000e+00> : vector<8x32xf32>
    %67 = tpu.matmul %65, %34, %cst_45 {dimension_numbers = #tpu.dot_dimension_numbers<[1], [0], [0], [1], [0, 0, 1, 1], [], []>} : vector<8x32xbf16>, vector<32x32xbf16>, vector<8x32xf32> -> vector<8x32xf32>
    %cst_46 = arith.constant dense<0.000000e+00> : vector<8x32xf32>
    %68 = tpu.matmul %65, %35, %cst_46 {dimension_numbers = #tpu.dot_dimension_numbers<[1], [0], [0], [1], [0, 0, 1, 1], [], []>} : vector<8x32xbf16>, vector<32x32xbf16>, vector<8x32xf32> -> vector<8x32xf32>
    %69 = vector.extract_strided_slice %22 {offsets = [8, 0], sizes = [8, 32], strides = [1, 1]} : vector<64x32xf32> to vector<8x32xf32>
    %70 = arith.addf %69, %66 : vector<8x32xf32>
    %71 = arith.negf %70 : vector<8x32xf32>
    %72 = math.exp %71 : vector<8x32xf32>
    %cst_47 = arith.constant 1.000000e+00 : f32
    %73 = vector.broadcast %cst_47 : f32 to vector<8x32xf32>
    %74 = arith.addf %73, %72 : vector<8x32xf32>
    %75 = arith.divf %73, %74 : vector<8x32xf32>
    %76 = vector.extract_strided_slice %27 {offsets = [8, 0], sizes = [8, 32], strides = [1, 1]} : vector<64x32xf32> to vector<8x32xf32>
    %77 = arith.addf %76, %67 : vector<8x32xf32>
    %78 = arith.negf %77 : vector<8x32xf32>
    %79 = math.exp %78 : vector<8x32xf32>
    %cst_48 = arith.constant 1.000000e+00 : f32
    %80 = vector.broadcast %cst_48 : f32 to vector<8x32xf32>
    %81 = arith.addf %80, %79 : vector<8x32xf32>
    %82 = arith.divf %80, %81 : vector<8x32xf32>
    %83 = vector.extract_strided_slice %32 {offsets = [8, 0], sizes = [8, 32], strides = [1, 1]} : vector<64x32xf32> to vector<8x32xf32>
    %84 = vector.broadcast %36 : vector<1x32xf32> to vector<8x32xf32>
    %85 = arith.addf %68, %84 : vector<8x32xf32>
    %86 = arith.mulf %75, %85 : vector<8x32xf32>
    %87 = arith.addf %83, %86 : vector<8x32xf32>
    %88 = math.tanh %87 : vector<8x32xf32>
    %89 = arith.subf %64, %88 : vector<8x32xf32>
    %90 = arith.mulf %82, %89 : vector<8x32xf32>
    %91 = arith.addf %88, %90 : vector<8x32xf32>
    %92 = arith.truncf %91 : vector<8x32xf32> to vector<8x32xbf16>
    %cst_49 = arith.constant dense<0.000000e+00> : vector<8x32xf32>
    %93 = tpu.matmul %92, %33, %cst_49 {dimension_numbers = #tpu.dot_dimension_numbers<[1], [0], [0], [1], [0, 0, 1, 1], [], []>} : vector<8x32xbf16>, vector<32x32xbf16>, vector<8x32xf32> -> vector<8x32xf32>
    %cst_50 = arith.constant dense<0.000000e+00> : vector<8x32xf32>
    %94 = tpu.matmul %92, %34, %cst_50 {dimension_numbers = #tpu.dot_dimension_numbers<[1], [0], [0], [1], [0, 0, 1, 1], [], []>} : vector<8x32xbf16>, vector<32x32xbf16>, vector<8x32xf32> -> vector<8x32xf32>
    %cst_51 = arith.constant dense<0.000000e+00> : vector<8x32xf32>
    %95 = tpu.matmul %92, %35, %cst_51 {dimension_numbers = #tpu.dot_dimension_numbers<[1], [0], [0], [1], [0, 0, 1, 1], [], []>} : vector<8x32xbf16>, vector<32x32xbf16>, vector<8x32xf32> -> vector<8x32xf32>
    %96 = vector.extract_strided_slice %22 {offsets = [16, 0], sizes = [8, 32], strides = [1, 1]} : vector<64x32xf32> to vector<8x32xf32>
    %97 = arith.addf %96, %93 : vector<8x32xf32>
    %98 = arith.negf %97 : vector<8x32xf32>
    %99 = math.exp %98 : vector<8x32xf32>
    %cst_52 = arith.constant 1.000000e+00 : f32
    %100 = vector.broadcast %cst_52 : f32 to vector<8x32xf32>
    %101 = arith.addf %100, %99 : vector<8x32xf32>
    %102 = arith.divf %100, %101 : vector<8x32xf32>
    %103 = vector.extract_strided_slice %27 {offsets = [16, 0], sizes = [8, 32], strides = [1, 1]} : vector<64x32xf32> to vector<8x32xf32>
    %104 = arith.addf %103, %94 : vector<8x32xf32>
    %105 = arith.negf %104 : vector<8x32xf32>
    %106 = math.exp %105 : vector<8x32xf32>
    %cst_53 = arith.constant 1.000000e+00 : f32
    %107 = vector.broadcast %cst_53 : f32 to vector<8x32xf32>
    %108 = arith.addf %107, %106 : vector<8x32xf32>
    %109 = arith.divf %107, %108 : vector<8x32xf32>
    %110 = vector.extract_strided_slice %32 {offsets = [16, 0], sizes = [8, 32], strides = [1, 1]} : vector<64x32xf32> to vector<8x32xf32>
    %111 = vector.broadcast %36 : vector<1x32xf32> to vector<8x32xf32>
    %112 = arith.addf %95, %111 : vector<8x32xf32>
    %113 = arith.mulf %102, %112 : vector<8x32xf32>
    %114 = arith.addf %110, %113 : vector<8x32xf32>
    %115 = math.tanh %114 : vector<8x32xf32>
    %116 = arith.subf %91, %115 : vector<8x32xf32>
    %117 = arith.mulf %109, %116 : vector<8x32xf32>
    %118 = arith.addf %115, %117 : vector<8x32xf32>
    %119 = arith.truncf %118 : vector<8x32xf32> to vector<8x32xbf16>
    %cst_54 = arith.constant dense<0.000000e+00> : vector<8x32xf32>
    %120 = tpu.matmul %119, %33, %cst_54 {dimension_numbers = #tpu.dot_dimension_numbers<[1], [0], [0], [1], [0, 0, 1, 1], [], []>} : vector<8x32xbf16>, vector<32x32xbf16>, vector<8x32xf32> -> vector<8x32xf32>
    %cst_55 = arith.constant dense<0.000000e+00> : vector<8x32xf32>
    %121 = tpu.matmul %119, %34, %cst_55 {dimension_numbers = #tpu.dot_dimension_numbers<[1], [0], [0], [1], [0, 0, 1, 1], [], []>} : vector<8x32xbf16>, vector<32x32xbf16>, vector<8x32xf32> -> vector<8x32xf32>
    %cst_56 = arith.constant dense<0.000000e+00> : vector<8x32xf32>
    %122 = tpu.matmul %119, %35, %cst_56 {dimension_numbers = #tpu.dot_dimension_numbers<[1], [0], [0], [1], [0, 0, 1, 1], [], []>} : vector<8x32xbf16>, vector<32x32xbf16>, vector<8x32xf32> -> vector<8x32xf32>
    %123 = vector.extract_strided_slice %22 {offsets = [24, 0], sizes = [8, 32], strides = [1, 1]} : vector<64x32xf32> to vector<8x32xf32>
    %124 = arith.addf %123, %120 : vector<8x32xf32>
    %125 = arith.negf %124 : vector<8x32xf32>
    %126 = math.exp %125 : vector<8x32xf32>
    %cst_57 = arith.constant 1.000000e+00 : f32
    %127 = vector.broadcast %cst_57 : f32 to vector<8x32xf32>
    %128 = arith.addf %127, %126 : vector<8x32xf32>
    %129 = arith.divf %127, %128 : vector<8x32xf32>
    %130 = vector.extract_strided_slice %27 {offsets = [24, 0], sizes = [8, 32], strides = [1, 1]} : vector<64x32xf32> to vector<8x32xf32>
    %131 = arith.addf %130, %121 : vector<8x32xf32>
    %132 = arith.negf %131 : vector<8x32xf32>
    %133 = math.exp %132 : vector<8x32xf32>
    %cst_58 = arith.constant 1.000000e+00 : f32
    %134 = vector.broadcast %cst_58 : f32 to vector<8x32xf32>
    %135 = arith.addf %134, %133 : vector<8x32xf32>
    %136 = arith.divf %134, %135 : vector<8x32xf32>
    %137 = vector.extract_strided_slice %32 {offsets = [24, 0], sizes = [8, 32], strides = [1, 1]} : vector<64x32xf32> to vector<8x32xf32>
    %138 = vector.broadcast %36 : vector<1x32xf32> to vector<8x32xf32>
    %139 = arith.addf %122, %138 : vector<8x32xf32>
    %140 = arith.mulf %129, %139 : vector<8x32xf32>
    %141 = arith.addf %137, %140 : vector<8x32xf32>
    %142 = math.tanh %141 : vector<8x32xf32>
    %143 = arith.subf %118, %142 : vector<8x32xf32>
    %144 = arith.mulf %136, %143 : vector<8x32xf32>
    %145 = arith.addf %142, %144 : vector<8x32xf32>
    %146 = arith.truncf %145 : vector<8x32xf32> to vector<8x32xbf16>
    %cst_59 = arith.constant dense<0.000000e+00> : vector<8x32xf32>
    %147 = tpu.matmul %146, %33, %cst_59 {dimension_numbers = #tpu.dot_dimension_numbers<[1], [0], [0], [1], [0, 0, 1, 1], [], []>} : vector<8x32xbf16>, vector<32x32xbf16>, vector<8x32xf32> -> vector<8x32xf32>
    %cst_60 = arith.constant dense<0.000000e+00> : vector<8x32xf32>
    %148 = tpu.matmul %146, %34, %cst_60 {dimension_numbers = #tpu.dot_dimension_numbers<[1], [0], [0], [1], [0, 0, 1, 1], [], []>} : vector<8x32xbf16>, vector<32x32xbf16>, vector<8x32xf32> -> vector<8x32xf32>
    %cst_61 = arith.constant dense<0.000000e+00> : vector<8x32xf32>
    %149 = tpu.matmul %146, %35, %cst_61 {dimension_numbers = #tpu.dot_dimension_numbers<[1], [0], [0], [1], [0, 0, 1, 1], [], []>} : vector<8x32xbf16>, vector<32x32xbf16>, vector<8x32xf32> -> vector<8x32xf32>
    %150 = vector.extract_strided_slice %22 {offsets = [32, 0], sizes = [8, 32], strides = [1, 1]} : vector<64x32xf32> to vector<8x32xf32>
    %151 = arith.addf %150, %147 : vector<8x32xf32>
    %152 = arith.negf %151 : vector<8x32xf32>
    %153 = math.exp %152 : vector<8x32xf32>
    %cst_62 = arith.constant 1.000000e+00 : f32
    %154 = vector.broadcast %cst_62 : f32 to vector<8x32xf32>
    %155 = arith.addf %154, %153 : vector<8x32xf32>
    %156 = arith.divf %154, %155 : vector<8x32xf32>
    %157 = vector.extract_strided_slice %27 {offsets = [32, 0], sizes = [8, 32], strides = [1, 1]} : vector<64x32xf32> to vector<8x32xf32>
    %158 = arith.addf %157, %148 : vector<8x32xf32>
    %159 = arith.negf %158 : vector<8x32xf32>
    %160 = math.exp %159 : vector<8x32xf32>
    %cst_63 = arith.constant 1.000000e+00 : f32
    %161 = vector.broadcast %cst_63 : f32 to vector<8x32xf32>
    %162 = arith.addf %161, %160 : vector<8x32xf32>
    %163 = arith.divf %161, %162 : vector<8x32xf32>
    %164 = vector.extract_strided_slice %32 {offsets = [32, 0], sizes = [8, 32], strides = [1, 1]} : vector<64x32xf32> to vector<8x32xf32>
    %165 = vector.broadcast %36 : vector<1x32xf32> to vector<8x32xf32>
    %166 = arith.addf %149, %165 : vector<8x32xf32>
    %167 = arith.mulf %156, %166 : vector<8x32xf32>
    %168 = arith.addf %164, %167 : vector<8x32xf32>
    %169 = math.tanh %168 : vector<8x32xf32>
    %170 = arith.subf %145, %169 : vector<8x32xf32>
    %171 = arith.mulf %163, %170 : vector<8x32xf32>
    %172 = arith.addf %169, %171 : vector<8x32xf32>
    %173 = arith.truncf %172 : vector<8x32xf32> to vector<8x32xbf16>
    %cst_64 = arith.constant dense<0.000000e+00> : vector<8x32xf32>
    %174 = tpu.matmul %173, %33, %cst_64 {dimension_numbers = #tpu.dot_dimension_numbers<[1], [0], [0], [1], [0, 0, 1, 1], [], []>} : vector<8x32xbf16>, vector<32x32xbf16>, vector<8x32xf32> -> vector<8x32xf32>
    %cst_65 = arith.constant dense<0.000000e+00> : vector<8x32xf32>
    %175 = tpu.matmul %173, %34, %cst_65 {dimension_numbers = #tpu.dot_dimension_numbers<[1], [0], [0], [1], [0, 0, 1, 1], [], []>} : vector<8x32xbf16>, vector<32x32xbf16>, vector<8x32xf32> -> vector<8x32xf32>
    %cst_66 = arith.constant dense<0.000000e+00> : vector<8x32xf32>
    %176 = tpu.matmul %173, %35, %cst_66 {dimension_numbers = #tpu.dot_dimension_numbers<[1], [0], [0], [1], [0, 0, 1, 1], [], []>} : vector<8x32xbf16>, vector<32x32xbf16>, vector<8x32xf32> -> vector<8x32xf32>
    %177 = vector.extract_strided_slice %22 {offsets = [40, 0], sizes = [8, 32], strides = [1, 1]} : vector<64x32xf32> to vector<8x32xf32>
    %178 = arith.addf %177, %174 : vector<8x32xf32>
    %179 = arith.negf %178 : vector<8x32xf32>
    %180 = math.exp %179 : vector<8x32xf32>
    %cst_67 = arith.constant 1.000000e+00 : f32
    %181 = vector.broadcast %cst_67 : f32 to vector<8x32xf32>
    %182 = arith.addf %181, %180 : vector<8x32xf32>
    %183 = arith.divf %181, %182 : vector<8x32xf32>
    %184 = vector.extract_strided_slice %27 {offsets = [40, 0], sizes = [8, 32], strides = [1, 1]} : vector<64x32xf32> to vector<8x32xf32>
    %185 = arith.addf %184, %175 : vector<8x32xf32>
    %186 = arith.negf %185 : vector<8x32xf32>
    %187 = math.exp %186 : vector<8x32xf32>
    %cst_68 = arith.constant 1.000000e+00 : f32
    %188 = vector.broadcast %cst_68 : f32 to vector<8x32xf32>
    %189 = arith.addf %188, %187 : vector<8x32xf32>
    %190 = arith.divf %188, %189 : vector<8x32xf32>
    %191 = vector.extract_strided_slice %32 {offsets = [40, 0], sizes = [8, 32], strides = [1, 1]} : vector<64x32xf32> to vector<8x32xf32>
    %192 = vector.broadcast %36 : vector<1x32xf32> to vector<8x32xf32>
    %193 = arith.addf %176, %192 : vector<8x32xf32>
    %194 = arith.mulf %183, %193 : vector<8x32xf32>
    %195 = arith.addf %191, %194 : vector<8x32xf32>
    %196 = math.tanh %195 : vector<8x32xf32>
    %197 = arith.subf %172, %196 : vector<8x32xf32>
    %198 = arith.mulf %190, %197 : vector<8x32xf32>
    %199 = arith.addf %196, %198 : vector<8x32xf32>
    %200 = arith.truncf %199 : vector<8x32xf32> to vector<8x32xbf16>
    %cst_69 = arith.constant dense<0.000000e+00> : vector<8x32xf32>
    %201 = tpu.matmul %200, %33, %cst_69 {dimension_numbers = #tpu.dot_dimension_numbers<[1], [0], [0], [1], [0, 0, 1, 1], [], []>} : vector<8x32xbf16>, vector<32x32xbf16>, vector<8x32xf32> -> vector<8x32xf32>
    %cst_70 = arith.constant dense<0.000000e+00> : vector<8x32xf32>
    %202 = tpu.matmul %200, %34, %cst_70 {dimension_numbers = #tpu.dot_dimension_numbers<[1], [0], [0], [1], [0, 0, 1, 1], [], []>} : vector<8x32xbf16>, vector<32x32xbf16>, vector<8x32xf32> -> vector<8x32xf32>
    %cst_71 = arith.constant dense<0.000000e+00> : vector<8x32xf32>
    %203 = tpu.matmul %200, %35, %cst_71 {dimension_numbers = #tpu.dot_dimension_numbers<[1], [0], [0], [1], [0, 0, 1, 1], [], []>} : vector<8x32xbf16>, vector<32x32xbf16>, vector<8x32xf32> -> vector<8x32xf32>
    %204 = vector.extract_strided_slice %22 {offsets = [48, 0], sizes = [8, 32], strides = [1, 1]} : vector<64x32xf32> to vector<8x32xf32>
    %205 = arith.addf %204, %201 : vector<8x32xf32>
    %206 = arith.negf %205 : vector<8x32xf32>
    %207 = math.exp %206 : vector<8x32xf32>
    %cst_72 = arith.constant 1.000000e+00 : f32
    %208 = vector.broadcast %cst_72 : f32 to vector<8x32xf32>
    %209 = arith.addf %208, %207 : vector<8x32xf32>
    %210 = arith.divf %208, %209 : vector<8x32xf32>
    %211 = vector.extract_strided_slice %27 {offsets = [48, 0], sizes = [8, 32], strides = [1, 1]} : vector<64x32xf32> to vector<8x32xf32>
    %212 = arith.addf %211, %202 : vector<8x32xf32>
    %213 = arith.negf %212 : vector<8x32xf32>
    %214 = math.exp %213 : vector<8x32xf32>
    %cst_73 = arith.constant 1.000000e+00 : f32
    %215 = vector.broadcast %cst_73 : f32 to vector<8x32xf32>
    %216 = arith.addf %215, %214 : vector<8x32xf32>
    %217 = arith.divf %215, %216 : vector<8x32xf32>
    %218 = vector.extract_strided_slice %32 {offsets = [48, 0], sizes = [8, 32], strides = [1, 1]} : vector<64x32xf32> to vector<8x32xf32>
    %219 = vector.broadcast %36 : vector<1x32xf32> to vector<8x32xf32>
    %220 = arith.addf %203, %219 : vector<8x32xf32>
    %221 = arith.mulf %210, %220 : vector<8x32xf32>
    %222 = arith.addf %218, %221 : vector<8x32xf32>
    %223 = math.tanh %222 : vector<8x32xf32>
    %224 = arith.subf %199, %223 : vector<8x32xf32>
    %225 = arith.mulf %217, %224 : vector<8x32xf32>
    %226 = arith.addf %223, %225 : vector<8x32xf32>
    %227 = arith.truncf %226 : vector<8x32xf32> to vector<8x32xbf16>
    %cst_74 = arith.constant dense<0.000000e+00> : vector<8x32xf32>
    %228 = tpu.matmul %227, %33, %cst_74 {dimension_numbers = #tpu.dot_dimension_numbers<[1], [0], [0], [1], [0, 0, 1, 1], [], []>} : vector<8x32xbf16>, vector<32x32xbf16>, vector<8x32xf32> -> vector<8x32xf32>
    %cst_75 = arith.constant dense<0.000000e+00> : vector<8x32xf32>
    %229 = tpu.matmul %227, %34, %cst_75 {dimension_numbers = #tpu.dot_dimension_numbers<[1], [0], [0], [1], [0, 0, 1, 1], [], []>} : vector<8x32xbf16>, vector<32x32xbf16>, vector<8x32xf32> -> vector<8x32xf32>
    %cst_76 = arith.constant dense<0.000000e+00> : vector<8x32xf32>
    %230 = tpu.matmul %227, %35, %cst_76 {dimension_numbers = #tpu.dot_dimension_numbers<[1], [0], [0], [1], [0, 0, 1, 1], [], []>} : vector<8x32xbf16>, vector<32x32xbf16>, vector<8x32xf32> -> vector<8x32xf32>
    %231 = vector.extract_strided_slice %22 {offsets = [56, 0], sizes = [8, 32], strides = [1, 1]} : vector<64x32xf32> to vector<8x32xf32>
    %232 = arith.addf %231, %228 : vector<8x32xf32>
    %233 = arith.negf %232 : vector<8x32xf32>
    %234 = math.exp %233 : vector<8x32xf32>
    %cst_77 = arith.constant 1.000000e+00 : f32
    %235 = vector.broadcast %cst_77 : f32 to vector<8x32xf32>
    %236 = arith.addf %235, %234 : vector<8x32xf32>
    %237 = arith.divf %235, %236 : vector<8x32xf32>
    %238 = vector.extract_strided_slice %27 {offsets = [56, 0], sizes = [8, 32], strides = [1, 1]} : vector<64x32xf32> to vector<8x32xf32>
    %239 = arith.addf %238, %229 : vector<8x32xf32>
    %240 = arith.negf %239 : vector<8x32xf32>
    %241 = math.exp %240 : vector<8x32xf32>
    %cst_78 = arith.constant 1.000000e+00 : f32
    %242 = vector.broadcast %cst_78 : f32 to vector<8x32xf32>
    %243 = arith.addf %242, %241 : vector<8x32xf32>
    %244 = arith.divf %242, %243 : vector<8x32xf32>
    %245 = vector.extract_strided_slice %32 {offsets = [56, 0], sizes = [8, 32], strides = [1, 1]} : vector<64x32xf32> to vector<8x32xf32>
    %246 = vector.broadcast %36 : vector<1x32xf32> to vector<8x32xf32>
    %247 = arith.addf %230, %246 : vector<8x32xf32>
    %248 = arith.mulf %237, %247 : vector<8x32xf32>
    %249 = arith.addf %245, %248 : vector<8x32xf32>
    %250 = math.tanh %249 : vector<8x32xf32>
    %251 = arith.subf %226, %250 : vector<8x32xf32>
    %252 = arith.mulf %244, %251 : vector<8x32xf32>
    %253 = arith.addf %250, %252 : vector<8x32xf32>
    %254 = tpu.concatenate %64, %91, %118, %145, %172, %199, %226, %253 in 0 : vector<8x32xf32>, vector<8x32xf32>, vector<8x32xf32>, vector<8x32xf32>, vector<8x32xf32>, vector<8x32xf32>, vector<8x32xf32>, vector<8x32xf32> -> vector<64x32xf32>
    %255 = vector.shape_cast %254 : vector<64x32xf32> to vector<8x8x32xf32>
    %256 = vector.extract_strided_slice %255 {offsets = [0, 0, 0], sizes = [8, 1, 32], strides = [1, 1, 1]} : vector<8x8x32xf32> to vector<8x1x32xf32>
    %257 = vector.shape_cast %256 : vector<8x1x32xf32> to vector<8x32xf32>
    %258 = vector.extract_strided_slice %255 {offsets = [0, 1, 0], sizes = [8, 1, 32], strides = [1, 1, 1]} : vector<8x8x32xf32> to vector<8x1x32xf32>
    %259 = vector.shape_cast %258 : vector<8x1x32xf32> to vector<8x32xf32>
    %260 = vector.extract_strided_slice %255 {offsets = [0, 2, 0], sizes = [8, 1, 32], strides = [1, 1, 1]} : vector<8x8x32xf32> to vector<8x1x32xf32>
    %261 = vector.shape_cast %260 : vector<8x1x32xf32> to vector<8x32xf32>
    %262 = vector.extract_strided_slice %255 {offsets = [0, 3, 0], sizes = [8, 1, 32], strides = [1, 1, 1]} : vector<8x8x32xf32> to vector<8x1x32xf32>
    %263 = vector.shape_cast %262 : vector<8x1x32xf32> to vector<8x32xf32>
    %264 = vector.extract_strided_slice %255 {offsets = [0, 4, 0], sizes = [8, 1, 32], strides = [1, 1, 1]} : vector<8x8x32xf32> to vector<8x1x32xf32>
    %265 = vector.shape_cast %264 : vector<8x1x32xf32> to vector<8x32xf32>
    %266 = vector.extract_strided_slice %255 {offsets = [0, 5, 0], sizes = [8, 1, 32], strides = [1, 1, 1]} : vector<8x8x32xf32> to vector<8x1x32xf32>
    %267 = vector.shape_cast %266 : vector<8x1x32xf32> to vector<8x32xf32>
    %268 = vector.extract_strided_slice %255 {offsets = [0, 6, 0], sizes = [8, 1, 32], strides = [1, 1, 1]} : vector<8x8x32xf32> to vector<8x1x32xf32>
    %269 = vector.shape_cast %268 : vector<8x1x32xf32> to vector<8x32xf32>
    %270 = vector.extract_strided_slice %255 {offsets = [0, 7, 0], sizes = [8, 1, 32], strides = [1, 1, 1]} : vector<8x8x32xf32> to vector<8x1x32xf32>
    %271 = vector.shape_cast %270 : vector<8x1x32xf32> to vector<8x32xf32>
    %272 = tpu.concatenate %257, %259, %261, %263, %265, %267, %269, %271 in 0 : vector<8x32xf32>, vector<8x32xf32>, vector<8x32xf32>, vector<8x32xf32>, vector<8x32xf32>, vector<8x32xf32>, vector<8x32xf32>, vector<8x32xf32> -> vector<64x32xf32>
    %273 = arith.truncf %272 : vector<64x32xf32> to vector<64x32xbf16>
    %c0_79 = arith.constant 0 : index
    %c0_80 = arith.constant 0 : index
    %274 = vector.load %arg11[%c0_79, %c0_80] : memref<32x24xbf16, #tpu.memory_space<vmem>>, vector<32x24xbf16>
    %cst_81 = arith.constant dense<0.000000e+00> : vector<64x24xf32>
    %275 = tpu.matmul %273, %274, %cst_81 {dimension_numbers = #tpu.dot_dimension_numbers<[1], [0], [0], [1], [0, 0, 1, 1], [], []>} : vector<64x32xbf16>, vector<32x24xbf16>, vector<64x24xf32> -> vector<64x24xf32>
    %c0_82 = arith.constant 0 : index
    %c0_83 = arith.constant 0 : index
    %276 = vector.load %arg12[%c0_82, %c0_83] : memref<1x24xf32, #tpu.memory_space<vmem>>, vector<1x24xf32>
    %277 = vector.broadcast %276 : vector<1x24xf32> to vector<64x24xf32>
    %278 = arith.addf %275, %277 : vector<64x24xf32>
    %c0_84 = arith.constant 0 : index
    %c0_85 = arith.constant 0 : index
    %279 = vector.load %arg13[%c0_84, %c0_85] : memref<1x24xf32, #tpu.memory_space<vmem>>, vector<1x24xf32>
    %c0_86 = arith.constant 0 : index
    %c0_87 = arith.constant 0 : index
    %280 = vector.load %arg14[%c0_86, %c0_87] : memref<1x24xf32, #tpu.memory_space<vmem>>, vector<1x24xf32>
    %cst_88 = arith.constant dense<0.000000e+00> : vector<24xf32>
    %281 = vector.multi_reduction <add>, %278, %cst_88 [0] : vector<64x24xf32> to vector<24xf32>
    %282 = vector.shape_cast %281 : vector<24xf32> to vector<1x24xf32>
    %cst_89 = arith.constant 1.562500e-02 : f32
    %283 = vector.broadcast %cst_89 : f32 to vector<1x24xf32>
    %284 = arith.mulf %282, %283 : vector<1x24xf32>
    %285 = arith.mulf %278, %278 : vector<64x24xf32>
    %cst_90 = arith.constant dense<0.000000e+00> : vector<24xf32>
    %286 = vector.multi_reduction <add>, %285, %cst_90 [0] : vector<64x24xf32> to vector<24xf32>
    %287 = vector.shape_cast %286 : vector<24xf32> to vector<1x24xf32>
    %cst_91 = arith.constant 1.562500e-02 : f32
    %288 = vector.broadcast %cst_91 : f32 to vector<1x24xf32>
    %289 = arith.mulf %287, %288 : vector<1x24xf32>
    %290 = arith.mulf %284, %284 : vector<1x24xf32>
    %291 = arith.subf %289, %290 : vector<1x24xf32>
    %292 = vector.broadcast %284 : vector<1x24xf32> to vector<64x24xf32>
    %293 = arith.subf %278, %292 : vector<64x24xf32>
    %cst_92 = arith.constant 9.99999974E-6 : f32
    %294 = vector.broadcast %cst_92 : f32 to vector<1x24xf32>
    %295 = arith.addf %291, %294 : vector<1x24xf32>
    %296 = math.rsqrt %295 : vector<1x24xf32>
    %297 = vector.broadcast %296 : vector<1x24xf32> to vector<64x24xf32>
    %298 = arith.mulf %293, %297 : vector<64x24xf32>
    %299 = vector.broadcast %279 : vector<1x24xf32> to vector<64x24xf32>
    %300 = arith.mulf %298, %299 : vector<64x24xf32>
    %301 = vector.broadcast %280 : vector<1x24xf32> to vector<64x24xf32>
    %302 = arith.addf %300, %301 : vector<64x24xf32>
    %cst_93 = arith.constant 0.000000e+00 : f32
    %303 = vector.broadcast %cst_93 : f32 to vector<64x24xf32>
    %304 = arith.cmpf ogt, %302, %303 : vector<64x24xf32>
    %cst_94 = arith.constant 0.000000e+00 : f32
    %305 = vector.broadcast %cst_94 : f32 to vector<64x24xf32>
    %306 = arith.minimumf %302, %305 : vector<64x24xf32>
    %307 = math.exp %306 : vector<64x24xf32>
    %cst_95 = arith.constant 1.000000e+00 : f32
    %308 = vector.broadcast %cst_95 : f32 to vector<64x24xf32>
    %309 = arith.subf %307, %308 : vector<64x24xf32>
    %310 = arith.select %304, %302, %309 : vector<64x24xi1>, vector<64x24xf32>
    %311 = arith.truncf %310 : vector<64x24xf32> to vector<64x24xbf16>
    %c0_96 = arith.constant 0 : index
    %c0_97 = arith.constant 0 : index
    %312 = vector.load %arg15[%c0_96, %c0_97] : memref<24x16xbf16, #tpu.memory_space<vmem>>, vector<24x16xbf16>
    %cst_98 = arith.constant dense<0.000000e+00> : vector<64x16xf32>
    %313 = tpu.matmul %311, %312, %cst_98 {dimension_numbers = #tpu.dot_dimension_numbers<[1], [0], [0], [1], [0, 0, 1, 1], [], []>} : vector<64x24xbf16>, vector<24x16xbf16>, vector<64x16xf32> -> vector<64x16xf32>
    %c0_99 = arith.constant 0 : index
    %c0_100 = arith.constant 0 : index
    %314 = vector.load %arg16[%c0_99, %c0_100] : memref<1x16xf32, #tpu.memory_space<vmem>>, vector<1x16xf32>
    %315 = vector.broadcast %314 : vector<1x16xf32> to vector<64x16xf32>
    %316 = arith.addf %313, %315 : vector<64x16xf32>
    %c0_101 = arith.constant 0 : index
    %c0_102 = arith.constant 0 : index
    %317 = vector.load %arg17[%c0_101, %c0_102] : memref<1x16xf32, #tpu.memory_space<vmem>>, vector<1x16xf32>
    %c0_103 = arith.constant 0 : index
    %c0_104 = arith.constant 0 : index
    %318 = vector.load %arg18[%c0_103, %c0_104] : memref<1x16xf32, #tpu.memory_space<vmem>>, vector<1x16xf32>
    %cst_105 = arith.constant dense<0.000000e+00> : vector<16xf32>
    %319 = vector.multi_reduction <add>, %316, %cst_105 [0] : vector<64x16xf32> to vector<16xf32>
    %320 = vector.shape_cast %319 : vector<16xf32> to vector<1x16xf32>
    %cst_106 = arith.constant 1.562500e-02 : f32
    %321 = vector.broadcast %cst_106 : f32 to vector<1x16xf32>
    %322 = arith.mulf %320, %321 : vector<1x16xf32>
    %323 = arith.mulf %316, %316 : vector<64x16xf32>
    %cst_107 = arith.constant dense<0.000000e+00> : vector<16xf32>
    %324 = vector.multi_reduction <add>, %323, %cst_107 [0] : vector<64x16xf32> to vector<16xf32>
    %325 = vector.shape_cast %324 : vector<16xf32> to vector<1x16xf32>
    %cst_108 = arith.constant 1.562500e-02 : f32
    %326 = vector.broadcast %cst_108 : f32 to vector<1x16xf32>
    %327 = arith.mulf %325, %326 : vector<1x16xf32>
    %328 = arith.mulf %322, %322 : vector<1x16xf32>
    %329 = arith.subf %327, %328 : vector<1x16xf32>
    %330 = vector.broadcast %322 : vector<1x16xf32> to vector<64x16xf32>
    %331 = arith.subf %316, %330 : vector<64x16xf32>
    %cst_109 = arith.constant 9.99999974E-6 : f32
    %332 = vector.broadcast %cst_109 : f32 to vector<1x16xf32>
    %333 = arith.addf %329, %332 : vector<1x16xf32>
    %334 = math.rsqrt %333 : vector<1x16xf32>
    %335 = vector.broadcast %334 : vector<1x16xf32> to vector<64x16xf32>
    %336 = arith.mulf %331, %335 : vector<64x16xf32>
    %337 = vector.broadcast %317 : vector<1x16xf32> to vector<64x16xf32>
    %338 = arith.mulf %336, %337 : vector<64x16xf32>
    %339 = vector.broadcast %318 : vector<1x16xf32> to vector<64x16xf32>
    %340 = arith.addf %338, %339 : vector<64x16xf32>
    %cst_110 = arith.constant 0.000000e+00 : f32
    %341 = vector.broadcast %cst_110 : f32 to vector<64x16xf32>
    %342 = arith.cmpf ogt, %340, %341 : vector<64x16xf32>
    %cst_111 = arith.constant 0.000000e+00 : f32
    %343 = vector.broadcast %cst_111 : f32 to vector<64x16xf32>
    %344 = arith.minimumf %340, %343 : vector<64x16xf32>
    %345 = math.exp %344 : vector<64x16xf32>
    %cst_112 = arith.constant 1.000000e+00 : f32
    %346 = vector.broadcast %cst_112 : f32 to vector<64x16xf32>
    %347 = arith.subf %345, %346 : vector<64x16xf32>
    %348 = arith.select %342, %340, %347 : vector<64x16xi1>, vector<64x16xf32>
    %349 = arith.truncf %348 : vector<64x16xf32> to vector<64x16xbf16>
    %c0_113 = arith.constant 0 : index
    %c0_114 = arith.constant 0 : index
    %350 = vector.load %arg19[%c0_113, %c0_114] : memref<16x16xbf16, #tpu.memory_space<vmem>>, vector<16x16xbf16>
    %cst_115 = arith.constant dense<0.000000e+00> : vector<64x16xf32>
    %351 = tpu.matmul %349, %350, %cst_115 {dimension_numbers = #tpu.dot_dimension_numbers<[1], [0], [0], [1], [0, 0, 1, 1], [], []>} : vector<64x16xbf16>, vector<16x16xbf16>, vector<64x16xf32> -> vector<64x16xf32>
    %c0_116 = arith.constant 0 : index
    %c0_117 = arith.constant 0 : index
    %352 = vector.load %arg20[%c0_116, %c0_117] : memref<1x16xf32, #tpu.memory_space<vmem>>, vector<1x16xf32>
    %353 = vector.broadcast %352 : vector<1x16xf32> to vector<64x16xf32>
    %354 = arith.addf %351, %353 : vector<64x16xf32>
    %c0_118 = arith.constant 0 : index
    %c0_119 = arith.constant 0 : index
    %355 = vector.load %arg21[%c0_118, %c0_119] : memref<1x16xf32, #tpu.memory_space<vmem>>, vector<1x16xf32>
    %c0_120 = arith.constant 0 : index
    %c0_121 = arith.constant 0 : index
    %356 = vector.load %arg22[%c0_120, %c0_121] : memref<1x16xf32, #tpu.memory_space<vmem>>, vector<1x16xf32>
    %cst_122 = arith.constant dense<0.000000e+00> : vector<16xf32>
    %357 = vector.multi_reduction <add>, %354, %cst_122 [0] : vector<64x16xf32> to vector<16xf32>
    %358 = vector.shape_cast %357 : vector<16xf32> to vector<1x16xf32>
    %cst_123 = arith.constant 1.562500e-02 : f32
    %359 = vector.broadcast %cst_123 : f32 to vector<1x16xf32>
    %360 = arith.mulf %358, %359 : vector<1x16xf32>
    %361 = arith.mulf %354, %354 : vector<64x16xf32>
    %cst_124 = arith.constant dense<0.000000e+00> : vector<16xf32>
    %362 = vector.multi_reduction <add>, %361, %cst_124 [0] : vector<64x16xf32> to vector<16xf32>
    %363 = vector.shape_cast %362 : vector<16xf32> to vector<1x16xf32>
    %cst_125 = arith.constant 1.562500e-02 : f32
    %364 = vector.broadcast %cst_125 : f32 to vector<1x16xf32>
    %365 = arith.mulf %363, %364 : vector<1x16xf32>
    %366 = arith.mulf %360, %360 : vector<1x16xf32>
    %367 = arith.subf %365, %366 : vector<1x16xf32>
    %368 = vector.broadcast %360 : vector<1x16xf32> to vector<64x16xf32>
    %369 = arith.subf %354, %368 : vector<64x16xf32>
    %cst_126 = arith.constant 9.99999974E-6 : f32
    %370 = vector.broadcast %cst_126 : f32 to vector<1x16xf32>
    %371 = arith.addf %367, %370 : vector<1x16xf32>
    %372 = math.rsqrt %371 : vector<1x16xf32>
    %373 = vector.broadcast %372 : vector<1x16xf32> to vector<64x16xf32>
    %374 = arith.mulf %369, %373 : vector<64x16xf32>
    %375 = vector.broadcast %355 : vector<1x16xf32> to vector<64x16xf32>
    %376 = arith.mulf %374, %375 : vector<64x16xf32>
    %377 = vector.broadcast %356 : vector<1x16xf32> to vector<64x16xf32>
    %378 = arith.addf %376, %377 : vector<64x16xf32>
    %cst_127 = arith.constant 0.000000e+00 : f32
    %379 = vector.broadcast %cst_127 : f32 to vector<64x16xf32>
    %380 = arith.cmpf ogt, %378, %379 : vector<64x16xf32>
    %cst_128 = arith.constant 0.000000e+00 : f32
    %381 = vector.broadcast %cst_128 : f32 to vector<64x16xf32>
    %382 = arith.minimumf %378, %381 : vector<64x16xf32>
    %383 = math.exp %382 : vector<64x16xf32>
    %cst_129 = arith.constant 1.000000e+00 : f32
    %384 = vector.broadcast %cst_129 : f32 to vector<64x16xf32>
    %385 = arith.subf %383, %384 : vector<64x16xf32>
    %386 = arith.select %380, %378, %385 : vector<64x16xi1>, vector<64x16xf32>
    %387 = arith.truncf %386 : vector<64x16xf32> to vector<64x16xbf16>
    %c0_130 = arith.constant 0 : index
    %c0_131 = arith.constant 0 : index
    %388 = vector.load %arg23[%c0_130, %c0_131] : memref<16x16xbf16, #tpu.memory_space<vmem>>, vector<16x16xbf16>
    %cst_132 = arith.constant dense<0.000000e+00> : vector<64x16xf32>
    %389 = tpu.matmul %387, %388, %cst_132 {dimension_numbers = #tpu.dot_dimension_numbers<[1], [0], [0], [1], [0, 0, 1, 1], [], []>} : vector<64x16xbf16>, vector<16x16xbf16>, vector<64x16xf32> -> vector<64x16xf32>
    %c0_133 = arith.constant 0 : index
    %c0_134 = arith.constant 0 : index
    %390 = vector.load %arg24[%c0_133, %c0_134] : memref<1x16xf32, #tpu.memory_space<vmem>>, vector<1x16xf32>
    %391 = vector.broadcast %390 : vector<1x16xf32> to vector<64x16xf32>
    %392 = arith.addf %389, %391 : vector<64x16xf32>
    %c0_135 = arith.constant 0 : index
    %c0_136 = arith.constant 0 : index
    %393 = vector.load %arg25[%c0_135, %c0_136] : memref<1x16xf32, #tpu.memory_space<vmem>>, vector<1x16xf32>
    %c0_137 = arith.constant 0 : index
    %c0_138 = arith.constant 0 : index
    %394 = vector.load %arg26[%c0_137, %c0_138] : memref<1x16xf32, #tpu.memory_space<vmem>>, vector<1x16xf32>
    %cst_139 = arith.constant dense<0.000000e+00> : vector<16xf32>
    %395 = vector.multi_reduction <add>, %392, %cst_139 [0] : vector<64x16xf32> to vector<16xf32>
    %396 = vector.shape_cast %395 : vector<16xf32> to vector<1x16xf32>
    %cst_140 = arith.constant 1.562500e-02 : f32
    %397 = vector.broadcast %cst_140 : f32 to vector<1x16xf32>
    %398 = arith.mulf %396, %397 : vector<1x16xf32>
    %399 = arith.mulf %392, %392 : vector<64x16xf32>
    %cst_141 = arith.constant dense<0.000000e+00> : vector<16xf32>
    %400 = vector.multi_reduction <add>, %399, %cst_141 [0] : vector<64x16xf32> to vector<16xf32>
    %401 = vector.shape_cast %400 : vector<16xf32> to vector<1x16xf32>
    %cst_142 = arith.constant 1.562500e-02 : f32
    %402 = vector.broadcast %cst_142 : f32 to vector<1x16xf32>
    %403 = arith.mulf %401, %402 : vector<1x16xf32>
    %404 = arith.mulf %398, %398 : vector<1x16xf32>
    %405 = arith.subf %403, %404 : vector<1x16xf32>
    %406 = vector.broadcast %398 : vector<1x16xf32> to vector<64x16xf32>
    %407 = arith.subf %392, %406 : vector<64x16xf32>
    %cst_143 = arith.constant 9.99999974E-6 : f32
    %408 = vector.broadcast %cst_143 : f32 to vector<1x16xf32>
    %409 = arith.addf %405, %408 : vector<1x16xf32>
    %410 = math.rsqrt %409 : vector<1x16xf32>
    %411 = vector.broadcast %410 : vector<1x16xf32> to vector<64x16xf32>
    %412 = arith.mulf %407, %411 : vector<64x16xf32>
    %413 = vector.broadcast %393 : vector<1x16xf32> to vector<64x16xf32>
    %414 = arith.mulf %412, %413 : vector<64x16xf32>
    %415 = vector.broadcast %394 : vector<1x16xf32> to vector<64x16xf32>
    %416 = arith.addf %414, %415 : vector<64x16xf32>
    %cst_144 = arith.constant 0.000000e+00 : f32
    %417 = vector.broadcast %cst_144 : f32 to vector<64x16xf32>
    %418 = arith.cmpf ogt, %416, %417 : vector<64x16xf32>
    %cst_145 = arith.constant 0.000000e+00 : f32
    %419 = vector.broadcast %cst_145 : f32 to vector<64x16xf32>
    %420 = arith.minimumf %416, %419 : vector<64x16xf32>
    %421 = math.exp %420 : vector<64x16xf32>
    %cst_146 = arith.constant 1.000000e+00 : f32
    %422 = vector.broadcast %cst_146 : f32 to vector<64x16xf32>
    %423 = arith.subf %421, %422 : vector<64x16xf32>
    %424 = arith.select %418, %416, %423 : vector<64x16xi1>, vector<64x16xf32>
    %425 = vector.shape_cast %348 : vector<64x16xf32> to vector<8x8x16xf32>
    %c0_147 = arith.constant 0 : index
    %c0_148 = arith.constant 0 : index
    %c0_149 = arith.constant 0 : index
    %426 = vector.load %arg27[%c0_147, %c0_148, %c0_149] : memref<8x8x16xf32, #tpu.memory_space<vmem>>, vector<8x8x16xf32>
    tpu.vector_store %arg27[%c0_147, %c0_148, %c0_149], %425 {strides = array<i32>} : memref<8x8x16xf32, #tpu.memory_space<vmem>>, vector<8x8x16xf32>,
    %427 = vector.shape_cast %424 : vector<64x16xf32> to vector<8x8x16xf32>
    %c0_150 = arith.constant 0 : index
    %c0_151 = arith.constant 0 : index
    %c0_152 = arith.constant 0 : index
    %428 = vector.load %arg28[%c0_150, %c0_151, %c0_152] : memref<8x8x16xf32, #tpu.memory_space<vmem>>, vector<8x8x16xf32>
    tpu.vector_store %arg28[%c0_150, %c0_151, %c0_152], %427 {strides = array<i32>} : memref<8x8x16xf32, #tpu.memory_space<vmem>>, vector<8x8x16xf32>,
    return
  }
}

</mosaic_0001>

<llo_original>
// kernel: rnn_energy_net_forward.1
$region0: #{rnn_energy_net_forward.1}
  #allocation0 [shape = 'u32[]', space=smem, size = 0x4, offset = 0x4, fixed_abs, tag = 'smem constant byte address 0x4 - core index']
  #allocation1 [shape = 'u32[144,128]{1,0:T(1,128)}', space=vmem, size = 0x12000, scoped, tag = 'internal scratch']
  %s0 = inlined_call_operand.hbm [shape: f32[8,8,16], index: 0, kind: input, shape index: {}]
  %s1 = inlined_call_operand.vmem [shape: bf16[16,32], index: 1, kind: input, shape index: {}]
  %s2 = inlined_call_operand.vmem [shape: bf16[16,32], index: 2, kind: input, shape index: {}]
  %s3 = inlined_call_operand.vmem [shape: bf16[16,32], index: 3, kind: input, shape index: {}]
  %s4 = inlined_call_operand.hbm [shape: f32[1,32], index: 4, kind: input, shape index: {}]
  %s5 = inlined_call_operand.hbm [shape: f32[1,32], index: 5, kind: input, shape index: {}]
  %s6 = inlined_call_operand.hbm [shape: f32[1,32], index: 6, kind: input, shape index: {}]
  %s7 = inlined_call_operand.hbm [shape: f32[1,32], index: 7, kind: input, shape index: {}]
  %s8 = inlined_call_operand.vmem [shape: bf16[32,32], index: 8, kind: input, shape index: {}]
  %s9 = inlined_call_operand.vmem [shape: bf16[32,32], index: 9, kind: input, shape index: {}]
  %s10 = inlined_call_operand.vmem [shape: bf16[32,32], index: 10, kind: input, shape index: {}]
  %s11 = inlined_call_operand.vmem [shape: bf16[32,24], index: 11, kind: input, shape index: {}]
  %s12 = inlined_call_operand.hbm [shape: f32[1,24], index: 12, kind: input, shape index: {}]
  %s13 = inlined_call_operand.hbm [shape: f32[1,24], index: 13, kind: input, shape index: {}]
  %s14 = inlined_call_operand.hbm [shape: f32[1,24], index: 14, kind: input, shape index: {}]
  %s15 = inlined_call_operand.vmem [shape: bf16[24,16], index: 15, kind: input, shape index: {}]
  %s16 = inlined_call_operand.hbm [shape: f32[1,16], index: 16, kind: input, shape index: {}]
  %s17 = inlined_call_operand.hbm [shape: f32[1,16], index: 17, kind: input, shape index: {}]
  %s18 = inlined_call_operand.hbm [shape: f32[1,16], index: 18, kind: input, shape index: {}]
  %s19 = inlined_call_operand.vmem [shape: bf16[16,16], index: 19, kind: input, shape index: {}]
  %s20 = inlined_call_operand.hbm [shape: f32[1,16], index: 20, kind: input, shape index: {}]
  %s21 = inlined_call_operand.hbm [shape: f32[1,16], index: 21, kind: input, shape index: {}]
  %s22 = inlined_call_operand.hbm [shape: f32[1,16], index: 22, kind: input, shape index: {}]
  %s23 = inlined_call_operand.vmem [shape: bf16[16,16], index: 23, kind: input, shape index: {}]
  %s24 = inlined_call_operand.hbm [shape: f32[1,16], index: 24, kind: input, shape index: {}]
  %s25 = inlined_call_operand.hbm [shape: f32[1,16], index: 25, kind: input, shape index: {}]
  %s26 = inlined_call_operand.hbm [shape: f32[1,16], index: 26, kind: input, shape index: {}]
  %s27 = inlined_call_operand.hbm [shape: f32[8,8,16], index: 27, kind: output, shape index: {0}]
  %s28 = inlined_call_operand.hbm [shape: f32[8,8,16], index: 28, kind: output, shape index: {1}]
  %29 = xla_tuple %s27, %s28
  %s30 = sld [smem:[#allocation0]]
  $region194: #{rnn_energy_net_forward.1} parent=0
    _
  %s32 = ssub.s32 1, %s30
  %s33 = scalar_select 0, %s32, %s30
  $region1: #{rnn_energy_net_forward.1} parent=0
    #allocation2 [shape = 'u8[32768]{0}', space=vmem, size = 0x8000, scoped, tag = 'input window, operand 0, single buffered']
    #allocation3 [shape = 's32[1]{0}', space=sflag, size = 0x4, scoped, tag = 'scoped memory for rnn_energy_net_forward.1']
    #allocation4 [shape = 's32[1]{0}', space=sflag, size = 0x4, scoped, tag = 'scoped memory for rnn_energy_net_forward.1']
    #allocation5 [shape = 'u8[512]{0}', space=vmem, size = 0x400, scoped, tag = 'input window, operand 4, single buffered']
    #allocation6 [shape = 's32[1]{0}', space=sflag, size = 0x4, scoped, tag = 'scoped memory for rnn_energy_net_forward.1']
    #allocation7 [shape = 'u8[512]{0}', space=vmem, size = 0x400, scoped, tag = 'input window, operand 5, single buffered']
    #allocation8 [shape = 'u8[512]{0}', space=vmem, size = 0x400, scoped, tag = 'input window, operand 6, single buffered']
    #allocation9 [shape = 's32[1]{0}', space=sflag, size = 0x4, scoped, tag = 'scoped memory for rnn_energy_net_forward.1']
    #allocation10 [shape = 'u8[512]{0}', space=vmem, size = 0x400, scoped, tag = 'input window, operand 7, single buffered']
    #allocation11 [shape = 'u8[512]{0}', space=vmem, size = 0x400, scoped, tag = 'input window, operand 12, single buffered']
    #allocation12 [shape = 's32[1]{0}', space=sflag, size = 0x4, scoped, tag = 'scoped memory for rnn_energy_net_forward.1']
    #allocation13 [shape = 'u8[512]{0}', space=vmem, size = 0x400, scoped, tag = 'input window, operand 13, single buffered']
    #allocation14 [shape = 'u8[512]{0}', space=vmem, size = 0x400, scoped, tag = 'input window, operand 14, single buffered']
    #allocation15 [shape = 's32[1]{0}', space=sflag, size = 0x4, scoped, tag = 'scoped memory for rnn_energy_net_forward.1']
    #allocation16 [shape = 'u8[512]{0}', space=vmem, size = 0x400, scoped, tag = 'input window, operand 16, single buffered']
    #allocation17 [shape = 'u8[512]{0}', space=vmem, size = 0x400, scoped, tag = 'input window, operand 17, single buffered']
    #allocation18 [shape = 's32[1]{0}', space=sflag, size = 0x4, scoped, tag = 'scoped memory for rnn_energy_net_forward.1']
    #allocation19 [shape = 'u8[512]{0}', space=vmem, size = 0x400, scoped, tag = 'input window, operand 18, single buffered']
    #allocation20 [shape = 'u8[512]{0}', space=vmem, size = 0x400, scoped, tag = 'input window, operand 20, single buffered']
    #allocation21 [shape = 's32[1]{0}', space=sflag, size = 0x4, scoped, tag = 'scoped memory for rnn_energy_net_forward.1']
    #allocation22 [shape = 'u8[512]{0}', space=vmem, size = 0x400, scoped, tag = 'input window, operand 21, single buffered']
    #allocation23 [shape = 'u8[512]{0}', space=vmem, size = 0x400, scoped, tag = 'input window, operand 22, single buffered']
    #allocation24 [shape = 's32[1]{0}', space=sflag, size = 0x4, scoped, tag = 'scoped memory for rnn_energy_net_forward.1']
    #allocation25 [shape = 'u8[512]{0}', space=vmem, size = 0x400, scoped, tag = 'input window, operand 24, single buffered']
    #allocation26 [shape = 'u8[512]{0}', space=vmem, size = 0x400, scoped, tag = 'input window, operand 25, single buffered']
    #allocation27 [shape = 's32[1]{0}', space=sflag, size = 0x4, scoped, tag = 'scoped memory for rnn_energy_net_forward.1']
    #allocation28 [shape = 'u8[512]{0}', space=vmem, size = 0x400, scoped, tag = 'input window, operand 26, single buffered']
    #allocation29 [shape = 'u8[32768]{0}', space=vmem, size = 0x8000, scoped, tag = 'output window, operand 0, single buffered']
    #allocation30 [shape = 'u8[32768]{0}', space=vmem, size = 0x8000, scoped, tag = 'output window, operand 1, single buffered']
    #allocation31 [shape = 's32[1]{0}', space=sflag, size = 0x4, scoped, tag = 'scoped memory for rnn_energy_net_forward.1']
    %34 = vsyncpa [#allocation3], 0
    %35 = vsyncpa [#allocation6], 0
    %36 = vsyncpa [#allocation9], 0
    %37 = vsyncpa [#allocation12], 0
    %38 = vsyncpa [#allocation15], 0
    %39 = vsyncpa [#allocation18], 0
    %40 = vsyncpa [#allocation21], 0
    %41 = vsyncpa [#allocation24], 0
    %42 = vsyncpa [#allocation27], 0
    %43 = vsyncpa [#allocation4], 0
    %44 = vsyncpa [#allocation31], 0
    // Predicated region
    $region2: #{rnn_energy_net_forward.1} parent=1 // pred_check
      _
    $region3: #{rnn_energy_net_forward.1} parent=1 // pred_check_branch
      %46 = sbr.rel (0) target = $region5
    $region4: #{rnn_energy_net_forward.1} parent=1 // pred_region
      %s48 = ssub.s32 1024, 1024
      %49 = vsyncadd [#allocation3], %s48
      %s50 = sshll.u32 [#allocation2], 4
      %s51 = int_to_ptr.vmem [resolvable:$true] %s50
      %56 = dma.hbm_to_vmem [thread:$0]  %s0, 1024, %s51, [#allocation3], 128, 128, 8
    $region5: #{rnn_energy_net_forward.1} parent=1 // pred_fallthru
      _
    // Predicated region
    $region6: #{rnn_energy_net_forward.1} parent=1 // pred_check
      _
    $region7: #{rnn_energy_net_forward.1} parent=1 // pred_check_branch
      %58 = sbr.rel (0) target = $region9
    $region8: #{rnn_energy_net_forward.1} parent=1 // pred_region
      _
    $region9: #{rnn_energy_net_forward.1} parent=1 // pred_fallthru
      _
    // Predicated region
    $region10: #{rnn_energy_net_forward.1} parent=1 // pred_check
      _
    $region11: #{rnn_energy_net_forward.1} parent=1 // pred_check_branch
      %60 = sbr.rel (0) target = $region13
    $region12: #{rnn_energy_net_forward.1} parent=1 // pred_region
      _
    $region13: #{rnn_energy_net_forward.1} parent=1 // pred_fallthru
      _
    // Predicated region
    $region14: #{rnn_energy_net_forward.1} parent=1 // pred_check
      _
    $region15: #{rnn_energy_net_forward.1} parent=1 // pred_check_branch
      %62 = sbr.rel (0) target = $region17
    $region16: #{rnn_energy_net_forward.1} parent=1 // pred_region
      _
    $region17: #{rnn_energy_net_forward.1} parent=1 // pred_fallthru
      _
    // Predicated region
    $region18: #{rnn_energy_net_forward.1} parent=1 // pred_check
      _
    $region19: #{rnn_energy_net_forward.1} parent=1 // pred_check_branch
      %64 = sbr.rel (0) target = $region21
    $region20: #{rnn_energy_net_forward.1} parent=1 // pred_region
      %s66 = ssub.s32 16, 16
      %67 = vsyncadd [#allocation6], %s66
      %s69 = sshll.u32 [#allocation5], 4
      %s70 = int_to_ptr.vmem [resolvable:$true] %s69
      %72 = dma.hbm_to_vmem [thread:$0]  %s4, 16, %s70, [#allocation6]
    $region21: #{rnn_energy_net_forward.1} parent=1 // pred_fallthru
      _
    // Predicated region
    $region22: #{rnn_energy_net_forward.1} parent=1 // pred_check
      _
    $region23: #{rnn_energy_net_forward.1} parent=1 // pred_check_branch
      %74 = sbr.rel (0) target = $region25
    $region24: #{rnn_energy_net_forward.1} parent=1 // pred_region
      %s76 = ssub.s32 16, 16
      %77 = vsyncadd [#allocation6], %s76
      %s79 = sshll.u32 [#allocation7], 4
      %s80 = int_to_ptr.vmem [resolvable:$true] %s79
      %82 = dma.hbm_to_vmem [thread:$0]  %s5, 16, %s80, [#allocation6]
    $region25: #{rnn_energy_net_forward.1} parent=1 // pred_fallthru
      _
    // Predicated region
    $region26: #{rnn_energy_net_forward.1} parent=1 // pred_check
      _
    $region27: #{rnn_energy_net_forward.1} parent=1 // pred_check_branch
      %84 = sbr.rel (0) target = $region29
    $region28: #{rnn_energy_net_forward.1} parent=1 // pred_region
      %s86 = ssub.s32 16, 16
      %87 = vsyncadd [#allocation9], %s86
      %s89 = sshll.u32 [#allocation8], 4
      %s90 = int_to_ptr.vmem [resolvable:$true] %s89
      %92 = dma.hbm_to_vmem [thread:$0]  %s6, 16, %s90, [#allocation9]
    $region29: #{rnn_energy_net_forward.1} parent=1 // pred_fallthru
      _
    // Predicated region
    $region30: #{rnn_energy_net_forward.1} parent=1 // pred_check
      _
    $region31: #{rnn_energy_net_forward.1} parent=1 // pred_check_branch
      %94 = sbr.rel (0) target = $region33
    $region32: #{rnn_energy_net_forward.1} parent=1 // pred_region
      %s96 = ssub.s32 16, 16
      %97 = vsyncadd [#allocation9], %s96
      %s99 = sshll.u32 [#allocation10], 4
      %s100 = int_to_ptr.vmem [resolvable:$true] %s99
      %102 = dma.hbm_to_vmem [thread:$0]  %s7, 16, %s100, [#allocation9]
    $region33: #{rnn_energy_net_forward.1} parent=1 // pred_fallthru
      _
    // Predicated region
    $region34: #{rnn_energy_net_forward.1} parent=1 // pred_check
      _
    $region35: #{rnn_energy_net_forward.1} parent=1 // pred_check_branch
      %104 = sbr.rel (0) target = $region37
    $region36: #{rnn_energy_net_forward.1} parent=1 // pred_region
      _
    $region37: #{rnn_energy_net_forward.1} parent=1 // pred_fallthru
      _
    // Predicated region
    $region38: #{rnn_energy_net_forward.1} parent=1 // pred_check
      _
    $region39: #{rnn_energy_net_forward.1} parent=1 // pred_check_branch
      %106 = sbr.rel (0) target = $region41
    $region40: #{rnn_energy_net_forward.1} parent=1 // pred_region
      _
    $region41: #{rnn_energy_net_forward.1} parent=1 // pred_fallthru
      _
    // Predicated region
    $region42: #{rnn_energy_net_forward.1} parent=1 // pred_check
      _
    $region43: #{rnn_energy_net_forward.1} parent=1 // pred_check_branch
      %108 = sbr.rel (0) target = $region45
    $region44: #{rnn_energy_net_forward.1} parent=1 // pred_region
      _
    $region45: #{rnn_energy_net_forward.1} parent=1 // pred_fallthru
      _
    // Predicated region
    $region46: #{rnn_energy_net_forward.1} parent=1 // pred_check
      _
    $region47: #{rnn_energy_net_forward.1} parent=1 // pred_check_branch
      %110 = sbr.rel (0) target = $region49
    $region48: #{rnn_energy_net_forward.1} parent=1 // pred_region
      _
    $region49: #{rnn_energy_net_forward.1} parent=1 // pred_fallthru
      _
    // Predicated region
    $region50: #{rnn_energy_net_forward.1} parent=1 // pred_check
      _
    $region51: #{rnn_energy_net_forward.1} parent=1 // pred_check_branch
      %112 = sbr.rel (0) target = $region53
    $region52: #{rnn_energy_net_forward.1} parent=1 // pred_region
      %s114 = ssub.s32 16, 16
      %115 = vsyncadd [#allocation12], %s114
      %s117 = sshll.u32 [#allocation11], 4
      %s118 = int_to_ptr.vmem [resolvable:$true] %s117
      %120 = dma.hbm_to_vmem [thread:$0]  %s12, 16, %s118, [#allocation12]
    $region53: #{rnn_energy_net_forward.1} parent=1 // pred_fallthru
      _
    // Predicated region
    $region54: #{rnn_energy_net_forward.1} parent=1 // pred_check
      _
    $region55: #{rnn_energy_net_forward.1} parent=1 // pred_check_branch
      %122 = sbr.rel (0) target = $region57
    $region56: #{rnn_energy_net_forward.1} parent=1 // pred_region
      %s124 = ssub.s32 16, 16
      %125 = vsyncadd [#allocation12], %s124
      %s127 = sshll.u32 [#allocation13], 4
      %s128 = int_to_ptr.vmem [resolvable:$true] %s127
      %130 = dma.hbm_to_vmem [thread:$0]  %s13, 16, %s128, [#allocation12]
    $region57: #{rnn_energy_net_forward.1} parent=1 // pred_fallthru
      _
    // Predicated region
    $region58: #{rnn_energy_net_forward.1} parent=1 // pred_check
      _
    $region59: #{rnn_energy_net_forward.1} parent=1 // pred_check_branch
      %132 = sbr.rel (0) target = $region61
    $region60: #{rnn_energy_net_forward.1} parent=1 // pred_region
      %s134 = ssub.s32 16, 16
      %135 = vsyncadd [#allocation15], %s134
      %s137 = sshll.u32 [#allocation14], 4
      %s138 = int_to_ptr.vmem [resolvable:$true] %s137
      %140 = dma.hbm_to_vmem [thread:$0]  %s14, 16, %s138, [#allocation15]
    $region61: #{rnn_energy_net_forward.1} parent=1 // pred_fallthru
      _
    // Predicated region
    $region62: #{rnn_energy_net_forward.1} parent=1 // pred_check
      _
    $region63: #{rnn_energy_net_forward.1} parent=1 // pred_check_branch
      %142 = sbr.rel (0) target = $region65
    $region64: #{rnn_energy_net_forward.1} parent=1 // pred_region
      _
    $region65: #{rnn_energy_net_forward.1} parent=1 // pred_fallthru
      _
    // Predicated region
    $region66: #{rnn_energy_net_forward.1} parent=1 // pred_check
      _
    $region67: #{rnn_energy_net_forward.1} parent=1 // pred_check_branch
      %144 = sbr.rel (0) target = $region69
    $region68: #{rnn_energy_net_forward.1} parent=1 // pred_region
      %s146 = ssub.s32 16, 16
      %147 = vsyncadd [#allocation15], %s146
      %s149 = sshll.u32 [#allocation16], 4
      %s150 = int_to_ptr.vmem [resolvable:$true] %s149
      %152 = dma.hbm_to_vmem [thread:$0]  %s16, 16, %s150, [#allocation15]
    $region69: #{rnn_energy_net_forward.1} parent=1 // pred_fallthru
      _
    // Predicated region
    $region70: #{rnn_energy_net_forward.1} parent=1 // pred_check
      _
    $region71: #{rnn_energy_net_forward.1} parent=1 // pred_check_branch
      %154 = sbr.rel (0) target = $region73
    $region72: #{rnn_energy_net_forward.1} parent=1 // pred_region
      %s156 = ssub.s32 16, 16
      %157 = vsyncadd [#allocation18], %s156
      %s159 = sshll.u32 [#allocation17], 4
      %s160 = int_to_ptr.vmem [resolvable:$true] %s159
      %162 = dma.hbm_to_vmem [thread:$0]  %s17, 16, %s160, [#allocation18]
    $region73: #{rnn_energy_net_forward.1} parent=1 // pred_fallthru
      _
    // Predicated region
    $region74: #{rnn_energy_net_forward.1} parent=1 // pred_check
      _
    $region75: #{rnn_energy_net_forward.1} parent=1 // pred_check_branch
      %164 = sbr.rel (0) target = $region77
    $region76: #{rnn_energy_net_forward.1} parent=1 // pred_region
      %s166 = ssub.s32 16, 16
      %167 = vsyncadd [#allocation18], %s166
      %s169 = sshll.u32 [#allocation19], 4
      %s170 = int_to_ptr.vmem [resolvable:$true] %s169
      %172 = dma.hbm_to_vmem [thread:$0]  %s18, 16, %s170, [#allocation18]
    $region77: #{rnn_energy_net_forward.1} parent=1 // pred_fallthru
      _
    // Predicated region
    $region78: #{rnn_energy_net_forward.1} parent=1 // pred_check
      _
    $region79: #{rnn_energy_net_forward.1} parent=1 // pred_check_branch
      %174 = sbr.rel (0) target = $region81
    $region80: #{rnn_energy_net_forward.1} parent=1 // pred_region
      _
    $region81: #{rnn_energy_net_forward.1} parent=1 // pred_fallthru
      _
    // Predicated region
    $region82: #{rnn_energy_net_forward.1} parent=1 // pred_check
      _
    $region83: #{rnn_energy_net_forward.1} parent=1 // pred_check_branch
      %176 = sbr.rel (0) target = $region85
    $region84: #{rnn_energy_net_forward.1} parent=1 // pred_region
      %s178 = ssub.s32 16, 16
      %179 = vsyncadd [#allocation21], %s178
      %s181 = sshll.u32 [#allocation20], 4
      %s182 = int_to_ptr.vmem [resolvable:$true] %s181
      %184 = dma.hbm_to_vmem [thread:$0]  %s20, 16, %s182, [#allocation21]
    $region85: #{rnn_energy_net_forward.1} parent=1 // pred_fallthru
      _
    // Predicated region
    $region86: #{rnn_energy_net_forward.1} parent=1 // pred_check
      _
    $region87: #{rnn_energy_net_forward.1} parent=1 // pred_check_branch
      %186 = sbr.rel (0) target = $region89
    $region88: #{rnn_energy_net_forward.1} parent=1 // pred_region
      %s188 = ssub.s32 16, 16
      %189 = vsyncadd [#allocation21], %s188
      %s191 = sshll.u32 [#allocation22], 4
      %s192 = int_to_ptr.vmem [resolvable:$true] %s191
      %194 = dma.hbm_to_vmem [thread:$0]  %s21, 16, %s192, [#allocation21]
    $region89: #{rnn_energy_net_forward.1} parent=1 // pred_fallthru
      _
    // Predicated region
    $region90: #{rnn_energy_net_forward.1} parent=1 // pred_check
      _
    $region91: #{rnn_energy_net_forward.1} parent=1 // pred_check_branch
      %196 = sbr.rel (0) target = $region93
    $region92: #{rnn_energy_net_forward.1} parent=1 // pred_region
      %s198 = ssub.s32 16, 16
      %199 = vsyncadd [#allocation24], %s198
      %s201 = sshll.u32 [#allocation23], 4
      %s202 = int_to_ptr.vmem [resolvable:$true] %s201
      %204 = dma.hbm_to_vmem [thread:$0]  %s22, 16, %s202, [#allocation24]
    $region93: #{rnn_energy_net_forward.1} parent=1 // pred_fallthru
      _
    // Predicated region
    $region94: #{rnn_energy_net_forward.1} parent=1 // pred_check
      _
    $region95: #{rnn_energy_net_forward.1} parent=1 // pred_check_branch
      %206 = sbr.rel (0) target = $region97
    $region96: #{rnn_energy_net_forward.1} parent=1 // pred_region
      _
    $region97: #{rnn_energy_net_forward.1} parent=1 // pred_fallthru
      _
    // Predicated region
    $region98: #{rnn_energy_net_forward.1} parent=1 // pred_check
      _
    $region99: #{rnn_energy_net_forward.1} parent=1 // pred_check_branch
      %208 = sbr.rel (0) target = $region101
    $region100: #{rnn_energy_net_forward.1} parent=1 // pred_region
      %s210 = ssub.s32 16, 16
      %211 = vsyncadd [#allocation24], %s210
      %s213 = sshll.u32 [#allocation25], 4
      %s214 = int_to_ptr.vmem [resolvable:$true] %s213
      %216 = dma.hbm_to_vmem [thread:$0]  %s24, 16, %s214, [#allocation24]
    $region101: #{rnn_energy_net_forward.1} parent=1 // pred_fallthru
      _
    // Predicated region
    $region102: #{rnn_energy_net_forward.1} parent=1 // pred_check
      _
    $region103: #{rnn_energy_net_forward.1} parent=1 // pred_check_branch
      %218 = sbr.rel (0) target = $region105
    $region104: #{rnn_energy_net_forward.1} parent=1 // pred_region
      %s220 = ssub.s32 16, 16
      %221 = vsyncadd [#allocation27], %s220
      %s223 = sshll.u32 [#allocation26], 4
      %s224 = int_to_ptr.vmem [resolvable:$true] %s223
      %226 = dma.hbm_to_vmem [thread:$0]  %s25, 16, %s224, [#allocation27]
    $region105: #{rnn_energy_net_forward.1} parent=1 // pred_fallthru
      _
    // Predicated region
    $region106: #{rnn_energy_net_forward.1} parent=1 // pred_check
      _
    $region107: #{rnn_energy_net_forward.1} parent=1 // pred_check_branch
      %228 = sbr.rel (0) target = $region109
    $region108: #{rnn_energy_net_forward.1} parent=1 // pred_region
      %s230 = ssub.s32 16, 16
      %231 = vsyncadd [#allocation27], %s230
      %s233 = sshll.u32 [#allocation28], 4
      %s234 = int_to_ptr.vmem [resolvable:$true] %s233
      %236 = dma.hbm_to_vmem [thread:$0]  %s26, 16, %s234, [#allocation27]
    $region109: #{rnn_energy_net_forward.1} parent=1 // pred_fallthru
      _
    // Predicated region
    $region110: #{rnn_energy_net_forward.1} parent=1 // pred_check
      _
    $region111: #{rnn_energy_net_forward.1} parent=1 // pred_check_branch
      %238 = sbr.rel (0) target = $region113
    $region112: #{rnn_energy_net_forward.1} parent=1 // pred_region
      %239 = dma.done [#allocation3], 1024
    $region113: #{rnn_energy_net_forward.1} parent=1 // pred_fallthru
      _
    // Predicated region
    $region114: #{rnn_energy_net_forward.1} parent=1 // pred_check
      _
    $region115: #{rnn_energy_net_forward.1} parent=1 // pred_check_branch
      %241 = sbr.rel (0) target = $region117
    $region116: #{rnn_energy_net_forward.1} parent=1 // pred_region
      %242 = dma.done [#allocation6], 16
    $region117: #{rnn_energy_net_forward.1} parent=1 // pred_fallthru
      _
    // Predicated region
    $region118: #{rnn_energy_net_forward.1} parent=1 // pred_check
      _
    $region119: #{rnn_energy_net_forward.1} parent=1 // pred_check_branch
      %244 = sbr.rel (0) target = $region121
    $region120: #{rnn_energy_net_forward.1} parent=1 // pred_region
      %245 = dma.done [#allocation6], 16
    $region121: #{rnn_energy_net_forward.1} parent=1 // pred_fallthru
      _
    // Predicated region
    $region122: #{rnn_energy_net_forward.1} parent=1 // pred_check
      _
    $region123: #{rnn_energy_net_forward.1} parent=1 // pred_check_branch
      %247 = sbr.rel (0) target = $region125
    $region124: #{rnn_energy_net_forward.1} parent=1 // pred_region
      %248 = dma.done [#allocation9], 16
    $region125: #{rnn_energy_net_forward.1} parent=1 // pred_fallthru
      _
    // Predicated region
    $region126: #{rnn_energy_net_forward.1} parent=1 // pred_check
      _
    $region127: #{rnn_energy_net_forward.1} parent=1 // pred_check_branch
      %250 = sbr.rel (0) target = $region129
    $region128: #{rnn_energy_net_forward.1} parent=1 // pred_region
      %251 = dma.done [#allocation9], 16
    $region129: #{rnn_energy_net_forward.1} parent=1 // pred_fallthru
      _
    // Predicated region
    $region130: #{rnn_energy_net_forward.1} parent=1 // pred_check
      _
    $region131: #{rnn_energy_net_forward.1} parent=1 // pred_check_branch
      %253 = sbr.rel (0) target = $region133
    $region132: #{rnn_energy_net_forward.1} parent=1 // pred_region
      %254 = dma.done [#allocation12], 16
    $region133: #{rnn_energy_net_forward.1} parent=1 // pred_fallthru
      _
    // Predicated region
    $region134: #{rnn_energy_net_forward.1} parent=1 // pred_check
      _
    $region135: #{rnn_energy_net_forward.1} parent=1 // pred_check_branch
      %256 = sbr.rel (0) target = $region137
    $region136: #{rnn_energy_net_forward.1} parent=1 // pred_region
      %257 = dma.done [#allocation12], 16
    $region137: #{rnn_energy_net_forward.1} parent=1 // pred_fallthru
      _
    // Predicated region
    $region138: #{rnn_energy_net_forward.1} parent=1 // pred_check
      _
    $region139: #{rnn_energy_net_forward.1} parent=1 // pred_check_branch
      %259 = sbr.rel (0) target = $region141
    $region140: #{rnn_energy_net_forward.1} parent=1 // pred_region
      %260 = dma.done [#allocation15], 16
    $region141: #{rnn_energy_net_forward.1} parent=1 // pred_fallthru
      _
    // Predicated region
    $region142: #{rnn_energy_net_forward.1} parent=1 // pred_check
      _
    $region143: #{rnn_energy_net_forward.1} parent=1 // pred_check_branch
      %262 = sbr.rel (0) target = $region145
    $region144: #{rnn_energy_net_forward.1} parent=1 // pred_region
      %263 = dma.done [#allocation15], 16
    $region145: #{rnn_energy_net_forward.1} parent=1 // pred_fallthru
      _
    // Predicated region
    $region146: #{rnn_energy_net_forward.1} parent=1 // pred_check
      _
    $region147: #{rnn_energy_net_forward.1} parent=1 // pred_check_branch
      %265 = sbr.rel (0) target = $region149
    $region148: #{rnn_energy_net_forward.1} parent=1 // pred_region
      %266 = dma.done [#allocation18], 16
    $region149: #{rnn_energy_net_forward.1} parent=1 // pred_fallthru
      _
    // Predicated region
    $region150: #{rnn_energy_net_forward.1} parent=1 // pred_check
      _
    $region151: #{rnn_energy_net_forward.1} parent=1 // pred_check_branch
      %268 = sbr.rel (0) target = $region153
    $region152: #{rnn_energy_net_forward.1} parent=1 // pred_region
      %269 = dma.done [#allocation18], 16
    $region153: #{rnn_energy_net_forward.1} parent=1 // pred_fallthru
      _
    // Predicated region
    $region154: #{rnn_energy_net_forward.1} parent=1 // pred_check
      _
    $region155: #{rnn_energy_net_forward.1} parent=1 // pred_check_branch
      %271 = sbr.rel (0) target = $region157
    $region156: #{rnn_energy_net_forward.1} parent=1 // pred_region
      %272 = dma.done [#allocation21], 16
    $region157: #{rnn_energy_net_forward.1} parent=1 // pred_fallthru
      _
    // Predicated region
    $region158: #{rnn_energy_net_forward.1} parent=1 // pred_check
      _
    $region159: #{rnn_energy_net_forward.1} parent=1 // pred_check_branch
      %274 = sbr.rel (0) target = $region161
    $region160: #{rnn_energy_net_forward.1} parent=1 // pred_region
      %275 = dma.done [#allocation21], 16
    $region161: #{rnn_energy_net_forward.1} parent=1 // pred_fallthru
      _
    // Predicated region
    $region162: #{rnn_energy_net_forward.1} parent=1 // pred_check
      _
    $region163: #{rnn_energy_net_forward.1} parent=1 // pred_check_branch
      %277 = sbr.rel (0) target = $region165
    $region164: #{rnn_energy_net_forward.1} parent=1 // pred_region
      %278 = dma.done [#allocation24], 16
    $region165: #{rnn_energy_net_forward.1} parent=1 // pred_fallthru
      _
    // Predicated region
    $region166: #{rnn_energy_net_forward.1} parent=1 // pred_check
      _
    $region167: #{rnn_energy_net_forward.1} parent=1 // pred_check_branch
      %280 = sbr.rel (0) target = $region169
    $region168: #{rnn_energy_net_forward.1} parent=1 // pred_region
      %281 = dma.done [#allocation24], 16
    $region169: #{rnn_energy_net_forward.1} parent=1 // pred_fallthru
      _
    // Predicated region
    $region170: #{rnn_energy_net_forward.1} parent=1 // pred_check
      _
    $region171: #{rnn_energy_net_forward.1} parent=1 // pred_check_branch
      %283 = sbr.rel (0) target = $region173
    $region172: #{rnn_energy_net_forward.1} parent=1 // pred_region
      %284 = dma.done [#allocation27], 16
    $region173: #{rnn_energy_net_forward.1} parent=1 // pred_fallthru
      _
    // Predicated region
    $region174: #{rnn_energy_net_forward.1} parent=1 // pred_check
      _
    $region175: #{rnn_energy_net_forward.1} parent=1 // pred_check_branch
      %286 = sbr.rel (0) target = $region177
    $region176: #{rnn_energy_net_forward.1} parent=1 // pred_region
      %287 = dma.done [#allocation27], 16
    $region177: #{rnn_energy_net_forward.1} parent=1 // pred_fallthru
      _
    %v289 = vld [vmem:[#allocation2] sm:$0x1]
    %v290 = vld [vmem:[#allocation2 + $0x8] sm:$0x1]
    %v291 = vld [vmem:[#allocation2 + $0x10] sm:$0x1]
    %v292 = vld [vmem:[#allocation2 + $0x18] sm:$0x1]
    %v293 = vld [vmem:[#allocation2 + $0x20] sm:$0x1]
    %v294 = vld [vmem:[#allocation2 + $0x28] sm:$0x1]
    %v295 = vld [vmem:[#allocation2 + $0x30] sm:$0x1]
    %v296 = vld [vmem:[#allocation2 + $0x38] sm:$0x1]
    %v297 = vld [vmem:[#allocation2 + $0x1] sm:$0x1]
    %v298 = vld [vmem:[#allocation2 + $0x9] sm:$0x1]
    %v299 = vld [vmem:[#allocation2 + $0x11] sm:$0x1]
    %v300 = vld [vmem:[#allocation2 + $0x19] sm:$0x1]
    %v301 = vld [vmem:[#allocation2 + $0x21] sm:$0x1]
    %v302 = vld [vmem:[#allocation2 + $0x29] sm:$0x1]
    %v303 = vld [vmem:[#allocation2 + $0x31] sm:$0x1]
    %v304 = vld [vmem:[#allocation2 + $0x39] sm:$0x1]
    %v305 = vld [vmem:[#allocation2 + $0x2] sm:$0x1]
    %v306 = vld [vmem:[#allocation2 + $0xa] sm:$0x1]
    %v307 = vld [vmem:[#allocation2 + $0x12] sm:$0x1]
    %v308 = vld [vmem:[#allocation2 + $0x1a] sm:$0x1]
    %v309 = vld [vmem:[#allocation2 + $0x22] sm:$0x1]
    %v310 = vld [vmem:[#allocation2 + $0x2a] sm:$0x1]
    %v311 = vld [vmem:[#allocation2 + $0x32] sm:$0x1]
    %v312 = vld [vmem:[#allocation2 + $0x3a] sm:$0x1]
    %v313 = vld [vmem:[#allocation2 + $0x3] sm:$0x1]
    %v314 = vld [vmem:[#allocation2 + $0xb] sm:$0x1]
    %v315 = vld [vmem:[#allocation2 + $0x13] sm:$0x1]
    %v316 = vld [vmem:[#allocation2 + $0x1b] sm:$0x1]
    %v317 = vld [vmem:[#allocation2 + $0x23] sm:$0x1]
    %v318 = vld [vmem:[#allocation2 + $0x2b] sm:$0x1]
    %v319 = vld [vmem:[#allocation2 + $0x33] sm:$0x1]
    %v320 = vld [vmem:[#allocation2 + $0x3b] sm:$0x1]
    %v321 = vld [vmem:[#allocation2 + $0x4] sm:$0x1]
    %v322 = vld [vmem:[#allocation2 + $0xc] sm:$0x1]
    %v323 = vld [vmem:[#allocation2 + $0x14] sm:$0x1]
    %v324 = vld [vmem:[#allocation2 + $0x1c] sm:$0x1]
    %v325 = vld [vmem:[#allocation2 + $0x24] sm:$0x1]
    %v326 = vld [vmem:[#allocation2 + $0x2c] sm:$0x1]
    %v327 = vld [vmem:[#allocation2 + $0x34] sm:$0x1]
    %v328 = vld [vmem:[#allocation2 + $0x3c] sm:$0x1]
    %v329 = vld [vmem:[#allocation2 + $0x5] sm:$0x1]
    %v330 = vld [vmem:[#allocation2 + $0xd] sm:$0x1]
    %v331 = vld [vmem:[#allocation2 + $0x15] sm:$0x1]
    %v332 = vld [vmem:[#allocation2 + $0x1d] sm:$0x1]
    %v333 = vld [vmem:[#allocation2 + $0x25] sm:$0x1]
    %v334 = vld [vmem:[#allocation2 + $0x2d] sm:$0x1]
    %v335 = vld [vmem:[#allocation2 + $0x35] sm:$0x1]
    %v336 = vld [vmem:[#allocation2 + $0x3d] sm:$0x1]
    %v337 = vld [vmem:[#allocation2 + $0x6] sm:$0x1]
    %v338 = vld [vmem:[#allocation2 + $0xe] sm:$0x1]
    %v339 = vld [vmem:[#allocation2 + $0x16] sm:$0x1]
    %v340 = vld [vmem:[#allocation2 + $0x1e] sm:$0x1]
    %v341 = vld [vmem:[#allocation2 + $0x26] sm:$0x1]
    %v342 = vld [vmem:[#allocation2 + $0x2e] sm:$0x1]
    %v343 = vld [vmem:[#allocation2 + $0x36] sm:$0x1]
    %v344 = vld [vmem:[#allocation2 + $0x3e] sm:$0x1]
    %v345 = vld [vmem:[#allocation2 + $0x7] sm:$0x1]
    %v346 = vld [vmem:[#allocation2 + $0xf] sm:$0x1]
    %v347 = vld [vmem:[#allocation2 + $0x17] sm:$0x1]
    %v348 = vld [vmem:[#allocation2 + $0x1f] sm:$0x1]
    %v349 = vld [vmem:[#allocation2 + $0x27] sm:$0x1]
    %v350 = vld [vmem:[#allocation2 + $0x2f] sm:$0x1]
    %v351 = vld [vmem:[#allocation2 + $0x37] sm:$0x1]
    %v352 = vld [vmem:[#allocation2 + $0x3f] sm:$0x1]
    %v361 = vrot.slane %v290, 7
    %vm362 = vcmask 1041409
    %v363 = vsel %vm362, %v361, %v289
    %v364 = vrot.slane %v291, 6
    %vm365 = vcmask 1042434
    %v366 = vsel %vm365, %v364, %v363
    %v367 = vrot.slane %v292, 5
    %vm368 = vcmask 1043459
    %v369 = vsel %vm368, %v367, %v366
    %v370 = vrot.slane %v293, 4
    %vm371 = vcmask 1044484
    %v372 = vsel %vm371, %v370, %v369
    %v373 = vrot.slane %v294, 3
    %vm374 = vcmask 1045509
    %v375 = vsel %vm374, %v373, %v372
    %v376 = vrot.slane %v295, 2
    %vm377 = vcmask 1046534
    %v378 = vsel %vm377, %v376, %v375
    %v379 = vrot.slane %v296, 1
    %vm380 = vcmask 1047559
    %v381 = vsel %vm380, %v379, %v378
    %v391 = vrot.slane %v298, 7
    %v392 = vsel %vm362, %v391, %v297
    %v393 = vrot.slane %v299, 6
    %v394 = vsel %vm365, %v393, %v392
    %v395 = vrot.slane %v300, 5
    %v396 = vsel %vm368, %v395, %v394
    %v397 = vrot.slane %v301, 4
    %v398 = vsel %vm371, %v397, %v396
    %v399 = vrot.slane %v302, 3
    %v400 = vsel %vm374, %v399, %v398
    %v401 = vrot.slane %v303, 2
    %v402 = vsel %vm377, %v401, %v400
    %v403 = vrot.slane %v304, 1
    %v404 = vsel %vm380, %v403, %v402
    %v414 = vrot.slane %v306, 7
    %v415 = vsel %vm362, %v414, %v305
    %v416 = vrot.slane %v307, 6
    %v417 = vsel %vm365, %v416, %v415
    %v418 = vrot.slane %v308, 5
    %v419 = vsel %vm368, %v418, %v417
    %v420 = vrot.slane %v309, 4
    %v421 = vsel %vm371, %v420, %v419
    %v422 = vrot.slane %v310, 3
    %v423 = vsel %vm374, %v422, %v421
    %v424 = vrot.slane %v311, 2
    %v425 = vsel %vm377, %v424, %v423
    %v426 = vrot.slane %v312, 1
    %v427 = vsel %vm380, %v426, %v425
    %v437 = vrot.slane %v314, 7
    %v438 = vsel %vm362, %v437, %v313
    %v439 = vrot.slane %v315, 6
    %v440 = vsel %vm365, %v439, %v438
    %v441 = vrot.slane %v316, 5
    %v442 = vsel %vm368, %v441, %v440
    %v443 = vrot.slane %v317, 4
    %v444 = vsel %vm371, %v443, %v442
    %v445 = vrot.slane %v318, 3
    %v446 = vsel %vm374, %v445, %v444
    %v447 = vrot.slane %v319, 2
    %v448 = vsel %vm377, %v447, %v446
    %v449 = vrot.slane %v320, 1
    %v450 = vsel %vm380, %v449, %v448
    %v460 = vrot.slane %v322, 7
    %v461 = vsel %vm362, %v460, %v321
    %v462 = vrot.slane %v323, 6
    %v463 = vsel %vm365, %v462, %v461
    %v464 = vrot.slane %v324, 5
    %v465 = vsel %vm368, %v464, %v463
    %v466 = vrot.slane %v325, 4
    %v467 = vsel %vm371, %v466, %v465
    %v468 = vrot.slane %v326, 3
    %v469 = vsel %vm374, %v468, %v467
    %v470 = vrot.slane %v327, 2
    %v471 = vsel %vm377, %v470, %v469
    %v472 = vrot.slane %v328, 1
    %v473 = vsel %vm380, %v472, %v471
    %v483 = vrot.slane %v330, 7
    %v484 = vsel %vm362, %v483, %v329
    %v485 = vrot.slane %v331, 6
    %v486 = vsel %vm365, %v485, %v484
    %v487 = vrot.slane %v332, 5
    %v488 = vsel %vm368, %v487, %v486
    %v489 = vrot.slane %v333, 4
    %v490 = vsel %vm371, %v489, %v488
    %v491 = vrot.slane %v334, 3
    %v492 = vsel %vm374, %v491, %v490
    %v493 = vrot.slane %v335, 2
    %v494 = vsel %vm377, %v493, %v492
    %v495 = vrot.slane %v336, 1
    %v496 = vsel %vm380, %v495, %v494
    %v506 = vrot.slane %v338, 7
    %v507 = vsel %vm362, %v506, %v337
    %v508 = vrot.slane %v339, 6
    %v509 = vsel %vm365, %v508, %v507
    %v510 = vrot.slane %v340, 5
    %v511 = vsel %vm368, %v510, %v509
    %v512 = vrot.slane %v341, 4
    %v513 = vsel %vm371, %v512, %v511
    %v514 = vrot.slane %v342, 3
    %v515 = vsel %vm374, %v514, %v513
    %v516 = vrot.slane %v343, 2
    %v517 = vsel %vm377, %v516, %v515
    %v518 = vrot.slane %v344, 1
    %v519 = vsel %vm380, %v518, %v517
    %v529 = vrot.slane %v346, 7
    %v530 = vsel %vm362, %v529, %v345
    %v531 = vrot.slane %v347, 6
    %v532 = vsel %vm365, %v531, %v530
    %v533 = vrot.slane %v348, 5
    %v534 = vsel %vm368, %v533, %v532
    %v535 = vrot.slane %v349, 4
    %v536 = vsel %vm371, %v535, %v534
    %v537 = vrot.slane %v350, 3
    %v538 = vsel %vm374, %v537, %v536
    %v539 = vrot.slane %v351, 2
    %v540 = vsel %vm377, %v539, %v538
    %v541 = vrot.slane %v352, 1
    %v542 = vsel %vm380, %v541, %v540
    %v544 = vpack.c.bf16 %v404, %v381
    %v545 = vpack.c.bf16 %v450, %v427
    %v546 = vpack.c.bf16 %v496, %v473
    %v547 = vpack.c.bf16 %v542, %v519
    %v548 = vld [vmem:[%s1] sm:$0xf]
    %v549 = vld [vmem:[%s1 + $0x4] sm:$0xf]
    %v550 = vld [vmem:[#allocation5] sm:$0x1]
    %v552 = vlaneseq
    %v553 = vshrl.u32 %v552, 7
    %v554 = vsub.s32 0, %v553
    %v555 = vrot.slane %v550, %v554
    %v559 = vunpack.c.l.b16 %v548
    %v560 = vunpack.c.l.b16 %v549
    %v561 = vpack.c.b16 %v560, %v559
    %vm563 = vcmask 130048
    %v565 = vsel %vm563, %v544, 0
    %v568 = vsel %vm563, %v545, 0
    %v571 = vsel %vm563, %v546, 0
    %v574 = vsel %vm563, %v547, 0
    %576 = vmatprep.subr.bf16.mxu0 0
    %577 = vmatpush1.bf16.msra.mxu0 %v561
    %578 = vmatprep.subr.bf16.mxu0 0
    %579 = vmatpush1.bf16.msra.mxu0 0
    %580 = vmatprep.subr.bf16.mxu0 0
    %581 = vmatpush1.bf16.msra.mxu0 0
    %582 = vmatprep.subr.bf16.mxu0 0
    %583 = vmatpush1.bf16.msra.mxu0 0
    %584 = vmatprep.subr.bf16.mxu0 0
    %585 = vmatpush1.bf16.msra.mxu0 0
    %586 = vmatprep.subr.bf16.mxu0 0
    %587 = vmatpush1.bf16.msra.mxu0 0
    %588 = vmatprep.subr.bf16.mxu0 0
    %589 = vmatpush1.bf16.msra.mxu0 0
    %590 = vmatprep.subr.bf16.mxu0 0
    %591 = vmatpush1.bf16.msra.mxu0 0
    %592 = vmatprep.subr.bf16.mxu0 0
    %593 = vmatpush1.bf16.msra.mxu0 0
    %594 = vmatprep.subr.bf16.mxu0 0
    %595 = vmatpush1.bf16.msra.mxu0 0
    %596 = vmatprep.subr.bf16.mxu0 0
    %597 = vmatpush1.bf16.msra.mxu0 0
    %598 = vmatprep.subr.bf16.mxu0 0
    %599 = vmatpush1.bf16.msra.mxu0 0
    %600 = vmatprep.subr.bf16.mxu0 0
    %601 = vmatpush1.bf16.msra.mxu0 0
    %602 = vmatprep.subr.bf16.mxu0 0
    %603 = vmatpush1.bf16.msra.mxu0 0
    %604 = vmatprep.subr.bf16.mxu0 0
    %605 = vmatpush1.bf16.msra.mxu0 0
    %606 = vmatprep.subr.bf16.mxu0 0
    %607 = vmatpush1.bf16.msra.mxu0 0
    %608 = vmatprep.mubr.bf16.mxu0 0
    %609 = vmatmul.mubr.bf16.gmra.mrb[0].mxu0 %v565
    %v610 = vpop.f32.mrb[0].mxu0
    %v611 = vadd.f32 %v555, %v610
    %v612 = vpop.f32.mrb[0].mxu0
    %v613 = vpop.f32.mrb[0].mxu0
    %v614 = vadd.f32 %v555, %v613
    %v615 = vpop.f32.mrb[0].mxu0
    %616 = vmatprep.mubr.bf16.mxu0 0
    %617 = vmatmul.mubr.bf16.gmra.mrb[0].mxu0 %v568
    %v618 = vpop.f32.mrb[0].mxu0
    %v619 = vadd.f32 %v555, %v618
    %v620 = vpop.f32.mrb[0].mxu0
    %v621 = vpop.f32.mrb[0].mxu0
    %v622 = vadd.f32 %v555, %v621
    %v623 = vpop.f32.mrb[0].mxu0
    %624 = vmatprep.mubr.bf16.mxu0 0
    %625 = vmatmul.mubr.bf16.gmra.mrb[0].mxu0 %v571
    %v626 = vpop.f32.mrb[0].mxu0
    %v627 = vadd.f32 %v555, %v626
    %v628 = vpop.f32.mrb[0].mxu0
    %v629 = vpop.f32.mrb[0].mxu0
    %v630 = vadd.f32 %v555, %v629
    %v631 = vpop.f32.mrb[0].mxu0
    %632 = vmatprep.mubr.bf16.mxu0 0
    %633 = vmatmul.mubr.bf16.gmra.mrb[0].mxu0 %v574
    %v634 = vpop.f32.mrb[0].mxu0
    %v635 = vadd.f32 %v555, %v634
    %v636 = vpop.f32.mrb[0].mxu0
    %v637 = vpop.f32.mrb[0].mxu0
    %v638 = vadd.f32 %v555, %v637
    %v639 = vpop.f32.mrb[0].mxu0
    %640 = vdwg.mxu0
    %v641 = vld [vmem:[%s2] sm:$0xf]
    %v642 = vld [vmem:[%s2 + $0x4] sm:$0xf]
    %v643 = vld [vmem:[#allocation7] sm:$0x1]
    %v645 = vlaneseq
    %v646 = vshrl.u32 %v645, 7
    %v647 = vsub.s32 0, %v646
    %v648 = vrot.slane %v643, %v647
    %v652 = vunpack.c.l.b16 %v641
    %v653 = vunpack.c.l.b16 %v642
    %v654 = vpack.c.b16 %v653, %v652
    %656 = vmatprep.subr.bf16.mxu0 0
    %657 = vmatpush1.bf16.msra.mxu0 %v654
    %658 = vmatprep.subr.bf16.mxu0 0
    %659 = vmatpush1.bf16.msra.mxu0 0
    %660 = vmatprep.subr.bf16.mxu0 0
    %661 = vmatpush1.bf16.msra.mxu0 0
    %662 = vmatprep.subr.bf16.mxu0 0
    %663 = vmatpush1.bf16.msra.mxu0 0
    %664 = vmatprep.subr.bf16.mxu0 0
    %665 = vmatpush1.bf16.msra.mxu0 0
    %666 = vmatprep.subr.bf16.mxu0 0
    %667 = vmatpush1.bf16.msra.mxu0 0
    %668 = vmatprep.subr.bf16.mxu0 0
    %669 = vmatpush1.bf16.msra.mxu0 0
    %670 = vmatprep.subr.bf16.mxu0 0
    %671 = vmatpush1.bf16.msra.mxu0 0
    %672 = vmatprep.subr.bf16.mxu0 0
    %673 = vmatpush1.bf16.msra.mxu0 0
    %674 = vmatprep.subr.bf16.mxu0 0
    %675 = vmatpush1.bf16.msra.mxu0 0
    %676 = vmatprep.subr.bf16.mxu0 0
    %677 = vmatpush1.bf16.msra.mxu0 0
    %678 = vmatprep.subr.bf16.mxu0 0
    %679 = vmatpush1.bf16.msra.mxu0 0
    %680 = vmatprep.subr.bf16.mxu0 0
    %681 = vmatpush1.bf16.msra.mxu0 0
    %682 = vmatprep.subr.bf16.mxu0 0
    %683 = vmatpush1.bf16.msra.mxu0 0
    %684 = vmatprep.subr.bf16.mxu0 0
    %685 = vmatpush1.bf16.msra.mxu0 0
    %686 = vmatprep.subr.bf16.mxu0 0
    %687 = vmatpush1.bf16.msra.mxu0 0
    %688 = vmatprep.mubr.bf16.mxu0 0
    %689 = vmatmul.mubr.bf16.gmra.mrb[0].mxu0 %v565
    %v690 = vpop.f32.mrb[0].mxu0
    %v691 = vadd.f32 %v648, %v690
    %v692 = vpop.f32.mrb[0].mxu0
    %v693 = vpop.f32.mrb[0].mxu0
    %v694 = vadd.f32 %v648, %v693
    %v695 = vpop.f32.mrb[0].mxu0
    %696 = vmatprep.mubr.bf16.mxu0 0
    %697 = vmatmul.mubr.bf16.gmra.mrb[0].mxu0 %v568
    %v698 = vpop.f32.mrb[0].mxu0
    %v699 = vadd.f32 %v648, %v698
    %v700 = vpop.f32.mrb[0].mxu0
    %v701 = vpop.f32.mrb[0].mxu0
    %v702 = vadd.f32 %v648, %v701
    %v703 = vpop.f32.mrb[0].mxu0
    %704 = vmatprep.mubr.bf16.mxu0 0
    %705 = vmatmul.mubr.bf16.gmra.mrb[0].mxu0 %v571
    %v706 = vpop.f32.mrb[0].mxu0
    %v707 = vadd.f32 %v648, %v706
    %v708 = vpop.f32.mrb[0].mxu0
    %v709 = vpop.f32.mrb[0].mxu0
    %v710 = vadd.f32 %v648, %v709
    %v711 = vpop.f32.mrb[0].mxu0
    %712 = vmatprep.mubr.bf16.mxu0 0
    %713 = vmatmul.mubr.bf16.gmra.mrb[0].mxu0 %v574
    %v714 = vpop.f32.mrb[0].mxu0
    %v715 = vadd.f32 %v648, %v714
    %v716 = vpop.f32.mrb[0].mxu0
    %v717 = vpop.f32.mrb[0].mxu0
    %v718 = vadd.f32 %v648, %v717
    %v719 = vpop.f32.mrb[0].mxu0
    %720 = vdwg.mxu0
    %v721 = vld [vmem:[%s3] sm:$0xf]
    %v722 = vld [vmem:[%s3 + $0x4] sm:$0xf]
    %v723 = vld [vmem:[#allocation8] sm:$0x1]
    %v725 = vlaneseq
    %v726 = vshrl.u32 %v725, 7
    %v727 = vsub.s32 0, %v726
    %v728 = vrot.slane %v723, %v727
    %v732 = vunpack.c.l.b16 %v721
    %v733 = vunpack.c.l.b16 %v722
    %v734 = vpack.c.b16 %v733, %v732
    %736 = vmatprep.subr.bf16.mxu0 0
    %737 = vmatpush1.bf16.msra.mxu0 %v734
    %738 = vmatprep.subr.bf16.mxu0 0
    %739 = vmatpush1.bf16.msra.mxu0 0
    %740 = vmatprep.subr.bf16.mxu0 0
    %741 = vmatpush1.bf16.msra.mxu0 0
    %742 = vmatprep.subr.bf16.mxu0 0
    %743 = vmatpush1.bf16.msra.mxu0 0
    %744 = vmatprep.subr.bf16.mxu0 0
    %745 = vmatpush1.bf16.msra.mxu0 0
    %746 = vmatprep.subr.bf16.mxu0 0
    %747 = vmatpush1.bf16.msra.mxu0 0
    %748 = vmatprep.subr.bf16.mxu0 0
    %749 = vmatpush1.bf16.msra.mxu0 0
    %750 = vmatprep.subr.bf16.mxu0 0
    %751 = vmatpush1.bf16.msra.mxu0 0
    %752 = vmatprep.subr.bf16.mxu0 0
    %753 = vmatpush1.bf16.msra.mxu0 0
    %754 = vmatprep.subr.bf16.mxu0 0
    %755 = vmatpush1.bf16.msra.mxu0 0
    %756 = vmatprep.subr.bf16.mxu0 0
    %757 = vmatpush1.bf16.msra.mxu0 0
    %758 = vmatprep.subr.bf16.mxu0 0
    %759 = vmatpush1.bf16.msra.mxu0 0
    %760 = vmatprep.subr.bf16.mxu0 0
    %761 = vmatpush1.bf16.msra.mxu0 0
    %762 = vmatprep.subr.bf16.mxu0 0
    %763 = vmatpush1.bf16.msra.mxu0 0
    %764 = vmatprep.subr.bf16.mxu0 0
    %765 = vmatpush1.bf16.msra.mxu0 0
    %766 = vmatprep.subr.bf16.mxu0 0
    %767 = vmatpush1.bf16.msra.mxu0 0
    %768 = vmatprep.mubr.bf16.mxu0 0
    %769 = vmatmul.mubr.bf16.gmra.mrb[0].mxu0 %v565
    %v770 = vpop.f32.mrb[0].mxu0
    %v771 = vadd.f32 %v728, %v770
    %v772 = vpop.f32.mrb[0].mxu0
    %v773 = vpop.f32.mrb[0].mxu0
    %v774 = vadd.f32 %v728, %v773
    %v775 = vpop.f32.mrb[0].mxu0
    %776 = vmatprep.mubr.bf16.mxu0 0
    %777 = vmatmul.mubr.bf16.gmra.mrb[0].mxu0 %v568
    %v778 = vpop.f32.mrb[0].mxu0
    %v779 = vadd.f32 %v728, %v778
    %v780 = vpop.f32.mrb[0].mxu0
    %v781 = vpop.f32.mrb[0].mxu0
    %v782 = vadd.f32 %v728, %v781
    %v783 = vpop.f32.mrb[0].mxu0
    %784 = vmatprep.mubr.bf16.mxu0 0
    %785 = vmatmul.mubr.bf16.gmra.mrb[0].mxu0 %v571
    %v786 = vpop.f32.mrb[0].mxu0
    %v787 = vadd.f32 %v728, %v786
    %v788 = vpop.f32.mrb[0].mxu0
    %v789 = vpop.f32.mrb[0].mxu0
    %v790 = vadd.f32 %v728, %v789
    %v791 = vpop.f32.mrb[0].mxu0
    %792 = vmatprep.mubr.bf16.mxu0 0
    %793 = vmatmul.mubr.bf16.gmra.mrb[0].mxu0 %v574
    %v794 = vpop.f32.mrb[0].mxu0
    %v795 = vadd.f32 %v728, %v794
    %v796 = vpop.f32.mrb[0].mxu0
    %v797 = vpop.f32.mrb[0].mxu0
    %v798 = vadd.f32 %v728, %v797
    %v799 = vpop.f32.mrb[0].mxu0
    %800 = vdwg.mxu0
    %v801 = vld [vmem:[%s8] sm:$0xf]
    %v802 = vld [vmem:[%s8 + $0x4] sm:$0xf]
    %v803 = vld [vmem:[%s8 + $0x8] sm:$0xf]
    %v804 = vld [vmem:[%s8 + $0xc] sm:$0xf]
    %v805 = vld [vmem:[%s9] sm:$0xf]
    %v806 = vld [vmem:[%s9 + $0x4] sm:$0xf]
    %v807 = vld [vmem:[%s9 + $0x8] sm:$0xf]
    %v808 = vld [vmem:[%s9 + $0xc] sm:$0xf]
    %v809 = vld [vmem:[%s10] sm:$0xf]
    %v810 = vld [vmem:[%s10 + $0x4] sm:$0xf]
    %v811 = vld [vmem:[%s10 + $0x8] sm:$0xf]
    %v812 = vld [vmem:[%s10 + $0xc] sm:$0xf]
    %v813 = vld [vmem:[#allocation10] sm:$0x1]
    %v818 = vunpack.c.l.b16 %v801
    %v819 = vunpack.c.l.b16 %v802
    %v820 = vunpack.c.l.b16 %v803
    %v821 = vunpack.c.l.b16 %v804
    %v822 = vpack.c.b16 %v819, %v818
    %v823 = vpack.c.b16 %v821, %v820
    %vm826 = vcmask 261120
    %v828 = vsel %vm826, 0, 0
    %830 = vmatprep.subr.bf16.mxu0 0
    %831 = vmatpush1.bf16.msra.mxu0 %v822
    %832 = vmatprep.subr.bf16.mxu0 0
    %833 = vmatpush1.bf16.msra.mxu0 %v823
    %834 = vmatprep.subr.bf16.mxu0 0
    %835 = vmatpush1.bf16.msra.mxu0 0
    %836 = vmatprep.subr.bf16.mxu0 0
    %837 = vmatpush1.bf16.msra.mxu0 0
    %838 = vmatprep.subr.bf16.mxu0 0
    %839 = vmatpush1.bf16.msra.mxu0 0
    %840 = vmatprep.subr.bf16.mxu0 0
    %841 = vmatpush1.bf16.msra.mxu0 0
    %842 = vmatprep.subr.bf16.mxu0 0
    %843 = vmatpush1.bf16.msra.mxu0 0
    %844 = vmatprep.subr.bf16.mxu0 0
    %845 = vmatpush1.bf16.msra.mxu0 0
    %846 = vmatprep.subr.bf16.mxu0 0
    %847 = vmatpush1.bf16.msra.mxu0 0
    %848 = vmatprep.subr.bf16.mxu0 0
    %849 = vmatpush1.bf16.msra.mxu0 0
    %850 = vmatprep.subr.bf16.mxu0 0
    %851 = vmatpush1.bf16.msra.mxu0 0
    %852 = vmatprep.subr.bf16.mxu0 0
    %853 = vmatpush1.bf16.msra.mxu0 0
    %854 = vmatprep.subr.bf16.mxu0 0
    %855 = vmatpush1.bf16.msra.mxu0 0
    %856 = vmatprep.subr.bf16.mxu0 0
    %857 = vmatpush1.bf16.msra.mxu0 0
    %858 = vmatprep.subr.bf16.mxu0 0
    %859 = vmatpush1.bf16.msra.mxu0 0
    %860 = vmatprep.subr.bf16.mxu0 0
    %861 = vmatpush1.bf16.msra.mxu0 0
    %862 = vmatprep.mubr.bf16.mxu0 0
    %863 = vmatmul.mubr.bf16.gmra.mrb[0].mxu0 %v828
    %v864 = vpop.f32.mrb[0].mxu0
    %v865 = vadd.f32 0.0, %v864
    %v866 = vpop.f32.mrb[0].mxu0
    %v867 = vpop.f32.mrb[0].mxu0
    %v868 = vpop.f32.mrb[0].mxu0
    %869 = vdwg.mxu0
    %v874 = vunpack.c.l.b16 %v805
    %v875 = vunpack.c.l.b16 %v806
    %v876 = vunpack.c.l.b16 %v807
    %v877 = vunpack.c.l.b16 %v808
    %v878 = vpack.c.b16 %v875, %v874
    %v879 = vpack.c.b16 %v877, %v876
    %882 = vmatprep.subr.bf16.mxu0 0
    %883 = vmatpush1.bf16.msra.mxu0 %v878
    %884 = vmatprep.subr.bf16.mxu0 0
    %885 = vmatpush1.bf16.msra.mxu0 %v879
    %886 = vmatprep.subr.bf16.mxu0 0
    %887 = vmatpush1.bf16.msra.mxu0 0
    %888 = vmatprep.subr.bf16.mxu0 0
    %889 = vmatpush1.bf16.msra.mxu0 0
    %890 = vmatprep.subr.bf16.mxu0 0
    %891 = vmatpush1.bf16.msra.mxu0 0
    %892 = vmatprep.subr.bf16.mxu0 0
    %893 = vmatpush1.bf16.msra.mxu0 0
    %894 = vmatprep.subr.bf16.mxu0 0
    %895 = vmatpush1.bf16.msra.mxu0 0
    %896 = vmatprep.subr.bf16.mxu0 0
    %897 = vmatpush1.bf16.msra.mxu0 0
    %898 = vmatprep.subr.bf16.mxu0 0
    %899 = vmatpush1.bf16.msra.mxu0 0
    %900 = vmatprep.subr.bf16.mxu0 0
    %901 = vmatpush1.bf16.msra.mxu0 0
    %902 = vmatprep.subr.bf16.mxu0 0
    %903 = vmatpush1.bf16.msra.mxu0 0
    %904 = vmatprep.subr.bf16.mxu0 0
    %905 = vmatpush1.bf16.msra.mxu0 0
    %906 = vmatprep.subr.bf16.mxu0 0
    %907 = vmatpush1.bf16.msra.mxu0 0
    %908 = vmatprep.subr.bf16.mxu0 0
    %909 = vmatpush1.bf16.msra.mxu0 0
    %910 = vmatprep.subr.bf16.mxu0 0
    %911 = vmatpush1.bf16.msra.mxu0 0
    %912 = vmatprep.subr.bf16.mxu0 0
    %913 = vmatpush1.bf16.msra.mxu0 0
    %914 = vmatprep.mubr.bf16.mxu0 0
    %915 = vmatmul.mubr.bf16.gmra.mrb[0].mxu0 %v828
    %v916 = vpop.f32.mrb[0].mxu0
    %v917 = vadd.f32 0.0, %v916
    %v918 = vpop.f32.mrb[0].mxu0
    %v919 = vpop.f32.mrb[0].mxu0
    %v920 = vpop.f32.mrb[0].mxu0
    %921 = vdwg.mxu0
    %v922 = vadd.f32 %v611, %v865
    %v923 = vxor.u32 %v922, 2147483648
    %v924 = vmul.f32 %v923, 1.442695
    %v925 = vpow.pop %v924
    %v926 = vadd.f32 %v925, 1.0
    %v927 = vrcp.pop %v926
    %v928 = vmul.f32 1.0, %v927
    %v929 = vadd.f32 %v691, %v917
    %v930 = vxor.u32 %v929, 2147483648
    %v931 = vmul.f32 %v930, 1.442695
    %v932 = vpow.pop %v931
    %v933 = vadd.f32 %v932, 1.0
    %v934 = vrcp.pop %v933
    %v935 = vmul.f32 1.0, %v934
    %v937 = vlaneseq
    %v938 = vshrl.u32 %v937, 7
    %v939 = vsub.s32 0, %v938
    %v940 = vrot.slane %v813, %v939
    %v946 = vunpack.c.l.b16 %v809
    %v947 = vunpack.c.l.b16 %v810
    %v948 = vunpack.c.l.b16 %v811
    %v949 = vunpack.c.l.b16 %v812
    %v950 = vpack.c.b16 %v947, %v946
    %v951 = vpack.c.b16 %v949, %v948
    %954 = vmatprep.subr.bf16.mxu0 0
    %955 = vmatpush1.bf16.msra.mxu0 %v950
    %956 = vmatprep.subr.bf16.mxu0 0
    %957 = vmatpush1.bf16.msra.mxu0 %v951
    %958 = vmatprep.subr.bf16.mxu0 0
    %959 = vmatpush1.bf16.msra.mxu0 0
    %960 = vmatprep.subr.bf16.mxu0 0
    %961 = vmatpush1.bf16.msra.mxu0 0
    %962 = vmatprep.subr.bf16.mxu0 0
    %963 = vmatpush1.bf16.msra.mxu0 0
    %964 = vmatprep.subr.bf16.mxu0 0
    %965 = vmatpush1.bf16.msra.mxu0 0
    %966 = vmatprep.subr.bf16.mxu0 0
    %967 = vmatpush1.bf16.msra.mxu0 0
    %968 = vmatprep.subr.bf16.mxu0 0
    %969 = vmatpush1.bf16.msra.mxu0 0
    %970 = vmatprep.subr.bf16.mxu0 0
    %971 = vmatpush1.bf16.msra.mxu0 0
    %972 = vmatprep.subr.bf16.mxu0 0
    %973 = vmatpush1.bf16.msra.mxu0 0
    %974 = vmatprep.subr.bf16.mxu0 0
    %975 = vmatpush1.bf16.msra.mxu0 0
    %976 = vmatprep.subr.bf16.mxu0 0
    %977 = vmatpush1.bf16.msra.mxu0 0
    %978 = vmatprep.subr.bf16.mxu0 0
    %979 = vmatpush1.bf16.msra.mxu0 0
    %980 = vmatprep.subr.bf16.mxu0 0
    %981 = vmatpush1.bf16.msra.mxu0 0
    %982 = vmatprep.subr.bf16.mxu0 0
    %983 = vmatpush1.bf16.msra.mxu0 0
    %984 = vmatprep.subr.bf16.mxu0 0
    %985 = vmatpush1.bf16.msra.mxu0 0
    %986 = vmatprep.mubr.bf16.mxu0 0
    %987 = vmatmul.mubr.bf16.gmra.mrb[0].mxu0 %v828
    %v988 = vpop.f32.mrb[0].mxu0
    %v989 = vadd.f32 %v940, %v988
    %v990 = vpop.f32.mrb[0].mxu0
    %v991 = vpop.f32.mrb[0].mxu0
    %v992 = vpop.f32.mrb[0].mxu0
    %993 = vdwg.mxu0
    %v994 = vmul.f32 %v928, %v989
    %v995 = vadd.f32 %v771, %v994
    %v996 = vtanh.pop %v995
    %v997 = vsub.f32 0.0, %v996
    %v998 = vmul.f32 %v935, %v997
    %v999 = vadd.f32 %v996, %v998
    %v1000 = vpack.c.bf16 %v999, %v999
    %v1002 = vsel %vm826, %v1000, 0
    %1004 = vmatprep.subr.bf16.mxu0 0
    %1005 = vmatpush1.bf16.msra.mxu0 %v822
    %1006 = vmatprep.subr.bf16.mxu0 0
    %1007 = vmatpush1.bf16.msra.mxu0 %v823
    %1008 = vmatprep.subr.bf16.mxu0 0
    %1009 = vmatpush1.bf16.msra.mxu0 0
    %1010 = vmatprep.subr.bf16.mxu0 0
    %1011 = vmatpush1.bf16.msra.mxu0 0
    %1012 = vmatprep.subr.bf16.mxu0 0
    %1013 = vmatpush1.bf16.msra.mxu0 0
    %1014 = vmatprep.subr.bf16.mxu0 0
    %1015 = vmatpush1.bf16.msra.mxu0 0
    %1016 = vmatprep.subr.bf16.mxu0 0
    %1017 = vmatpush1.bf16.msra.mxu0 0
    %1018 = vmatprep.subr.bf16.mxu0 0
    %1019 = vmatpush1.bf16.msra.mxu0 0
    %1020 = vmatprep.subr.bf16.mxu0 0
    %1021 = vmatpush1.bf16.msra.mxu0 0
    %1022 = vmatprep.subr.bf16.mxu0 0
    %1023 = vmatpush1.bf16.msra.mxu0 0
    %1024 = vmatprep.subr.bf16.mxu0 0
    %1025 = vmatpush1.bf16.msra.mxu0 0
    %1026 = vmatprep.subr.bf16.mxu0 0
    %1027 = vmatpush1.bf16.msra.mxu0 0
    %1028 = vmatprep.subr.bf16.mxu0 0
    %1029 = vmatpush1.bf16.msra.mxu0 0
    %1030 = vmatprep.subr.bf16.mxu0 0
    %1031 = vmatpush1.bf16.msra.mxu0 0
    %1032 = vmatprep.subr.bf16.mxu0 0
    %1033 = vmatpush1.bf16.msra.mxu0 0
    %1034 = vmatprep.subr.bf16.mxu0 0
    %1035 = vmatpush1.bf16.msra.mxu0 0
    %1036 = vmatprep.mubr.bf16.mxu0 0
    %1037 = vmatmul.mubr.bf16.gmra.mrb[0].mxu0 %v1002
    %v1038 = vpop.f32.mrb[0].mxu0
    %v1039 = vadd.f32 0.0, %v1038
    %v1040 = vpop.f32.mrb[0].mxu0
    %v1041 = vpop.f32.mrb[0].mxu0
    %v1042 = vpop.f32.mrb[0].mxu0
    %1043 = vdwg.mxu0
    %1044 = vmatprep.subr.bf16.mxu0 0
    %1045 = vmatpush1.bf16.msra.mxu0 %v878
    %1046 = vmatprep.subr.bf16.mxu0 0
    %1047 = vmatpush1.bf16.msra.mxu0 %v879
    %1048 = vmatprep.subr.bf16.mxu0 0
    %1049 = vmatpush1.bf16.msra.mxu0 0
    %1050 = vmatprep.subr.bf16.mxu0 0
    %1051 = vmatpush1.bf16.msra.mxu0 0
    %1052 = vmatprep.subr.bf16.mxu0 0
    %1053 = vmatpush1.bf16.msra.mxu0 0
    %1054 = vmatprep.subr.bf16.mxu0 0
    %1055 = vmatpush1.bf16.msra.mxu0 0
    %1056 = vmatprep.subr.bf16.mxu0 0
    %1057 = vmatpush1.bf16.msra.mxu0 0
    %1058 = vmatprep.subr.bf16.mxu0 0
    %1059 = vmatpush1.bf16.msra.mxu0 0
    %1060 = vmatprep.subr.bf16.mxu0 0
    %1061 = vmatpush1.bf16.msra.mxu0 0
    %1062 = vmatprep.subr.bf16.mxu0 0
    %1063 = vmatpush1.bf16.msra.mxu0 0
    %1064 = vmatprep.subr.bf16.mxu0 0
    %1065 = vmatpush1.bf16.msra.mxu0 0
    %1066 = vmatprep.subr.bf16.mxu0 0
    %1067 = vmatpush1.bf16.msra.mxu0 0
    %1068 = vmatprep.subr.bf16.mxu0 0
    %1069 = vmatpush1.bf16.msra.mxu0 0
    %1070 = vmatprep.subr.bf16.mxu0 0
    %1071 = vmatpush1.bf16.msra.mxu0 0
    %1072 = vmatprep.subr.bf16.mxu0 0
    %1073 = vmatpush1.bf16.msra.mxu0 0
    %1074 = vmatprep.subr.bf16.mxu0 0
    %1075 = vmatpush1.bf16.msra.mxu0 0
    %1076 = vmatprep.mubr.bf16.mxu0 0
    %1077 = vmatmul.mubr.bf16.gmra.mrb[0].mxu0 %v1002
    %v1078 = vpop.f32.mrb[0].mxu0
    %v1079 = vadd.f32 0.0, %v1078
    %v1080 = vpop.f32.mrb[0].mxu0
    %v1081 = vpop.f32.mrb[0].mxu0
    %v1082 = vpop.f32.mrb[0].mxu0
    %1083 = vdwg.mxu0
    %v1084 = vadd.f32 %v614, %v1039
    %v1085 = vxor.u32 %v1084, 2147483648
    %v1086 = vmul.f32 %v1085, 1.442695
    %v1087 = vpow.pop %v1086
    %v1088 = vadd.f32 %v1087, 1.0
    %v1089 = vrcp.pop %v1088
    %v1090 = vmul.f32 1.0, %v1089
    %v1091 = vadd.f32 %v694, %v1079
    %v1092 = vxor.u32 %v1091, 2147483648
    %v1093 = vmul.f32 %v1092, 1.442695
    %v1094 = vpow.pop %v1093
    %v1095 = vadd.f32 %v1094, 1.0
    %v1096 = vrcp.pop %v1095
    %v1097 = vmul.f32 1.0, %v1096
    %1098 = vmatprep.subr.bf16.mxu0 0
    %1099 = vmatpush1.bf16.msra.mxu0 %v950
    %1100 = vmatprep.subr.bf16.mxu0 0
    %1101 = vmatpush1.bf16.msra.mxu0 %v951
    %1102 = vmatprep.subr.bf16.mxu0 0
    %1103 = vmatpush1.bf16.msra.mxu0 0
    %1104 = vmatprep.subr.bf16.mxu0 0
    %1105 = vmatpush1.bf16.msra.mxu0 0
    %1106 = vmatprep.subr.bf16.mxu0 0
    %1107 = vmatpush1.bf16.msra.mxu0 0
    %1108 = vmatprep.subr.bf16.mxu0 0
    %1109 = vmatpush1.bf16.msra.mxu0 0
    %1110 = vmatprep.subr.bf16.mxu0 0
    %1111 = vmatpush1.bf16.msra.mxu0 0
    %1112 = vmatprep.subr.bf16.mxu0 0
    %1113 = vmatpush1.bf16.msra.mxu0 0
    %1114 = vmatprep.subr.bf16.mxu0 0
    %1115 = vmatpush1.bf16.msra.mxu0 0
    %1116 = vmatprep.subr.bf16.mxu0 0
    %1117 = vmatpush1.bf16.msra.mxu0 0
    %1118 = vmatprep.subr.bf16.mxu0 0
    %1119 = vmatpush1.bf16.msra.mxu0 0
    %1120 = vmatprep.subr.bf16.mxu0 0
    %1121 = vmatpush1.bf16.msra.mxu0 0
    %1122 = vmatprep.subr.bf16.mxu0 0
    %1123 = vmatpush1.bf16.msra.mxu0 0
    %1124 = vmatprep.subr.bf16.mxu0 0
    %1125 = vmatpush1.bf16.msra.mxu0 0
    %1126 = vmatprep.subr.bf16.mxu0 0
    %1127 = vmatpush1.bf16.msra.mxu0 0
    %1128 = vmatprep.subr.bf16.mxu0 0
    %1129 = vmatpush1.bf16.msra.mxu0 0
    %1130 = vmatprep.mubr.bf16.mxu0 0
    %1131 = vmatmul.mubr.bf16.gmra.mrb[0].mxu0 %v1002
    %v1132 = vpop.f32.mrb[0].mxu0
    %v1133 = vadd.f32 %v940, %v1132
    %v1134 = vpop.f32.mrb[0].mxu0
    %v1135 = vpop.f32.mrb[0].mxu0
    %v1136 = vpop.f32.mrb[0].mxu0
    %1137 = vdwg.mxu0
    %v1138 = vmul.f32 %v1090, %v1133
    %v1139 = vadd.f32 %v774, %v1138
    %v1140 = vtanh.pop %v1139
    %v1141 = vsub.f32 %v999, %v1140
    %v1142 = vmul.f32 %v1097, %v1141
    %v1143 = vadd.f32 %v1140, %v1142
    %v1144 = vpack.c.bf16 %v1143, %v1143
    %v1146 = vsel %vm826, %v1144, 0
    %1148 = vmatprep.subr.bf16.mxu0 0
    %1149 = vmatpush1.bf16.msra.mxu0 %v822
    %1150 = vmatprep.subr.bf16.mxu0 0
    %1151 = vmatpush1.bf16.msra.mxu0 %v823
    %1152 = vmatprep.subr.bf16.mxu0 0
    %1153 = vmatpush1.bf16.msra.mxu0 0
    %1154 = vmatprep.subr.bf16.mxu0 0
    %1155 = vmatpush1.bf16.msra.mxu0 0
    %1156 = vmatprep.subr.bf16.mxu0 0
    %1157 = vmatpush1.bf16.msra.mxu0 0
    %1158 = vmatprep.subr.bf16.mxu0 0
    %1159 = vmatpush1.bf16.msra.mxu0 0
    %1160 = vmatprep.subr.bf16.mxu0 0
    %1161 = vmatpush1.bf16.msra.mxu0 0
    %1162 = vmatprep.subr.bf16.mxu0 0
    %1163 = vmatpush1.bf16.msra.mxu0 0
    %1164 = vmatprep.subr.bf16.mxu0 0
    %1165 = vmatpush1.bf16.msra.mxu0 0
    %1166 = vmatprep.subr.bf16.mxu0 0
    %1167 = vmatpush1.bf16.msra.mxu0 0
    %1168 = vmatprep.subr.bf16.mxu0 0
    %1169 = vmatpush1.bf16.msra.mxu0 0
    %1170 = vmatprep.subr.bf16.mxu0 0
    %1171 = vmatpush1.bf16.msra.mxu0 0
    %1172 = vmatprep.subr.bf16.mxu0 0
    %1173 = vmatpush1.bf16.msra.mxu0 0
    %1174 = vmatprep.subr.bf16.mxu0 0
    %1175 = vmatpush1.bf16.msra.mxu0 0
    %1176 = vmatprep.subr.bf16.mxu0 0
    %1177 = vmatpush1.bf16.msra.mxu0 0
    %1178 = vmatprep.subr.bf16.mxu0 0
    %1179 = vmatpush1.bf16.msra.mxu0 0
    %1180 = vmatprep.mubr.bf16.mxu0 0
    %1181 = vmatmul.mubr.bf16.gmra.mrb[0].mxu0 %v1146
    %v1182 = vpop.f32.mrb[0].mxu0
    %v1183 = vadd.f32 0.0, %v1182
    %v1184 = vpop.f32.mrb[0].mxu0
    %v1185 = vpop.f32.mrb[0].mxu0
    %v1186 = vpop.f32.mrb[0].mxu0
    %1187 = vdwg.mxu0
    %1188 = vmatprep.subr.bf16.mxu0 0
    %1189 = vmatpush1.bf16.msra.mxu0 %v878
    %1190 = vmatprep.subr.bf16.mxu0 0
    %1191 = vmatpush1.bf16.msra.mxu0 %v879
    %1192 = vmatprep.subr.bf16.mxu0 0
    %1193 = vmatpush1.bf16.msra.mxu0 0
    %1194 = vmatprep.subr.bf16.mxu0 0
    %1195 = vmatpush1.bf16.msra.mxu0 0
    %1196 = vmatprep.subr.bf16.mxu0 0
    %1197 = vmatpush1.bf16.msra.mxu0 0
    %1198 = vmatprep.subr.bf16.mxu0 0
    %1199 = vmatpush1.bf16.msra.mxu0 0
    %1200 = vmatprep.subr.bf16.mxu0 0
    %1201 = vmatpush1.bf16.msra.mxu0 0
    %1202 = vmatprep.subr.bf16.mxu0 0
    %1203 = vmatpush1.bf16.msra.mxu0 0
    %1204 = vmatprep.subr.bf16.mxu0 0
    %1205 = vmatpush1.bf16.msra.mxu0 0
    %1206 = vmatprep.subr.bf16.mxu0 0
    %1207 = vmatpush1.bf16.msra.mxu0 0
    %1208 = vmatprep.subr.bf16.mxu0 0
    %1209 = vmatpush1.bf16.msra.mxu0 0
    %1210 = vmatprep.subr.bf16.mxu0 0
    %1211 = vmatpush1.bf16.msra.mxu0 0
    %1212 = vmatprep.subr.bf16.mxu0 0
    %1213 = vmatpush1.bf16.msra.mxu0 0
    %1214 = vmatprep.subr.bf16.mxu0 0
    %1215 = vmatpush1.bf16.msra.mxu0 0
    %1216 = vmatprep.subr.bf16.mxu0 0
    %1217 = vmatpush1.bf16.msra.mxu0 0
    %1218 = vmatprep.subr.bf16.mxu0 0
    %1219 = vmatpush1.bf16.msra.mxu0 0
    %1220 = vmatprep.mubr.bf16.mxu0 0
    %1221 = vmatmul.mubr.bf16.gmra.mrb[0].mxu0 %v1146
    %v1222 = vpop.f32.mrb[0].mxu0
    %v1223 = vadd.f32 0.0, %v1222
    %v1224 = vpop.f32.mrb[0].mxu0
    %v1225 = vpop.f32.mrb[0].mxu0
    %v1226 = vpop.f32.mrb[0].mxu0
    %1227 = vdwg.mxu0
    %v1228 = vadd.f32 %v619, %v1183
    %v1229 = vxor.u32 %v1228, 2147483648
    %v1230 = vmul.f32 %v1229, 1.442695
    %v1231 = vpow.pop %v1230
    %v1232 = vadd.f32 %v1231, 1.0
    %v1233 = vrcp.pop %v1232
    %v1234 = vmul.f32 1.0, %v1233
    %v1235 = vadd.f32 %v699, %v1223
    %v1236 = vxor.u32 %v1235, 2147483648
    %v1237 = vmul.f32 %v1236, 1.442695
    %v1238 = vpow.pop %v1237
    %v1239 = vadd.f32 %v1238, 1.0
    %v1240 = vrcp.pop %v1239
    %v1241 = vmul.f32 1.0, %v1240
    %1242 = vmatprep.subr.bf16.mxu0 0
    %1243 = vmatpush1.bf16.msra.mxu0 %v950
    %1244 = vmatprep.subr.bf16.mxu0 0
    %1245 = vmatpush1.bf16.msra.mxu0 %v951
    %1246 = vmatprep.subr.bf16.mxu0 0
    %1247 = vmatpush1.bf16.msra.mxu0 0
    %1248 = vmatprep.subr.bf16.mxu0 0
    %1249 = vmatpush1.bf16.msra.mxu0 0
    %1250 = vmatprep.subr.bf16.mxu0 0
    %1251 = vmatpush1.bf16.msra.mxu0 0
    %1252 = vmatprep.subr.bf16.mxu0 0
    %1253 = vmatpush1.bf16.msra.mxu0 0
    %1254 = vmatprep.subr.bf16.mxu0 0
    %1255 = vmatpush1.bf16.msra.mxu0 0
    %1256 = vmatprep.subr.bf16.mxu0 0
    %1257 = vmatpush1.bf16.msra.mxu0 0
    %1258 = vmatprep.subr.bf16.mxu0 0
    %1259 = vmatpush1.bf16.msra.mxu0 0
    %1260 = vmatprep.subr.bf16.mxu0 0
    %1261 = vmatpush1.bf16.msra.mxu0 0
    %1262 = vmatprep.subr.bf16.mxu0 0
    %1263 = vmatpush1.bf16.msra.mxu0 0
    %1264 = vmatprep.subr.bf16.mxu0 0
    %1265 = vmatpush1.bf16.msra.mxu0 0
    %1266 = vmatprep.subr.bf16.mxu0 0
    %1267 = vmatpush1.bf16.msra.mxu0 0
    %1268 = vmatprep.subr.bf16.mxu0 0
    %1269 = vmatpush1.bf16.msra.mxu0 0
    %1270 = vmatprep.subr.bf16.mxu0 0
    %1271 = vmatpush1.bf16.msra.mxu0 0
    %1272 = vmatprep.subr.bf16.mxu0 0
    %1273 = vmatpush1.bf16.msra.mxu0 0
    %1274 = vmatprep.mubr.bf16.mxu0 0
    %1275 = vmatmul.mubr.bf16.gmra.mrb[0].mxu0 %v1146
    %v1276 = vpop.f32.mrb[0].mxu0
    %v1277 = vadd.f32 %v940, %v1276
    %v1278 = vpop.f32.mrb[0].mxu0
    %v1279 = vpop.f32.mrb[0].mxu0
    %v1280 = vpop.f32.mrb[0].mxu0
    %1281 = vdwg.mxu0
    %v1282 = vmul.f32 %v1234, %v1277
    %v1283 = vadd.f32 %v779, %v1282
    %v1284 = vtanh.pop %v1283
    %v1285 = vsub.f32 %v1143, %v1284
    %v1286 = vmul.f32 %v1241, %v1285
    %v1287 = vadd.f32 %v1284, %v1286
    %v1288 = vpack.c.bf16 %v1287, %v1287
    %v1290 = vsel %vm826, %v1288, 0
    %1292 = vmatprep.subr.bf16.mxu0 0
    %1293 = vmatpush1.bf16.msra.mxu0 %v822
    %1294 = vmatprep.subr.bf16.mxu0 0
    %1295 = vmatpush1.bf16.msra.mxu0 %v823
    %1296 = vmatprep.subr.bf16.mxu0 0
    %1297 = vmatpush1.bf16.msra.mxu0 0
    %1298 = vmatprep.subr.bf16.mxu0 0
    %1299 = vmatpush1.bf16.msra.mxu0 0
    %1300 = vmatprep.subr.bf16.mxu0 0
    %1301 = vmatpush1.bf16.msra.mxu0 0
    %1302 = vmatprep.subr.bf16.mxu0 0
    %1303 = vmatpush1.bf16.msra.mxu0 0
    %1304 = vmatprep.subr.bf16.mxu0 0
    %1305 = vmatpush1.bf16.msra.mxu0 0
    %1306 = vmatprep.subr.bf16.mxu0 0
    %1307 = vmatpush1.bf16.msra.mxu0 0
    %1308 = vmatprep.subr.bf16.mxu0 0
    %1309 = vmatpush1.bf16.msra.mxu0 0
    %1310 = vmatprep.subr.bf16.mxu0 0
    %1311 = vmatpush1.bf16.msra.mxu0 0
    %1312 = vmatprep.subr.bf16.mxu0 0
    %1313 = vmatpush1.bf16.msra.mxu0 0
    %1314 = vmatprep.subr.bf16.mxu0 0
    %1315 = vmatpush1.bf16.msra.mxu0 0
    %1316 = vmatprep.subr.bf16.mxu0 0
    %1317 = vmatpush1.bf16.msra.mxu0 0
    %1318 = vmatprep.subr.bf16.mxu0 0
    %1319 = vmatpush1.bf16.msra.mxu0 0
    %1320 = vmatprep.subr.bf16.mxu0 0
    %1321 = vmatpush1.bf16.msra.mxu0 0
    %1322 = vmatprep.subr.bf16.mxu0 0
    %1323 = vmatpush1.bf16.msra.mxu0 0
    %1324 = vmatprep.mubr.bf16.mxu0 0
    %1325 = vmatmul.mubr.bf16.gmra.mrb[0].mxu0 %v1290
    %v1326 = vpop.f32.mrb[0].mxu0
    %v1327 = vadd.f32 0.0, %v1326
    %v1328 = vpop.f32.mrb[0].mxu0
    %v1329 = vpop.f32.mrb[0].mxu0
    %v1330 = vpop.f32.mrb[0].mxu0
    %1331 = vdwg.mxu0
    %1332 = vmatprep.subr.bf16.mxu0 0
    %1333 = vmatpush1.bf16.msra.mxu0 %v878
    %1334 = vmatprep.subr.bf16.mxu0 0
    %1335 = vmatpush1.bf16.msra.mxu0 %v879
    %1336 = vmatprep.subr.bf16.mxu0 0
    %1337 = vmatpush1.bf16.msra.mxu0 0
    %1338 = vmatprep.subr.bf16.mxu0 0
    %1339 = vmatpush1.bf16.msra.mxu0 0
    %1340 = vmatprep.subr.bf16.mxu0 0
    %1341 = vmatpush1.bf16.msra.mxu0 0
    %1342 = vmatprep.subr.bf16.mxu0 0
    %1343 = vmatpush1.bf16.msra.mxu0 0
    %1344 = vmatprep.subr.bf16.mxu0 0
    %1345 = vmatpush1.bf16.msra.mxu0 0
    %1346 = vmatprep.subr.bf16.mxu0 0
    %1347 = vmatpush1.bf16.msra.mxu0 0
    %1348 = vmatprep.subr.bf16.mxu0 0
    %1349 = vmatpush1.bf16.msra.mxu0 0
    %1350 = vmatprep.subr.bf16.mxu0 0
    %1351 = vmatpush1.bf16.msra.mxu0 0
    %1352 = vmatprep.subr.bf16.mxu0 0
    %1353 = vmatpush1.bf16.msra.mxu0 0
    %1354 = vmatprep.subr.bf16.mxu0 0
    %1355 = vmatpush1.bf16.msra.mxu0 0
    %1356 = vmatprep.subr.bf16.mxu0 0
    %1357 = vmatpush1.bf16.msra.mxu0 0
    %1358 = vmatprep.subr.bf16.mxu0 0
    %1359 = vmatpush1.bf16.msra.mxu0 0
    %1360 = vmatprep.subr.bf16.mxu0 0
    %1361 = vmatpush1.bf16.msra.mxu0 0
    %1362 = vmatprep.subr.bf16.mxu0 0
    %1363 = vmatpush1.bf16.msra.mxu0 0
    %1364 = vmatprep.mubr.bf16.mxu0 0
    %1365 = vmatmul.mubr.bf16.gmra.mrb[0].mxu0 %v1290
    %v1366 = vpop.f32.mrb[0].mxu0
    %v1367 = vadd.f32 0.0, %v1366
    %v1368 = vpop.f32.mrb[0].mxu0
    %v1369 = vpop.f32.mrb[0].mxu0
    %v1370 = vpop.f32.mrb[0].mxu0
    %1371 = vdwg.mxu0
    %v1372 = vadd.f32 %v622, %v1327
    %v1373 = vxor.u32 %v1372, 2147483648
    %v1374 = vmul.f32 %v1373, 1.442695
    %v1375 = vpow.pop %v1374
    %v1376 = vadd.f32 %v1375, 1.0
    %v1377 = vrcp.pop %v1376
    %v1378 = vmul.f32 1.0, %v1377
    %v1379 = vadd.f32 %v702, %v1367
    %v1380 = vxor.u32 %v1379, 2147483648
    %v1381 = vmul.f32 %v1380, 1.442695
    %v1382 = vpow.pop %v1381
    %v1383 = vadd.f32 %v1382, 1.0
    %v1384 = vrcp.pop %v1383
    %v1385 = vmul.f32 1.0, %v1384
    %1386 = vmatprep.subr.bf16.mxu0 0
    %1387 = vmatpush1.bf16.msra.mxu0 %v950
    %1388 = vmatprep.subr.bf16.mxu0 0
    %1389 = vmatpush1.bf16.msra.mxu0 %v951
    %1390 = vmatprep.subr.bf16.mxu0 0
    %1391 = vmatpush1.bf16.msra.mxu0 0
    %1392 = vmatprep.subr.bf16.mxu0 0
    %1393 = vmatpush1.bf16.msra.mxu0 0
    %1394 = vmatprep.subr.bf16.mxu0 0
    %1395 = vmatpush1.bf16.msra.mxu0 0
    %1396 = vmatprep.subr.bf16.mxu0 0
    %1397 = vmatpush1.bf16.msra.mxu0 0
    %1398 = vmatprep.subr.bf16.mxu0 0
    %1399 = vmatpush1.bf16.msra.mxu0 0
    %1400 = vmatprep.subr.bf16.mxu0 0
    %1401 = vmatpush1.bf16.msra.mxu0 0
    %1402 = vmatprep.subr.bf16.mxu0 0
    %1403 = vmatpush1.bf16.msra.mxu0 0
    %1404 = vmatprep.subr.bf16.mxu0 0
    %1405 = vmatpush1.bf16.msra.mxu0 0
    %1406 = vmatprep.subr.bf16.mxu0 0
    %1407 = vmatpush1.bf16.msra.mxu0 0
    %1408 = vmatprep.subr.bf16.mxu0 0
    %1409 = vmatpush1.bf16.msra.mxu0 0
    %1410 = vmatprep.subr.bf16.mxu0 0
    %1411 = vmatpush1.bf16.msra.mxu0 0
    %1412 = vmatprep.subr.bf16.mxu0 0
    %1413 = vmatpush1.bf16.msra.mxu0 0
    %1414 = vmatprep.subr.bf16.mxu0 0
    %1415 = vmatpush1.bf16.msra.mxu0 0
    %1416 = vmatprep.subr.bf16.mxu0 0
    %1417 = vmatpush1.bf16.msra.mxu0 0
    %1418 = vmatprep.mubr.bf16.mxu0 0
    %1419 = vmatmul.mubr.bf16.gmra.mrb[0].mxu0 %v1290
    %v1420 = vpop.f32.mrb[0].mxu0
    %v1421 = vadd.f32 %v940, %v1420
    %v1422 = vpop.f32.mrb[0].mxu0
    %v1423 = vpop.f32.mrb[0].mxu0
    %v1424 = vpop.f32.mrb[0].mxu0
    %1425 = vdwg.mxu0
    %v1426 = vmul.f32 %v1378, %v1421
    %v1427 = vadd.f32 %v782, %v1426
    %v1428 = vtanh.pop %v1427
    %v1429 = vsub.f32 %v1287, %v1428
    %v1430 = vmul.f32 %v1385, %v1429
    %v1431 = vadd.f32 %v1428, %v1430
    %v1432 = vpack.c.bf16 %v1431, %v1431
    %v1434 = vsel %vm826, %v1432, 0
    %1436 = vmatprep.subr.bf16.mxu0 0
    %1437 = vmatpush1.bf16.msra.mxu0 %v822
    %1438 = vmatprep.subr.bf16.mxu0 0
    %1439 = vmatpush1.bf16.msra.mxu0 %v823
    %1440 = vmatprep.subr.bf16.mxu0 0
    %1441 = vmatpush1.bf16.msra.mxu0 0
    %1442 = vmatprep.subr.bf16.mxu0 0
    %1443 = vmatpush1.bf16.msra.mxu0 0
    %1444 = vmatprep.subr.bf16.mxu0 0
    %1445 = vmatpush1.bf16.msra.mxu0 0
    %1446 = vmatprep.subr.bf16.mxu0 0
    %1447 = vmatpush1.bf16.msra.mxu0 0
    %1448 = vmatprep.subr.bf16.mxu0 0
    %1449 = vmatpush1.bf16.msra.mxu0 0
    %1450 = vmatprep.subr.bf16.mxu0 0
    %1451 = vmatpush1.bf16.msra.mxu0 0
    %1452 = vmatprep.subr.bf16.mxu0 0
    %1453 = vmatpush1.bf16.msra.mxu0 0
    %1454 = vmatprep.subr.bf16.mxu0 0
    %1455 = vmatpush1.bf16.msra.mxu0 0
    %1456 = vmatprep.subr.bf16.mxu0 0
    %1457 = vmatpush1.bf16.msra.mxu0 0
    %1458 = vmatprep.subr.bf16.mxu0 0
    %1459 = vmatpush1.bf16.msra.mxu0 0
    %1460 = vmatprep.subr.bf16.mxu0 0
    %1461 = vmatpush1.bf16.msra.mxu0 0
    %1462 = vmatprep.subr.bf16.mxu0 0
    %1463 = vmatpush1.bf16.msra.mxu0 0
    %1464 = vmatprep.subr.bf16.mxu0 0
    %1465 = vmatpush1.bf16.msra.mxu0 0
    %1466 = vmatprep.subr.bf16.mxu0 0
    %1467 = vmatpush1.bf16.msra.mxu0 0
    %1468 = vmatprep.mubr.bf16.mxu0 0
    %1469 = vmatmul.mubr.bf16.gmra.mrb[0].mxu0 %v1434
    %v1470 = vpop.f32.mrb[0].mxu0
    %v1471 = vadd.f32 0.0, %v1470
    %v1472 = vpop.f32.mrb[0].mxu0
    %v1473 = vpop.f32.mrb[0].mxu0
    %v1474 = vpop.f32.mrb[0].mxu0
    %1475 = vdwg.mxu0
    %1476 = vmatprep.subr.bf16.mxu0 0
    %1477 = vmatpush1.bf16.msra.mxu0 %v878
    %1478 = vmatprep.subr.bf16.mxu0 0
    %1479 = vmatpush1.bf16.msra.mxu0 %v879
    %1480 = vmatprep.subr.bf16.mxu0 0
    %1481 = vmatpush1.bf16.msra.mxu0 0
    %1482 = vmatprep.subr.bf16.mxu0 0
    %1483 = vmatpush1.bf16.msra.mxu0 0
    %1484 = vmatprep.subr.bf16.mxu0 0
    %1485 = vmatpush1.bf16.msra.mxu0 0
    %1486 = vmatprep.subr.bf16.mxu0 0
    %1487 = vmatpush1.bf16.msra.mxu0 0
    %1488 = vmatprep.subr.bf16.mxu0 0
    %1489 = vmatpush1.bf16.msra.mxu0 0
    %1490 = vmatprep.subr.bf16.mxu0 0
    %1491 = vmatpush1.bf16.msra.mxu0 0
    %1492 = vmatprep.subr.bf16.mxu0 0
    %1493 = vmatpush1.bf16.msra.mxu0 0
    %1494 = vmatprep.subr.bf16.mxu0 0
    %1495 = vmatpush1.bf16.msra.mxu0 0
    %1496 = vmatprep.subr.bf16.mxu0 0
    %1497 = vmatpush1.bf16.msra.mxu0 0
    %1498 = vmatprep.subr.bf16.mxu0 0
    %1499 = vmatpush1.bf16.msra.mxu0 0
    %1500 = vmatprep.subr.bf16.mxu0 0
    %1501 = vmatpush1.bf16.msra.mxu0 0
    %1502 = vmatprep.subr.bf16.mxu0 0
    %1503 = vmatpush1.bf16.msra.mxu0 0
    %1504 = vmatprep.subr.bf16.mxu0 0
    %1505 = vmatpush1.bf16.msra.mxu0 0
    %1506 = vmatprep.subr.bf16.mxu0 0
    %1507 = vmatpush1.bf16.msra.mxu0 0
    %1508 = vmatprep.mubr.bf16.mxu0 0
    %1509 = vmatmul.mubr.bf16.gmra.mrb[0].mxu0 %v1434
    %v1510 = vpop.f32.mrb[0].mxu0
    %v1511 = vadd.f32 0.0, %v1510
    %v1512 = vpop.f32.mrb[0].mxu0
    %v1513 = vpop.f32.mrb[0].mxu0
    %v1514 = vpop.f32.mrb[0].mxu0
    %1515 = vdwg.mxu0
    %v1516 = vadd.f32 %v627, %v1471
    %v1517 = vxor.u32 %v1516, 2147483648
    %v1518 = vmul.f32 %v1517, 1.442695
    %v1519 = vpow.pop %v1518
    %v1520 = vadd.f32 %v1519, 1.0
    %v1521 = vrcp.pop %v1520
    %v1522 = vmul.f32 1.0, %v1521
    %v1523 = vadd.f32 %v707, %v1511
    %v1524 = vxor.u32 %v1523, 2147483648
    %v1525 = vmul.f32 %v1524, 1.442695
    %v1526 = vpow.pop %v1525
    %v1527 = vadd.f32 %v1526, 1.0
    %v1528 = vrcp.pop %v1527
    %v1529 = vmul.f32 1.0, %v1528
    %1530 = vmatprep.subr.bf16.mxu0 0
    %1531 = vmatpush1.bf16.msra.mxu0 %v950
    %1532 = vmatprep.subr.bf16.mxu0 0
    %1533 = vmatpush1.bf16.msra.mxu0 %v951
    %1534 = vmatprep.subr.bf16.mxu0 0
    %1535 = vmatpush1.bf16.msra.mxu0 0
    %1536 = vmatprep.subr.bf16.mxu0 0
    %1537 = vmatpush1.bf16.msra.mxu0 0
    %1538 = vmatprep.subr.bf16.mxu0 0
    %1539 = vmatpush1.bf16.msra.mxu0 0
    %1540 = vmatprep.subr.bf16.mxu0 0
    %1541 = vmatpush1.bf16.msra.mxu0 0
    %1542 = vmatprep.subr.bf16.mxu0 0
    %1543 = vmatpush1.bf16.msra.mxu0 0
    %1544 = vmatprep.subr.bf16.mxu0 0
    %1545 = vmatpush1.bf16.msra.mxu0 0
    %1546 = vmatprep.subr.bf16.mxu0 0
    %1547 = vmatpush1.bf16.msra.mxu0 0
    %1548 = vmatprep.subr.bf16.mxu0 0
    %1549 = vmatpush1.bf16.msra.mxu0 0
    %1550 = vmatprep.subr.bf16.mxu0 0
    %1551 = vmatpush1.bf16.msra.mxu0 0
    %1552 = vmatprep.subr.bf16.mxu0 0
    %1553 = vmatpush1.bf16.msra.mxu0 0
    %1554 = vmatprep.subr.bf16.mxu0 0
    %1555 = vmatpush1.bf16.msra.mxu0 0
    %1556 = vmatprep.subr.bf16.mxu0 0
    %1557 = vmatpush1.bf16.msra.mxu0 0
    %1558 = vmatprep.subr.bf16.mxu0 0
    %1559 = vmatpush1.bf16.msra.mxu0 0
    %1560 = vmatprep.subr.bf16.mxu0 0
    %1561 = vmatpush1.bf16.msra.mxu0 0
    %1562 = vmatprep.mubr.bf16.mxu0 0
    %1563 = vmatmul.mubr.bf16.gmra.mrb[0].mxu0 %v1434
    %v1564 = vpop.f32.mrb[0].mxu0
    %v1565 = vadd.f32 %v940, %v1564
    %v1566 = vpop.f32.mrb[0].mxu0
    %v1567 = vpop.f32.mrb[0].mxu0
    %v1568 = vpop.f32.mrb[0].mxu0
    %1569 = vdwg.mxu0
    %v1570 = vmul.f32 %v1522, %v1565
    %v1571 = vadd.f32 %v787, %v1570
    %v1572 = vtanh.pop %v1571
    %v1573 = vsub.f32 %v1431, %v1572
    %v1574 = vmul.f32 %v1529, %v1573
    %v1575 = vadd.f32 %v1572, %v1574
    %v1576 = vpack.c.bf16 %v1575, %v1575
    %v1578 = vsel %vm826, %v1576, 0
    %1580 = vmatprep.subr.bf16.mxu0 0
    %1581 = vmatpush1.bf16.msra.mxu0 %v822
    %1582 = vmatprep.subr.bf16.mxu0 0
    %1583 = vmatpush1.bf16.msra.mxu0 %v823
    %1584 = vmatprep.subr.bf16.mxu0 0
    %1585 = vmatpush1.bf16.msra.mxu0 0
    %1586 = vmatprep.subr.bf16.mxu0 0
    %1587 = vmatpush1.bf16.msra.mxu0 0
    %1588 = vmatprep.subr.bf16.mxu0 0
    %1589 = vmatpush1.bf16.msra.mxu0 0
    %1590 = vmatprep.subr.bf16.mxu0 0
    %1591 = vmatpush1.bf16.msra.mxu0 0
    %1592 = vmatprep.subr.bf16.mxu0 0
    %1593 = vmatpush1.bf16.msra.mxu0 0
    %1594 = vmatprep.subr.bf16.mxu0 0
    %1595 = vmatpush1.bf16.msra.mxu0 0
    %1596 = vmatprep.subr.bf16.mxu0 0
    %1597 = vmatpush1.bf16.msra.mxu0 0
    %1598 = vmatprep.subr.bf16.mxu0 0
    %1599 = vmatpush1.bf16.msra.mxu0 0
    %1600 = vmatprep.subr.bf16.mxu0 0
    %1601 = vmatpush1.bf16.msra.mxu0 0
    %1602 = vmatprep.subr.bf16.mxu0 0
    %1603 = vmatpush1.bf16.msra.mxu0 0
    %1604 = vmatprep.subr.bf16.mxu0 0
    %1605 = vmatpush1.bf16.msra.mxu0 0
    %1606 = vmatprep.subr.bf16.mxu0 0
    %1607 = vmatpush1.bf16.msra.mxu0 0
    %1608 = vmatprep.subr.bf16.mxu0 0
    %1609 = vmatpush1.bf16.msra.mxu0 0
    %1610 = vmatprep.subr.bf16.mxu0 0
    %1611 = vmatpush1.bf16.msra.mxu0 0
    %1612 = vmatprep.mubr.bf16.mxu0 0
    %1613 = vmatmul.mubr.bf16.gmra.mrb[0].mxu0 %v1578
    %v1614 = vpop.f32.mrb[0].mxu0
    %v1615 = vadd.f32 0.0, %v1614
    %v1616 = vpop.f32.mrb[0].mxu0
    %v1617 = vpop.f32.mrb[0].mxu0
    %v1618 = vpop.f32.mrb[0].mxu0
    %1619 = vdwg.mxu0
    %1620 = vmatprep.subr.bf16.mxu0 0
    %1621 = vmatpush1.bf16.msra.mxu0 %v878
    %1622 = vmatprep.subr.bf16.mxu0 0
    %1623 = vmatpush1.bf16.msra.mxu0 %v879
    %1624 = vmatprep.subr.bf16.mxu0 0
    %1625 = vmatpush1.bf16.msra.mxu0 0
    %1626 = vmatprep.subr.bf16.mxu0 0
    %1627 = vmatpush1.bf16.msra.mxu0 0
    %1628 = vmatprep.subr.bf16.mxu0 0
    %1629 = vmatpush1.bf16.msra.mxu0 0
    %1630 = vmatprep.subr.bf16.mxu0 0
    %1631 = vmatpush1.bf16.msra.mxu0 0
    %1632 = vmatprep.subr.bf16.mxu0 0
    %1633 = vmatpush1.bf16.msra.mxu0 0
    %1634 = vmatprep.subr.bf16.mxu0 0
    %1635 = vmatpush1.bf16.msra.mxu0 0
    %1636 = vmatprep.subr.bf16.mxu0 0
    %1637 = vmatpush1.bf16.msra.mxu0 0
    %1638 = vmatprep.subr.bf16.mxu0 0
    %1639 = vmatpush1.bf16.msra.mxu0 0
    %1640 = vmatprep.subr.bf16.mxu0 0
    %1641 = vmatpush1.bf16.msra.mxu0 0
    %1642 = vmatprep.subr.bf16.mxu0 0
    %1643 = vmatpush1.bf16.msra.mxu0 0
    %1644 = vmatprep.subr.bf16.mxu0 0
    %1645 = vmatpush1.bf16.msra.mxu0 0
    %1646 = vmatprep.subr.bf16.mxu0 0
    %1647 = vmatpush1.bf16.msra.mxu0 0
    %1648 = vmatprep.subr.bf16.mxu0 0
    %1649 = vmatpush1.bf16.msra.mxu0 0
    %1650 = vmatprep.subr.bf16.mxu0 0
    %1651 = vmatpush1.bf16.msra.mxu0 0
    %1652 = vmatprep.mubr.bf16.mxu0 0
    %1653 = vmatmul.mubr.bf16.gmra.mrb[0].mxu0 %v1578
    %v1654 = vpop.f32.mrb[0].mxu0
    %v1655 = vadd.f32 0.0, %v1654
    %v1656 = vpop.f32.mrb[0].mxu0
    %v1657 = vpop.f32.mrb[0].mxu0
    %v1658 = vpop.f32.mrb[0].mxu0
    %1659 = vdwg.mxu0
    %v1660 = vadd.f32 %v630, %v1615
    %v1661 = vxor.u32 %v1660, 2147483648
    %v1662 = vmul.f32 %v1661, 1.442695
    %v1663 = vpow.pop %v1662
    %v1664 = vadd.f32 %v1663, 1.0
    %v1665 = vrcp.pop %v1664
    %v1666 = vmul.f32 1.0, %v1665
    %v1667 = vadd.f32 %v710, %v1655
    %v1668 = vxor.u32 %v1667, 2147483648
    %v1669 = vmul.f32 %v1668, 1.442695
    %v1670 = vpow.pop %v1669
    %v1671 = vadd.f32 %v1670, 1.0
    %v1672 = vrcp.pop %v1671
    %v1673 = vmul.f32 1.0, %v1672
    %1674 = vmatprep.subr.bf16.mxu0 0
    %1675 = vmatpush1.bf16.msra.mxu0 %v950
    %1676 = vmatprep.subr.bf16.mxu0 0
    %1677 = vmatpush1.bf16.msra.mxu0 %v951
    %1678 = vmatprep.subr.bf16.mxu0 0
    %1679 = vmatpush1.bf16.msra.mxu0 0
    %1680 = vmatprep.subr.bf16.mxu0 0
    %1681 = vmatpush1.bf16.msra.mxu0 0
    %1682 = vmatprep.subr.bf16.mxu0 0
    %1683 = vmatpush1.bf16.msra.mxu0 0
    %1684 = vmatprep.subr.bf16.mxu0 0
    %1685 = vmatpush1.bf16.msra.mxu0 0
    %1686 = vmatprep.subr.bf16.mxu0 0
    %1687 = vmatpush1.bf16.msra.mxu0 0
    %1688 = vmatprep.subr.bf16.mxu0 0
    %1689 = vmatpush1.bf16.msra.mxu0 0
    %1690 = vmatprep.subr.bf16.mxu0 0
    %1691 = vmatpush1.bf16.msra.mxu0 0
    %1692 = vmatprep.subr.bf16.mxu0 0
    %1693 = vmatpush1.bf16.msra.mxu0 0
    %1694 = vmatprep.subr.bf16.mxu0 0
    %1695 = vmatpush1.bf16.msra.mxu0 0
    %1696 = vmatprep.subr.bf16.mxu0 0
    %1697 = vmatpush1.bf16.msra.mxu0 0
    %1698 = vmatprep.subr.bf16.mxu0 0
    %1699 = vmatpush1.bf16.msra.mxu0 0
    %1700 = vmatprep.subr.bf16.mxu0 0
    %1701 = vmatpush1.bf16.msra.mxu0 0
    %1702 = vmatprep.subr.bf16.mxu0 0
    %1703 = vmatpush1.bf16.msra.mxu0 0
    %1704 = vmatprep.subr.bf16.mxu0 0
    %1705 = vmatpush1.bf16.msra.mxu0 0
    %1706 = vmatprep.mubr.bf16.mxu0 0
    %1707 = vmatmul.mubr.bf16.gmra.mrb[0].mxu0 %v1578
    %v1708 = vpop.f32.mrb[0].mxu0
    %v1709 = vadd.f32 %v940, %v1708
    %v1710 = vpop.f32.mrb[0].mxu0
    %v1711 = vpop.f32.mrb[0].mxu0
    %v1712 = vpop.f32.mrb[0].mxu0
    %1713 = vdwg.mxu0
    %v1714 = vmul.f32 %v1666, %v1709
    %v1715 = vadd.f32 %v790, %v1714
    %v1716 = vtanh.pop %v1715
    %v1717 = vsub.f32 %v1575, %v1716
    %v1718 = vmul.f32 %v1673, %v1717
    %v1719 = vadd.f32 %v1716, %v1718
    %v1720 = vpack.c.bf16 %v1719, %v1719
    %v1722 = vsel %vm826, %v1720, 0
    %1724 = vmatprep.subr.bf16.mxu0 0
    %1725 = vmatpush1.bf16.msra.mxu0 %v822
    %1726 = vmatprep.subr.bf16.mxu0 0
    %1727 = vmatpush1.bf16.msra.mxu0 %v823
    %1728 = vmatprep.subr.bf16.mxu0 0
    %1729 = vmatpush1.bf16.msra.mxu0 0
    %1730 = vmatprep.subr.bf16.mxu0 0
    %1731 = vmatpush1.bf16.msra.mxu0 0
    %1732 = vmatprep.subr.bf16.mxu0 0
    %1733 = vmatpush1.bf16.msra.mxu0 0
    %1734 = vmatprep.subr.bf16.mxu0 0
    %1735 = vmatpush1.bf16.msra.mxu0 0
    %1736 = vmatprep.subr.bf16.mxu0 0
    %1737 = vmatpush1.bf16.msra.mxu0 0
    %1738 = vmatprep.subr.bf16.mxu0 0
    %1739 = vmatpush1.bf16.msra.mxu0 0
    %1740 = vmatprep.subr.bf16.mxu0 0
    %1741 = vmatpush1.bf16.msra.mxu0 0
    %1742 = vmatprep.subr.bf16.mxu0 0
    %1743 = vmatpush1.bf16.msra.mxu0 0
    %1744 = vmatprep.subr.bf16.mxu0 0
    %1745 = vmatpush1.bf16.msra.mxu0 0
    %1746 = vmatprep.subr.bf16.mxu0 0
    %1747 = vmatpush1.bf16.msra.mxu0 0
    %1748 = vmatprep.subr.bf16.mxu0 0
    %1749 = vmatpush1.bf16.msra.mxu0 0
    %1750 = vmatprep.subr.bf16.mxu0 0
    %1751 = vmatpush1.bf16.msra.mxu0 0
    %1752 = vmatprep.subr.bf16.mxu0 0
    %1753 = vmatpush1.bf16.msra.mxu0 0
    %1754 = vmatprep.subr.bf16.mxu0 0
    %1755 = vmatpush1.bf16.msra.mxu0 0
    %1756 = vmatprep.mubr.bf16.mxu0 0
    %1757 = vmatmul.mubr.bf16.gmra.mrb[0].mxu0 %v1722
    %v1758 = vpop.f32.mrb[0].mxu0
    %v1759 = vadd.f32 0.0, %v1758
    %v1760 = vpop.f32.mrb[0].mxu0
    %v1761 = vpop.f32.mrb[0].mxu0
    %v1762 = vpop.f32.mrb[0].mxu0
    %1763 = vdwg.mxu0
    %1764 = vmatprep.subr.bf16.mxu0 0
    %1765 = vmatpush1.bf16.msra.mxu0 %v878
    %1766 = vmatprep.subr.bf16.mxu0 0
    %1767 = vmatpush1.bf16.msra.mxu0 %v879
    %1768 = vmatprep.subr.bf16.mxu0 0
    %1769 = vmatpush1.bf16.msra.mxu0 0
    %1770 = vmatprep.subr.bf16.mxu0 0
    %1771 = vmatpush1.bf16.msra.mxu0 0
    %1772 = vmatprep.subr.bf16.mxu0 0
    %1773 = vmatpush1.bf16.msra.mxu0 0
    %1774 = vmatprep.subr.bf16.mxu0 0
    %1775 = vmatpush1.bf16.msra.mxu0 0
    %1776 = vmatprep.subr.bf16.mxu0 0
    %1777 = vmatpush1.bf16.msra.mxu0 0
    %1778 = vmatprep.subr.bf16.mxu0 0
    %1779 = vmatpush1.bf16.msra.mxu0 0
    %1780 = vmatprep.subr.bf16.mxu0 0
    %1781 = vmatpush1.bf16.msra.mxu0 0
    %1782 = vmatprep.subr.bf16.mxu0 0
    %1783 = vmatpush1.bf16.msra.mxu0 0
    %1784 = vmatprep.subr.bf16.mxu0 0
    %1785 = vmatpush1.bf16.msra.mxu0 0
    %1786 = vmatprep.subr.bf16.mxu0 0
    %1787 = vmatpush1.bf16.msra.mxu0 0
    %1788 = vmatprep.subr.bf16.mxu0 0
    %1789 = vmatpush1.bf16.msra.mxu0 0
    %1790 = vmatprep.subr.bf16.mxu0 0
    %1791 = vmatpush1.bf16.msra.mxu0 0
    %1792 = vmatprep.subr.bf16.mxu0 0
    %1793 = vmatpush1.bf16.msra.mxu0 0
    %1794 = vmatprep.subr.bf16.mxu0 0
    %1795 = vmatpush1.bf16.msra.mxu0 0
    %1796 = vmatprep.mubr.bf16.mxu0 0
    %1797 = vmatmul.mubr.bf16.gmra.mrb[0].mxu0 %v1722
    %v1798 = vpop.f32.mrb[0].mxu0
    %v1799 = vadd.f32 0.0, %v1798
    %v1800 = vpop.f32.mrb[0].mxu0
    %v1801 = vpop.f32.mrb[0].mxu0
    %v1802 = vpop.f32.mrb[0].mxu0
    %1803 = vdwg.mxu0
    %v1804 = vadd.f32 %v635, %v1759
    %v1805 = vxor.u32 %v1804, 2147483648
    %v1806 = vmul.f32 %v1805, 1.442695
    %v1807 = vpow.pop %v1806
    %v1808 = vadd.f32 %v1807, 1.0
    %v1809 = vrcp.pop %v1808
    %v1810 = vmul.f32 1.0, %v1809
    %v1811 = vadd.f32 %v715, %v1799
    %v1812 = vxor.u32 %v1811, 2147483648
    %v1813 = vmul.f32 %v1812, 1.442695
    %v1814 = vpow.pop %v1813
    %v1815 = vadd.f32 %v1814, 1.0
    %v1816 = vrcp.pop %v1815
    %v1817 = vmul.f32 1.0, %v1816
    %1818 = vmatprep.subr.bf16.mxu0 0
    %1819 = vmatpush1.bf16.msra.mxu0 %v950
    %1820 = vmatprep.subr.bf16.mxu0 0
    %1821 = vmatpush1.bf16.msra.mxu0 %v951
    %1822 = vmatprep.subr.bf16.mxu0 0
    %1823 = vmatpush1.bf16.msra.mxu0 0
    %1824 = vmatprep.subr.bf16.mxu0 0
    %1825 = vmatpush1.bf16.msra.mxu0 0
    %1826 = vmatprep.subr.bf16.mxu0 0
    %1827 = vmatpush1.bf16.msra.mxu0 0
    %1828 = vmatprep.subr.bf16.mxu0 0
    %1829 = vmatpush1.bf16.msra.mxu0 0
    %1830 = vmatprep.subr.bf16.mxu0 0
    %1831 = vmatpush1.bf16.msra.mxu0 0
    %1832 = vmatprep.subr.bf16.mxu0 0
    %1833 = vmatpush1.bf16.msra.mxu0 0
    %1834 = vmatprep.subr.bf16.mxu0 0
    %1835 = vmatpush1.bf16.msra.mxu0 0
    %1836 = vmatprep.subr.bf16.mxu0 0
    %1837 = vmatpush1.bf16.msra.mxu0 0
    %1838 = vmatprep.subr.bf16.mxu0 0
    %1839 = vmatpush1.bf16.msra.mxu0 0
    %1840 = vmatprep.subr.bf16.mxu0 0
    %1841 = vmatpush1.bf16.msra.mxu0 0
    %1842 = vmatprep.subr.bf16.mxu0 0
    %1843 = vmatpush1.bf16.msra.mxu0 0
    %1844 = vmatprep.subr.bf16.mxu0 0
    %1845 = vmatpush1.bf16.msra.mxu0 0
    %1846 = vmatprep.subr.bf16.mxu0 0
    %1847 = vmatpush1.bf16.msra.mxu0 0
    %1848 = vmatprep.subr.bf16.mxu0 0
    %1849 = vmatpush1.bf16.msra.mxu0 0
    %1850 = vmatprep.mubr.bf16.mxu0 0
    %1851 = vmatmul.mubr.bf16.gmra.mrb[0].mxu0 %v1722
    %v1852 = vpop.f32.mrb[0].mxu0
    %v1853 = vadd.f32 %v940, %v1852
    %v1854 = vpop.f32.mrb[0].mxu0
    %v1855 = vpop.f32.mrb[0].mxu0
    %v1856 = vpop.f32.mrb[0].mxu0
    %1857 = vdwg.mxu0
    %v1858 = vmul.f32 %v1810, %v1853
    %v1859 = vadd.f32 %v795, %v1858
    %v1860 = vtanh.pop %v1859
    %v1861 = vsub.f32 %v1719, %v1860
    %v1862 = vmul.f32 %v1817, %v1861
    %v1863 = vadd.f32 %v1860, %v1862
    %v1864 = vpack.c.bf16 %v1863, %v1863
    %v1866 = vsel %vm826, %v1864, 0
    %1868 = vmatprep.subr.bf16.mxu0 0
    %1869 = vmatpush1.bf16.msra.mxu0 %v822
    %1870 = vmatprep.subr.bf16.mxu0 0
    %1871 = vmatpush1.bf16.msra.mxu0 %v823
    %1872 = vmatprep.subr.bf16.mxu0 0
    %1873 = vmatpush1.bf16.msra.mxu0 0
    %1874 = vmatprep.subr.bf16.mxu0 0
    %1875 = vmatpush1.bf16.msra.mxu0 0
    %1876 = vmatprep.subr.bf16.mxu0 0
    %1877 = vmatpush1.bf16.msra.mxu0 0
    %1878 = vmatprep.subr.bf16.mxu0 0
    %1879 = vmatpush1.bf16.msra.mxu0 0
    %1880 = vmatprep.subr.bf16.mxu0 0
    %1881 = vmatpush1.bf16.msra.mxu0 0
    %1882 = vmatprep.subr.bf16.mxu0 0
    %1883 = vmatpush1.bf16.msra.mxu0 0
    %1884 = vmatprep.subr.bf16.mxu0 0
    %1885 = vmatpush1.bf16.msra.mxu0 0
    %1886 = vmatprep.subr.bf16.mxu0 0
    %1887 = vmatpush1.bf16.msra.mxu0 0
    %1888 = vmatprep.subr.bf16.mxu0 0
    %1889 = vmatpush1.bf16.msra.mxu0 0
    %1890 = vmatprep.subr.bf16.mxu0 0
    %1891 = vmatpush1.bf16.msra.mxu0 0
    %1892 = vmatprep.subr.bf16.mxu0 0
    %1893 = vmatpush1.bf16.msra.mxu0 0
    %1894 = vmatprep.subr.bf16.mxu0 0
    %1895 = vmatpush1.bf16.msra.mxu0 0
    %1896 = vmatprep.subr.bf16.mxu0 0
    %1897 = vmatpush1.bf16.msra.mxu0 0
    %1898 = vmatprep.subr.bf16.mxu0 0
    %1899 = vmatpush1.bf16.msra.mxu0 0
    %1900 = vmatprep.mubr.bf16.mxu0 0
    %1901 = vmatmul.mubr.bf16.gmra.mrb[0].mxu0 %v1866
    %v1902 = vpop.f32.mrb[0].mxu0
    %v1903 = vadd.f32 0.0, %v1902
    %v1904 = vpop.f32.mrb[0].mxu0
    %v1905 = vpop.f32.mrb[0].mxu0
    %v1906 = vpop.f32.mrb[0].mxu0
    %1907 = vdwg.mxu0
    %1908 = vmatprep.subr.bf16.mxu0 0
    %1909 = vmatpush1.bf16.msra.mxu0 %v878
    %1910 = vmatprep.subr.bf16.mxu0 0
    %1911 = vmatpush1.bf16.msra.mxu0 %v879
    %1912 = vmatprep.subr.bf16.mxu0 0
    %1913 = vmatpush1.bf16.msra.mxu0 0
    %1914 = vmatprep.subr.bf16.mxu0 0
    %1915 = vmatpush1.bf16.msra.mxu0 0
    %1916 = vmatprep.subr.bf16.mxu0 0
    %1917 = vmatpush1.bf16.msra.mxu0 0
    %1918 = vmatprep.subr.bf16.mxu0 0
    %1919 = vmatpush1.bf16.msra.mxu0 0
    %1920 = vmatprep.subr.bf16.mxu0 0
    %1921 = vmatpush1.bf16.msra.mxu0 0
    %1922 = vmatprep.subr.bf16.mxu0 0
    %1923 = vmatpush1.bf16.msra.mxu0 0
    %1924 = vmatprep.subr.bf16.mxu0 0
    %1925 = vmatpush1.bf16.msra.mxu0 0
    %1926 = vmatprep.subr.bf16.mxu0 0
    %1927 = vmatpush1.bf16.msra.mxu0 0
    %1928 = vmatprep.subr.bf16.mxu0 0
    %1929 = vmatpush1.bf16.msra.mxu0 0
    %1930 = vmatprep.subr.bf16.mxu0 0
    %1931 = vmatpush1.bf16.msra.mxu0 0
    %1932 = vmatprep.subr.bf16.mxu0 0
    %1933 = vmatpush1.bf16.msra.mxu0 0
    %1934 = vmatprep.subr.bf16.mxu0 0
    %1935 = vmatpush1.bf16.msra.mxu0 0
    %1936 = vmatprep.subr.bf16.mxu0 0
    %1937 = vmatpush1.bf16.msra.mxu0 0
    %1938 = vmatprep.subr.bf16.mxu0 0
    %1939 = vmatpush1.bf16.msra.mxu0 0
    %1940 = vmatprep.mubr.bf16.mxu0 0
    %1941 = vmatmul.mubr.bf16.gmra.mrb[0].mxu0 %v1866
    %v1942 = vpop.f32.mrb[0].mxu0
    %v1943 = vadd.f32 0.0, %v1942
    %v1944 = vpop.f32.mrb[0].mxu0
    %v1945 = vpop.f32.mrb[0].mxu0
    %v1946 = vpop.f32.mrb[0].mxu0
    %1947 = vdwg.mxu0
    %v1948 = vadd.f32 %v638, %v1903
    %v1949 = vxor.u32 %v1948, 2147483648
    %v1950 = vmul.f32 %v1949, 1.442695
    %v1951 = vpow.pop %v1950
    %v1952 = vadd.f32 %v1951, 1.0
    %v1953 = vrcp.pop %v1952
    %v1954 = vmul.f32 1.0, %v1953
    %v1955 = vadd.f32 %v718, %v1943
    %v1956 = vxor.u32 %v1955, 2147483648
    %v1957 = vmul.f32 %v1956, 1.442695
    %v1958 = vpow.pop %v1957
    %v1959 = vadd.f32 %v1958, 1.0
    %v1960 = vrcp.pop %v1959
    %v1961 = vmul.f32 1.0, %v1960
    %1962 = vmatprep.subr.bf16.mxu0 0
    %1963 = vmatpush1.bf16.msra.mxu0 %v950
    %1964 = vmatprep.subr.bf16.mxu0 0
    %1965 = vmatpush1.bf16.msra.mxu0 %v951
    %1966 = vmatprep.subr.bf16.mxu0 0
    %1967 = vmatpush1.bf16.msra.mxu0 0
    %1968 = vmatprep.subr.bf16.mxu0 0
    %1969 = vmatpush1.bf16.msra.mxu0 0
    %1970 = vmatprep.subr.bf16.mxu0 0
    %1971 = vmatpush1.bf16.msra.mxu0 0
    %1972 = vmatprep.subr.bf16.mxu0 0
    %1973 = vmatpush1.bf16.msra.mxu0 0
    %1974 = vmatprep.subr.bf16.mxu0 0
    %1975 = vmatpush1.bf16.msra.mxu0 0
    %1976 = vmatprep.subr.bf16.mxu0 0
    %1977 = vmatpush1.bf16.msra.mxu0 0
    %1978 = vmatprep.subr.bf16.mxu0 0
    %1979 = vmatpush1.bf16.msra.mxu0 0
    %1980 = vmatprep.subr.bf16.mxu0 0
    %1981 = vmatpush1.bf16.msra.mxu0 0
    %1982 = vmatprep.subr.bf16.mxu0 0
    %1983 = vmatpush1.bf16.msra.mxu0 0
    %1984 = vmatprep.subr.bf16.mxu0 0
    %1985 = vmatpush1.bf16.msra.mxu0 0
    %1986 = vmatprep.subr.bf16.mxu0 0
    %1987 = vmatpush1.bf16.msra.mxu0 0
    %1988 = vmatprep.subr.bf16.mxu0 0
    %1989 = vmatpush1.bf16.msra.mxu0 0
    %1990 = vmatprep.subr.bf16.mxu0 0
    %1991 = vmatpush1.bf16.msra.mxu0 0
    %1992 = vmatprep.subr.bf16.mxu0 0
    %1993 = vmatpush1.bf16.msra.mxu0 0
    %1994 = vmatprep.mubr.bf16.mxu0 0
    %1995 = vmatmul.mubr.bf16.gmra.mrb[0].mxu0 %v1866
    %v1996 = vpop.f32.mrb[0].mxu0
    %v1997 = vadd.f32 %v940, %v1996
    %v1998 = vpop.f32.mrb[0].mxu0
    %v1999 = vpop.f32.mrb[0].mxu0
    %v2000 = vpop.f32.mrb[0].mxu0
    %2001 = vdwg.mxu0
    %v2002 = vmul.f32 %v1954, %v1997
    %v2003 = vadd.f32 %v798, %v2002
    %v2004 = vtanh.pop %v2003
    %v2005 = vsub.f32 %v1863, %v2004
    %v2006 = vmul.f32 %v1961, %v2005
    %v2007 = vadd.f32 %v2004, %v2006
    %v2016 = vrot.slane %v1143, 7
    %v2017 = vsel %vm362, %v2016, %v999
    %v2018 = vrot.slane %v1287, 6
    %v2019 = vsel %vm365, %v2018, %v2017
    %v2020 = vrot.slane %v1431, 5
    %v2021 = vsel %vm368, %v2020, %v2019
    %v2022 = vrot.slane %v1575, 4
    %v2023 = vsel %vm371, %v2022, %v2021
    %v2024 = vrot.slane %v1719, 3
    %v2025 = vsel %vm374, %v2024, %v2023
    %v2026 = vrot.slane %v1863, 2
    %v2027 = vsel %vm377, %v2026, %v2025
    %v2028 = vrot.slane %v2007, 1
    %v2029 = vsel %vm380, %v2028, %v2027
    %v2031 = vrot.slane %v999, 1
    %v2032 = vsel %vm362, %v1143, %v2031
    %v2033 = vrot.slane %v1287, 7
    %v2034 = vsel %vm365, %v2033, %v2032
    %v2035 = vrot.slane %v1431, 6
    %v2036 = vsel %vm368, %v2035, %v2034
    %v2037 = vrot.slane %v1575, 5
    %v2038 = vsel %vm371, %v2037, %v2036
    %v2039 = vrot.slane %v1719, 4
    %v2040 = vsel %vm374, %v2039, %v2038
    %v2041 = vrot.slane %v1863, 3
    %v2042 = vsel %vm377, %v2041, %v2040
    %v2043 = vrot.slane %v2007, 2
    %v2044 = vsel %vm380, %v2043, %v2042
    %v2046 = vrot.slane %v999, 2
    %v2047 = vrot.slane %v1143, 1
    %v2048 = vsel %vm362, %v2047, %v2046
    %v2049 = vsel %vm365, %v1287, %v2048
    %v2050 = vrot.slane %v1431, 7
    %v2051 = vsel %vm368, %v2050, %v2049
    %v2052 = vrot.slane %v1575, 6
    %v2053 = vsel %vm371, %v2052, %v2051
    %v2054 = vrot.slane %v1719, 5
    %v2055 = vsel %vm374, %v2054, %v2053
    %v2056 = vrot.slane %v1863, 4
    %v2057 = vsel %vm377, %v2056, %v2055
    %v2058 = vrot.slane %v2007, 3
    %v2059 = vsel %vm380, %v2058, %v2057
    %v2061 = vrot.slane %v999, 3
    %v2062 = vrot.slane %v1143, 2
    %v2063 = vsel %vm362, %v2062, %v2061
    %v2064 = vrot.slane %v1287, 1
    %v2065 = vsel %vm365, %v2064, %v2063
    %v2066 = vsel %vm368, %v1431, %v2065
    %v2067 = vrot.slane %v1575, 7
    %v2068 = vsel %vm371, %v2067, %v2066
    %v2069 = vrot.slane %v1719, 6
    %v2070 = vsel %vm374, %v2069, %v2068
    %v2071 = vrot.slane %v1863, 5
    %v2072 = vsel %vm377, %v2071, %v2070
    %v2073 = vrot.slane %v2007, 4
    %v2074 = vsel %vm380, %v2073, %v2072
    %v2076 = vrot.slane %v999, 4
    %v2077 = vrot.slane %v1143, 3
    %v2078 = vsel %vm362, %v2077, %v2076
    %v2079 = vrot.slane %v1287, 2
    %v2080 = vsel %vm365, %v2079, %v2078
    %v2081 = vrot.slane %v1431, 1
    %v2082 = vsel %vm368, %v2081, %v2080
    %v2083 = vsel %vm371, %v1575, %v2082
    %v2084 = vrot.slane %v1719, 7
    %v2085 = vsel %vm374, %v2084, %v2083
    %v2086 = vrot.slane %v1863, 6
    %v2087 = vsel %vm377, %v2086, %v2085
    %v2088 = vrot.slane %v2007, 5
    %v2089 = vsel %vm380, %v2088, %v2087
    %v2091 = vrot.slane %v999, 5
    %v2092 = vrot.slane %v1143, 4
    %v2093 = vsel %vm362, %v2092, %v2091
    %v2094 = vrot.slane %v1287, 3
    %v2095 = vsel %vm365, %v2094, %v2093
    %v2096 = vrot.slane %v1431, 2
    %v2097 = vsel %vm368, %v2096, %v2095
    %v2098 = vrot.slane %v1575, 1
    %v2099 = vsel %vm371, %v2098, %v2097
    %v2100 = vsel %vm374, %v1719, %v2099
    %v2101 = vrot.slane %v1863, 7
    %v2102 = vsel %vm377, %v2101, %v2100
    %v2103 = vrot.slane %v2007, 6
    %v2104 = vsel %vm380, %v2103, %v2102
    %v2106 = vrot.slane %v999, 6
    %v2107 = vrot.slane %v1143, 5
    %v2108 = vsel %vm362, %v2107, %v2106
    %v2109 = vrot.slane %v1287, 4
    %v2110 = vsel %vm365, %v2109, %v2108
    %v2111 = vrot.slane %v1431, 3
    %v2112 = vsel %vm368, %v2111, %v2110
    %v2113 = vrot.slane %v1575, 2
    %v2114 = vsel %vm371, %v2113, %v2112
    %v2115 = vrot.slane %v1719, 1
    %v2116 = vsel %vm374, %v2115, %v2114
    %v2117 = vsel %vm377, %v1863, %v2116
    %v2118 = vrot.slane %v2007, 7
    %v2119 = vsel %vm380, %v2118, %v2117
    %v2121 = vrot.slane %v999, 7
    %v2122 = vrot.slane %v1143, 6
    %v2123 = vsel %vm362, %v2122, %v2121
    %v2124 = vrot.slane %v1287, 5
    %v2125 = vsel %vm365, %v2124, %v2123
    %v2126 = vrot.slane %v1431, 4
    %v2127 = vsel %vm368, %v2126, %v2125
    %v2128 = vrot.slane %v1575, 3
    %v2129 = vsel %vm371, %v2128, %v2127
    %v2130 = vrot.slane %v1719, 2
    %v2131 = vsel %vm374, %v2130, %v2129
    %v2132 = vrot.slane %v1863, 1
    %v2133 = vsel %vm377, %v2132, %v2131
    %v2134 = vsel %vm380, %v2007, %v2133
    %v2136 = vpack.c.bf16 %v2044, %v2029
    %v2137 = vpack.c.bf16 %v2074, %v2059
    %v2138 = vpack.c.bf16 %v2104, %v2089
    %v2139 = vpack.c.bf16 %v2134, %v2119
    %v2140 = vld [vmem:[%s11] sm:$0xf]
    %v2141 = vld [vmem:[%s11 + $0x4] sm:$0xf]
    %v2142 = vld [vmem:[%s11 + $0x8] sm:$0xf]
    %v2143 = vld [vmem:[%s11 + $0xc] sm:$0xf]
    %v2144 = vld [vmem:[#allocation11] sm:$0x1]
    %v2146 = vlaneseq
    %v2147 = vshrl.u32 %v2146, 7
    %v2148 = vsub.s32 0, %v2147
    %v2149 = vrot.slane %v2144, %v2148
    %v2155 = vunpack.c.l.b16 %v2140
    %v2156 = vunpack.c.l.b16 %v2141
    %v2157 = vunpack.c.l.b16 %v2142
    %v2158 = vunpack.c.l.b16 %v2143
    %v2159 = vpack.c.b16 %v2156, %v2155
    %v2160 = vpack.c.b16 %v2158, %v2157
    %v2164 = vsel %vm826, %v2136, 0
    %v2167 = vsel %vm826, %v2137, 0
    %v2170 = vsel %vm826, %v2138, 0
    %v2173 = vsel %vm826, %v2139, 0
    %2175 = vmatprep.subr.bf16.mxu0 0
    %2176 = vmatpush1.bf16.msra.mxu0 %v2159
    %2177 = vmatprep.subr.bf16.mxu0 0
    %2178 = vmatpush1.bf16.msra.mxu0 %v2160
    %2179 = vmatprep.subr.bf16.mxu0 0
    %2180 = vmatpush1.bf16.msra.mxu0 0
    %2181 = vmatprep.subr.bf16.mxu0 0
    %2182 = vmatpush1.bf16.msra.mxu0 0
    %2183 = vmatprep.subr.bf16.mxu0 0
    %2184 = vmatpush1.bf16.msra.mxu0 0
    %2185 = vmatprep.subr.bf16.mxu0 0
    %2186 = vmatpush1.bf16.msra.mxu0 0
    %2187 = vmatprep.subr.bf16.mxu0 0
    %2188 = vmatpush1.bf16.msra.mxu0 0
    %2189 = vmatprep.subr.bf16.mxu0 0
    %2190 = vmatpush1.bf16.msra.mxu0 0
    %2191 = vmatprep.subr.bf16.mxu0 0
    %2192 = vmatpush1.bf16.msra.mxu0 0
    %2193 = vmatprep.subr.bf16.mxu0 0
    %2194 = vmatpush1.bf16.msra.mxu0 0
    %2195 = vmatprep.subr.bf16.mxu0 0
    %2196 = vmatpush1.bf16.msra.mxu0 0
    %2197 = vmatprep.subr.bf16.mxu0 0
    %2198 = vmatpush1.bf16.msra.mxu0 0
    %2199 = vmatprep.subr.bf16.mxu0 0
    %2200 = vmatpush1.bf16.msra.mxu0 0
    %2201 = vmatprep.subr.bf16.mxu0 0
    %2202 = vmatpush1.bf16.msra.mxu0 0
    %2203 = vmatprep.subr.bf16.mxu0 0
    %2204 = vmatpush1.bf16.msra.mxu0 0
    %2205 = vmatprep.subr.bf16.mxu0 0
    %2206 = vmatpush1.bf16.msra.mxu0 0
    %2207 = vmatprep.mubr.bf16.mxu0 0
    %2208 = vmatmul.mubr.bf16.gmra.mrb[0].mxu0 %v2164
    %v2209 = vpop.f32.mrb[0].mxu0
    %v2210 = vadd.f32 %v2149, %v2209
    %v2211 = vpop.f32.mrb[0].mxu0
    %v2212 = vpop.f32.mrb[0].mxu0
    %v2213 = vadd.f32 %v2149, %v2212
    %v2214 = vpop.f32.mrb[0].mxu0
    %2215 = vmatprep.mubr.bf16.mxu0 0
    %2216 = vmatmul.mubr.bf16.gmra.mrb[0].mxu0 %v2167
    %v2217 = vpop.f32.mrb[0].mxu0
    %v2218 = vadd.f32 %v2149, %v2217
    %v2219 = vpop.f32.mrb[0].mxu0
    %v2220 = vpop.f32.mrb[0].mxu0
    %v2221 = vadd.f32 %v2149, %v2220
    %v2222 = vpop.f32.mrb[0].mxu0
    %2223 = vmatprep.mubr.bf16.mxu0 0
    %2224 = vmatmul.mubr.bf16.gmra.mrb[0].mxu0 %v2170
    %v2225 = vpop.f32.mrb[0].mxu0
    %v2226 = vadd.f32 %v2149, %v2225
    %v2227 = vpop.f32.mrb[0].mxu0
    %v2228 = vpop.f32.mrb[0].mxu0
    %v2229 = vadd.f32 %v2149, %v2228
    %v2230 = vpop.f32.mrb[0].mxu0
    %2231 = vmatprep.mubr.bf16.mxu0 0
    %2232 = vmatmul.mubr.bf16.gmra.mrb[0].mxu0 %v2173
    %v2233 = vpop.f32.mrb[0].mxu0
    %v2234 = vadd.f32 %v2149, %v2233
    %v2235 = vpop.f32.mrb[0].mxu0
    %v2236 = vpop.f32.mrb[0].mxu0
    %v2237 = vadd.f32 %v2149, %v2236
    %v2238 = vpop.f32.mrb[0].mxu0
    %2239 = vdwg.mxu0
    %v2240 = vld [vmem:[#allocation13] sm:$0x1]
    %v2241 = vld [vmem:[#allocation14] sm:$0x1]
    %vm2242 = vcmask 195584
    %v2243 = vsel %vm2242, %v2210, 0.0
    %v2244 = vsel %vm2242, %v2213, 0.0
    %v2245 = vadd.f32 %v2243, %v2244
    %v2246 = vsel %vm2242, %v2218, 0.0
    %v2247 = vadd.f32 %v2245, %v2246
    %v2248 = vsel %vm2242, %v2221, 0.0
    %v2249 = vadd.f32 %v2247, %v2248
    %v2250 = vsel %vm2242, %v2226, 0.0
    %v2251 = vadd.f32 %v2249, %v2250
    %v2252 = vsel %vm2242, %v2229, 0.0
    %v2253 = vadd.f32 %v2251, %v2252
    %v2254 = vsel %vm2242, %v2234, 0.0
    %v2255 = vadd.f32 %v2253, %v2254
    %v2256 = vsel %vm2242, %v2237, 0.0
    %v2257 = vadd.f32 %v2255, %v2256
    %v2258 = vrot.slane %v2257, 4
    %v2259 = vadd.f32 %v2257, %v2258
    %v2260 = vrot.slane %v2259, 2
    %v2261 = vadd.f32 %v2259, %v2260
    %v2262 = vrot.slane %v2261, 1
    %v2263 = vadd.f32 %v2261, %v2262
    %v2264 = vmul.f32 %v2263, 0.015625
    %v2265 = vmul.f32 %v2210, %v2210
    %v2266 = vmul.f32 %v2213, %v2213
    %v2267 = vmul.f32 %v2218, %v2218
    %v2268 = vmul.f32 %v2221, %v2221
    %v2269 = vmul.f32 %v2226, %v2226
    %v2270 = vmul.f32 %v2229, %v2229
    %v2271 = vmul.f32 %v2234, %v2234
    %v2272 = vmul.f32 %v2237, %v2237
    %v2273 = vsel %vm2242, %v2265, 0.0
    %v2274 = vsel %vm2242, %v2266, 0.0
    %v2275 = vadd.f32 %v2273, %v2274
    %v2276 = vsel %vm2242, %v2267, 0.0
    %v2277 = vadd.f32 %v2275, %v2276
    %v2278 = vsel %vm2242, %v2268, 0.0
    %v2279 = vadd.f32 %v2277, %v2278
    %v2280 = vsel %vm2242, %v2269, 0.0
    %v2281 = vadd.f32 %v2279, %v2280
    %v2282 = vsel %vm2242, %v2270, 0.0
    %v2283 = vadd.f32 %v2281, %v2282
    %v2284 = vsel %vm2242, %v2271, 0.0
    %v2285 = vadd.f32 %v2283, %v2284
    %v2286 = vsel %vm2242, %v2272, 0.0
    %v2287 = vadd.f32 %v2285, %v2286
    %v2288 = vrot.slane %v2287, 4
    %v2289 = vadd.f32 %v2287, %v2288
    %v2290 = vrot.slane %v2289, 2
    %v2291 = vadd.f32 %v2289, %v2290
    %v2292 = vrot.slane %v2291, 1
    %v2293 = vadd.f32 %v2291, %v2292
    %v2294 = vmul.f32 %v2293, 0.015625
    %v2295 = vmul.f32 %v2264, %v2264
    %v2296 = vsub.f32 %v2294, %v2295
    %v2297 = vsub.f32 %v2210, %v2264
    %v2298 = vsub.f32 %v2213, %v2264
    %v2299 = vsub.f32 %v2218, %v2264
    %v2300 = vsub.f32 %v2221, %v2264
    %v2301 = vsub.f32 %v2226, %v2264
    %v2302 = vsub.f32 %v2229, %v2264
    %v2303 = vsub.f32 %v2234, %v2264
    %v2304 = vsub.f32 %v2237, %v2264
    %v2305 = vadd.f32 %v2296, 1e-05
    %v2306 = vrsqrt.pop %v2305
    %v2307 = vmul.f32 %v2297, %v2306
    %v2308 = vmul.f32 %v2298, %v2306
    %v2309 = vmul.f32 %v2299, %v2306
    %v2310 = vmul.f32 %v2300, %v2306
    %v2311 = vmul.f32 %v2301, %v2306
    %v2312 = vmul.f32 %v2302, %v2306
    %v2313 = vmul.f32 %v2303, %v2306
    %v2314 = vmul.f32 %v2304, %v2306
    %v2316 = vlaneseq
    %v2317 = vshrl.u32 %v2316, 7
    %v2318 = vsub.s32 0, %v2317
    %v2319 = vrot.slane %v2240, %v2318
    %v2321 = vmul.f32 %v2307, %v2319
    %v2322 = vmul.f32 %v2308, %v2319
    %v2323 = vmul.f32 %v2309, %v2319
    %v2324 = vmul.f32 %v2310, %v2319
    %v2325 = vmul.f32 %v2311, %v2319
    %v2326 = vmul.f32 %v2312, %v2319
    %v2327 = vmul.f32 %v2313, %v2319
    %v2328 = vmul.f32 %v2314, %v2319
    %v2330 = vlaneseq
    %v2331 = vshrl.u32 %v2330, 7
    %v2332 = vsub.s32 0, %v2331
    %v2333 = vrot.slane %v2241, %v2332
    %v2335 = vadd.f32 %v2321, %v2333
    %v2336 = vadd.f32 %v2322, %v2333
    %v2337 = vadd.f32 %v2323, %v2333
    %v2338 = vadd.f32 %v2324, %v2333
    %v2339 = vadd.f32 %v2325, %v2333
    %v2340 = vadd.f32 %v2326, %v2333
    %v2341 = vadd.f32 %v2327, %v2333
    %v2342 = vadd.f32 %v2328, %v2333
    %vm2343 = vcmp.gt.f32.partialorder %v2335, 0.0
    %vm2344 = vcmp.gt.f32.partialorder %v2336, 0.0
    %vm2345 = vcmp.gt.f32.partialorder %v2337, 0.0
    %vm2346 = vcmp.gt.f32.partialorder %v2338, 0.0
    %vm2347 = vcmp.gt.f32.partialorder %v2339, 0.0
    %vm2348 = vcmp.gt.f32.partialorder %v2340, 0.0
    %vm2349 = vcmp.gt.f32.partialorder %v2341, 0.0
    %vm2350 = vcmp.gt.f32.partialorder %v2342, 0.0
    %v2351 = vmin.f32 %v2335, 0.0
    %v2352 = vmin.f32 %v2336, 0.0
    %v2353 = vmin.f32 %v2337, 0.0
    %v2354 = vmin.f32 %v2338, 0.0
    %v2355 = vmin.f32 %v2339, 0.0
    %v2356 = vmin.f32 %v2340, 0.0
    %v2357 = vmin.f32 %v2341, 0.0
    %v2358 = vmin.f32 %v2342, 0.0
    %v2359 = vmul.f32 %v2351, 1.442695
    %v2360 = vpow.pop %v2359
    %v2361 = vmul.f32 %v2352, 1.442695
    %v2362 = vpow.pop %v2361
    %v2363 = vmul.f32 %v2353, 1.442695
    %v2364 = vpow.pop %v2363
    %v2365 = vmul.f32 %v2354, 1.442695
    %v2366 = vpow.pop %v2365
    %v2367 = vmul.f32 %v2355, 1.442695
    %v2368 = vpow.pop %v2367
    %v2369 = vmul.f32 %v2356, 1.442695
    %v2370 = vpow.pop %v2369
    %v2371 = vmul.f32 %v2357, 1.442695
    %v2372 = vpow.pop %v2371
    %v2373 = vmul.f32 %v2358, 1.442695
    %v2374 = vpow.pop %v2373
    %v2375 = vsub.f32 %v2360, 1.0
    %v2376 = vsub.f32 %v2362, 1.0
    %v2377 = vsub.f32 %v2364, 1.0
    %v2378 = vsub.f32 %v2366, 1.0
    %v2379 = vsub.f32 %v2368, 1.0
    %v2380 = vsub.f32 %v2370, 1.0
    %v2381 = vsub.f32 %v2372, 1.0
    %v2382 = vsub.f32 %v2374, 1.0
    %v2383 = vsel %vm2343, %v2335, %v2375
    %v2384 = vsel %vm2344, %v2336, %v2376
    %v2385 = vsel %vm2345, %v2337, %v2377
    %v2386 = vsel %vm2346, %v2338, %v2378
    %v2387 = vsel %vm2347, %v2339, %v2379
    %v2388 = vsel %vm2348, %v2340, %v2380
    %v2389 = vsel %vm2349, %v2341, %v2381
    %v2390 = vsel %vm2350, %v2342, %v2382
    %v2391 = vpack.c.bf16 %v2384, %v2383
    %v2392 = vpack.c.bf16 %v2386, %v2385
    %v2393 = vpack.c.bf16 %v2388, %v2387
    %v2394 = vpack.c.bf16 %v2390, %v2389
    %v2395 = vld [vmem:[%s15] sm:$0xf]
    %v2396 = vld [vmem:[%s15 + $0x4] sm:$0xf]
    %v2397 = vld [vmem:[%s15 + $0x8] sm:$0xf]
    %v2398 = vld [vmem:[#allocation16] sm:$0x1]
    %v2400 = vlaneseq
    %v2401 = vshrl.u32 %v2400, 7
    %v2402 = vsub.s32 0, %v2401
    %v2403 = vrot.slane %v2398, %v2402
    %v2408 = vunpack.c.l.b16 %v2395
    %v2409 = vunpack.c.l.b16 %v2396
    %v2410 = vunpack.c.l.b16 %v2397
    %v2411 = vpack.c.b16 %v2409, %v2408
    %v2412 = vpack.c.b16 %v2410, %v2410
    %v2415 = vsel %vm2242, %v2391, 0
    %v2418 = vsel %vm2242, %v2392, 0
    %v2421 = vsel %vm2242, %v2393, 0
    %v2424 = vsel %vm2242, %v2394, 0
    %vm2426 = vcmask 1043456
    %v2428 = vsel %vm2426, %v2412, 0
    %2430 = vmatprep.subr.bf16.mxu0 0
    %2431 = vmatpush1.bf16.msra.mxu0 %v2411
    %2432 = vmatprep.subr.bf16.mxu0 0
    %2433 = vmatpush1.bf16.msra.mxu0 %v2428
    %2434 = vmatprep.subr.bf16.mxu0 0
    %2435 = vmatpush1.bf16.msra.mxu0 0
    %2436 = vmatprep.subr.bf16.mxu0 0
    %2437 = vmatpush1.bf16.msra.mxu0 0
    %2438 = vmatprep.subr.bf16.mxu0 0
    %2439 = vmatpush1.bf16.msra.mxu0 0
    %2440 = vmatprep.subr.bf16.mxu0 0
    %2441 = vmatpush1.bf16.msra.mxu0 0
    %2442 = vmatprep.subr.bf16.mxu0 0
    %2443 = vmatpush1.bf16.msra.mxu0 0
    %2444 = vmatprep.subr.bf16.mxu0 0
    %2445 = vmatpush1.bf16.msra.mxu0 0
    %2446 = vmatprep.subr.bf16.mxu0 0
    %2447 = vmatpush1.bf16.msra.mxu0 0
    %2448 = vmatprep.subr.bf16.mxu0 0
    %2449 = vmatpush1.bf16.msra.mxu0 0
    %2450 = vmatprep.subr.bf16.mxu0 0
    %2451 = vmatpush1.bf16.msra.mxu0 0
    %2452 = vmatprep.subr.bf16.mxu0 0
    %2453 = vmatpush1.bf16.msra.mxu0 0
    %2454 = vmatprep.subr.bf16.mxu0 0
    %2455 = vmatpush1.bf16.msra.mxu0 0
    %2456 = vmatprep.subr.bf16.mxu0 0
    %2457 = vmatpush1.bf16.msra.mxu0 0
    %2458 = vmatprep.subr.bf16.mxu0 0
    %2459 = vmatpush1.bf16.msra.mxu0 0
    %2460 = vmatprep.subr.bf16.mxu0 0
    %2461 = vmatpush1.bf16.msra.mxu0 0
    %2462 = vmatprep.mubr.bf16.mxu0 0
    %2463 = vmatmul.mubr.bf16.gmra.mrb[0].mxu0 %v2415
    %v2464 = vpop.f32.mrb[0].mxu0
    %v2465 = vadd.f32 %v2403, %v2464
    %v2466 = vpop.f32.mrb[0].mxu0
    %v2467 = vpop.f32.mrb[0].mxu0
    %v2468 = vadd.f32 %v2403, %v2467
    %v2469 = vpop.f32.mrb[0].mxu0
    %2470 = vmatprep.mubr.bf16.mxu0 0
    %2471 = vmatmul.mubr.bf16.gmra.mrb[0].mxu0 %v2418
    %v2472 = vpop.f32.mrb[0].mxu0
    %v2473 = vadd.f32 %v2403, %v2472
    %v2474 = vpop.f32.mrb[0].mxu0
    %v2475 = vpop.f32.mrb[0].mxu0
    %v2476 = vadd.f32 %v2403, %v2475
    %v2477 = vpop.f32.mrb[0].mxu0
    %2478 = vmatprep.mubr.bf16.mxu0 0
    %2479 = vmatmul.mubr.bf16.gmra.mrb[0].mxu0 %v2421
    %v2480 = vpop.f32.mrb[0].mxu0
    %v2481 = vadd.f32 %v2403, %v2480
    %v2482 = vpop.f32.mrb[0].mxu0
    %v2483 = vpop.f32.mrb[0].mxu0
    %v2484 = vadd.f32 %v2403, %v2483
    %v2485 = vpop.f32.mrb[0].mxu0
    %2486 = vmatprep.mubr.bf16.mxu0 0
    %2487 = vmatmul.mubr.bf16.gmra.mrb[0].mxu0 %v2424
    %v2488 = vpop.f32.mrb[0].mxu0
    %v2489 = vadd.f32 %v2403, %v2488
    %v2490 = vpop.f32.mrb[0].mxu0
    %v2491 = vpop.f32.mrb[0].mxu0
    %v2492 = vadd.f32 %v2403, %v2491
    %v2493 = vpop.f32.mrb[0].mxu0
    %2494 = vdwg.mxu0
    %v2495 = vld [vmem:[#allocation17] sm:$0x1]
    %v2496 = vld [vmem:[#allocation19] sm:$0x1]
    %v2497 = vsel %vm563, %v2465, 0.0
    %v2498 = vsel %vm563, %v2468, 0.0
    %v2499 = vadd.f32 %v2497, %v2498
    %v2500 = vsel %vm563, %v2473, 0.0
    %v2501 = vadd.f32 %v2499, %v2500
    %v2502 = vsel %vm563, %v2476, 0.0
    %v2503 = vadd.f32 %v2501, %v2502
    %v2504 = vsel %vm563, %v2481, 0.0
    %v2505 = vadd.f32 %v2503, %v2504
    %v2506 = vsel %vm563, %v2484, 0.0
    %v2507 = vadd.f32 %v2505, %v2506
    %v2508 = vsel %vm563, %v2489, 0.0
    %v2509 = vadd.f32 %v2507, %v2508
    %v2510 = vsel %vm563, %v2492, 0.0
    %v2511 = vadd.f32 %v2509, %v2510
    %v2512 = vrot.slane %v2511, 4
    %v2513 = vadd.f32 %v2511, %v2512
    %v2514 = vrot.slane %v2513, 2
    %v2515 = vadd.f32 %v2513, %v2514
    %v2516 = vrot.slane %v2515, 1
    %v2517 = vadd.f32 %v2515, %v2516
    %v2518 = vmul.f32 %v2517, 0.015625
    %v2519 = vmul.f32 %v2465, %v2465
    %v2520 = vmul.f32 %v2468, %v2468
    %v2521 = vmul.f32 %v2473, %v2473
    %v2522 = vmul.f32 %v2476, %v2476
    %v2523 = vmul.f32 %v2481, %v2481
    %v2524 = vmul.f32 %v2484, %v2484
    %v2525 = vmul.f32 %v2489, %v2489
    %v2526 = vmul.f32 %v2492, %v2492
    %v2527 = vsel %vm563, %v2519, 0.0
    %v2528 = vsel %vm563, %v2520, 0.0
    %v2529 = vadd.f32 %v2527, %v2528
    %v2530 = vsel %vm563, %v2521, 0.0
    %v2531 = vadd.f32 %v2529, %v2530
    %v2532 = vsel %vm563, %v2522, 0.0
    %v2533 = vadd.f32 %v2531, %v2532
    %v2534 = vsel %vm563, %v2523, 0.0
    %v2535 = vadd.f32 %v2533, %v2534
    %v2536 = vsel %vm563, %v2524, 0.0
    %v2537 = vadd.f32 %v2535, %v2536
    %v2538 = vsel %vm563, %v2525, 0.0
    %v2539 = vadd.f32 %v2537, %v2538
    %v2540 = vsel %vm563, %v2526, 0.0
    %v2541 = vadd.f32 %v2539, %v2540
    %v2542 = vrot.slane %v2541, 4
    %v2543 = vadd.f32 %v2541, %v2542
    %v2544 = vrot.slane %v2543, 2
    %v2545 = vadd.f32 %v2543, %v2544
    %v2546 = vrot.slane %v2545, 1
    %v2547 = vadd.f32 %v2545, %v2546
    %v2548 = vmul.f32 %v2547, 0.015625
    %v2549 = vmul.f32 %v2518, %v2518
    %v2550 = vsub.f32 %v2548, %v2549
    %v2551 = vsub.f32 %v2465, %v2518
    %v2552 = vsub.f32 %v2468, %v2518
    %v2553 = vsub.f32 %v2473, %v2518
    %v2554 = vsub.f32 %v2476, %v2518
    %v2555 = vsub.f32 %v2481, %v2518
    %v2556 = vsub.f32 %v2484, %v2518
    %v2557 = vsub.f32 %v2489, %v2518
    %v2558 = vsub.f32 %v2492, %v2518
    %v2559 = vadd.f32 %v2550, 1e-05
    %v2560 = vrsqrt.pop %v2559
    %v2561 = vmul.f32 %v2551, %v2560
    %v2562 = vmul.f32 %v2552, %v2560
    %v2563 = vmul.f32 %v2553, %v2560
    %v2564 = vmul.f32 %v2554, %v2560
    %v2565 = vmul.f32 %v2555, %v2560
    %v2566 = vmul.f32 %v2556, %v2560
    %v2567 = vmul.f32 %v2557, %v2560
    %v2568 = vmul.f32 %v2558, %v2560
    %v2570 = vlaneseq
    %v2571 = vshrl.u32 %v2570, 7
    %v2572 = vsub.s32 0, %v2571
    %v2573 = vrot.slane %v2495, %v2572
    %v2575 = vmul.f32 %v2561, %v2573
    %v2576 = vmul.f32 %v2562, %v2573
    %v2577 = vmul.f32 %v2563, %v2573
    %v2578 = vmul.f32 %v2564, %v2573
    %v2579 = vmul.f32 %v2565, %v2573
    %v2580 = vmul.f32 %v2566, %v2573
    %v2581 = vmul.f32 %v2567, %v2573
    %v2582 = vmul.f32 %v2568, %v2573
    %v2584 = vlaneseq
    %v2585 = vshrl.u32 %v2584, 7
    %v2586 = vsub.s32 0, %v2585
    %v2587 = vrot.slane %v2496, %v2586
    %v2589 = vadd.f32 %v2575, %v2587
    %v2590 = vadd.f32 %v2576, %v2587
    %v2591 = vadd.f32 %v2577, %v2587
    %v2592 = vadd.f32 %v2578, %v2587
    %v2593 = vadd.f32 %v2579, %v2587
    %v2594 = vadd.f32 %v2580, %v2587
    %v2595 = vadd.f32 %v2581, %v2587
    %v2596 = vadd.f32 %v2582, %v2587
    %vm2597 = vcmp.gt.f32.partialorder %v2589, 0.0
    %vm2598 = vcmp.gt.f32.partialorder %v2590, 0.0
    %vm2599 = vcmp.gt.f32.partialorder %v2591, 0.0
    %vm2600 = vcmp.gt.f32.partialorder %v2592, 0.0
    %vm2601 = vcmp.gt.f32.partialorder %v2593, 0.0
    %vm2602 = vcmp.gt.f32.partialorder %v2594, 0.0
    %vm2603 = vcmp.gt.f32.partialorder %v2595, 0.0
    %vm2604 = vcmp.gt.f32.partialorder %v2596, 0.0
    %v2605 = vmin.f32 %v2589, 0.0
    %v2606 = vmin.f32 %v2590, 0.0
    %v2607 = vmin.f32 %v2591, 0.0
    %v2608 = vmin.f32 %v2592, 0.0
    %v2609 = vmin.f32 %v2593, 0.0
    %v2610 = vmin.f32 %v2594, 0.0
    %v2611 = vmin.f32 %v2595, 0.0
    %v2612 = vmin.f32 %v2596, 0.0
    %v2613 = vmul.f32 %v2605, 1.442695
    %v2614 = vpow.pop %v2613
    %v2615 = vmul.f32 %v2606, 1.442695
    %v2616 = vpow.pop %v2615
    %v2617 = vmul.f32 %v2607, 1.442695
    %v2618 = vpow.pop %v2617
    %v2619 = vmul.f32 %v2608, 1.442695
    %v2620 = vpow.pop %v2619
    %v2621 = vmul.f32 %v2609, 1.442695
    %v2622 = vpow.pop %v2621
    %v2623 = vmul.f32 %v2610, 1.442695
    %v2624 = vpow.pop %v2623
    %v2625 = vmul.f32 %v2611, 1.442695
    %v2626 = vpow.pop %v2625
    %v2627 = vmul.f32 %v2612, 1.442695
    %v2628 = vpow.pop %v2627
    %v2629 = vsub.f32 %v2614, 1.0
    %v2630 = vsub.f32 %v2616, 1.0
    %v2631 = vsub.f32 %v2618, 1.0
    %v2632 = vsub.f32 %v2620, 1.0
    %v2633 = vsub.f32 %v2622, 1.0
    %v2634 = vsub.f32 %v2624, 1.0
    %v2635 = vsub.f32 %v2626, 1.0
    %v2636 = vsub.f32 %v2628, 1.0
    %v2637 = vsel %vm2597, %v2589, %v2629
    %v2638 = vsel %vm2598, %v2590, %v2630
    %v2639 = vsel %vm2599, %v2591, %v2631
    %v2640 = vsel %vm2600, %v2592, %v2632
    %v2641 = vsel %vm2601, %v2593, %v2633
    %v2642 = vsel %vm2602, %v2594, %v2634
    %v2643 = vsel %vm2603, %v2595, %v2635
    %v2644 = vsel %vm2604, %v2596, %v2636
    %v2645 = vpack.c.bf16 %v2638, %v2637
    %v2646 = vpack.c.bf16 %v2640, %v2639
    %v2647 = vpack.c.bf16 %v2642, %v2641
    %v2648 = vpack.c.bf16 %v2644, %v2643
    %v2649 = vld [vmem:[%s19] sm:$0xf]
    %v2650 = vld [vmem:[%s19 + $0x4] sm:$0xf]
    %v2651 = vld [vmem:[#allocation20] sm:$0x1]
    %v2653 = vlaneseq
    %v2654 = vshrl.u32 %v2653, 7
    %v2655 = vsub.s32 0, %v2654
    %v2656 = vrot.slane %v2651, %v2655
    %v2660 = vunpack.c.l.b16 %v2649
    %v2661 = vunpack.c.l.b16 %v2650
    %v2662 = vpack.c.b16 %v2661, %v2660
    %v2665 = vsel %vm563, %v2645, 0
    %v2668 = vsel %vm563, %v2646, 0
    %v2671 = vsel %vm563, %v2647, 0
    %v2674 = vsel %vm563, %v2648, 0
    %2676 = vmatprep.subr.bf16.mxu0 0
    %2677 = vmatpush1.bf16.msra.mxu0 %v2662
    %2678 = vmatprep.subr.bf16.mxu0 0
    %2679 = vmatpush1.bf16.msra.mxu0 0
    %2680 = vmatprep.subr.bf16.mxu0 0
    %2681 = vmatpush1.bf16.msra.mxu0 0
    %2682 = vmatprep.subr.bf16.mxu0 0
    %2683 = vmatpush1.bf16.msra.mxu0 0
    %2684 = vmatprep.subr.bf16.mxu0 0
    %2685 = vmatpush1.bf16.msra.mxu0 0
    %2686 = vmatprep.subr.bf16.mxu0 0
    %2687 = vmatpush1.bf16.msra.mxu0 0
    %2688 = vmatprep.subr.bf16.mxu0 0
    %2689 = vmatpush1.bf16.msra.mxu0 0
    %2690 = vmatprep.subr.bf16.mxu0 0
    %2691 = vmatpush1.bf16.msra.mxu0 0
    %2692 = vmatprep.subr.bf16.mxu0 0
    %2693 = vmatpush1.bf16.msra.mxu0 0
    %2694 = vmatprep.subr.bf16.mxu0 0
    %2695 = vmatpush1.bf16.msra.mxu0 0
    %2696 = vmatprep.subr.bf16.mxu0 0
    %2697 = vmatpush1.bf16.msra.mxu0 0
    %2698 = vmatprep.subr.bf16.mxu0 0
    %2699 = vmatpush1.bf16.msra.mxu0 0
    %2700 = vmatprep.subr.bf16.mxu0 0
    %2701 = vmatpush1.bf16.msra.mxu0 0
    %2702 = vmatprep.subr.bf16.mxu0 0
    %2703 = vmatpush1.bf16.msra.mxu0 0
    %2704 = vmatprep.subr.bf16.mxu0 0
    %2705 = vmatpush1.bf16.msra.mxu0 0
    %2706 = vmatprep.subr.bf16.mxu0 0
    %2707 = vmatpush1.bf16.msra.mxu0 0
    %2708 = vmatprep.mubr.bf16.mxu0 0
    %2709 = vmatmul.mubr.bf16.gmra.mrb[0].mxu0 %v2665
    %v2710 = vpop.f32.mrb[0].mxu0
    %v2711 = vadd.f32 %v2656, %v2710
    %v2712 = vpop.f32.mrb[0].mxu0
    %v2713 = vpop.f32.mrb[0].mxu0
    %v2714 = vadd.f32 %v2656, %v2713
    %v2715 = vpop.f32.mrb[0].mxu0
    %2716 = vmatprep.mubr.bf16.mxu0 0
    %2717 = vmatmul.mubr.bf16.gmra.mrb[0].mxu0 %v2668
    %v2718 = vpop.f32.mrb[0].mxu0
    %v2719 = vadd.f32 %v2656, %v2718
    %v2720 = vpop.f32.mrb[0].mxu0
    %v2721 = vpop.f32.mrb[0].mxu0
    %v2722 = vadd.f32 %v2656, %v2721
    %v2723 = vpop.f32.mrb[0].mxu0
    %2724 = vmatprep.mubr.bf16.mxu0 0
    %2725 = vmatmul.mubr.bf16.gmra.mrb[0].mxu0 %v2671
    %v2726 = vpop.f32.mrb[0].mxu0
    %v2727 = vadd.f32 %v2656, %v2726
    %v2728 = vpop.f32.mrb[0].mxu0
    %v2729 = vpop.f32.mrb[0].mxu0
    %v2730 = vadd.f32 %v2656, %v2729
    %v2731 = vpop.f32.mrb[0].mxu0
    %2732 = vmatprep.mubr.bf16.mxu0 0
    %2733 = vmatmul.mubr.bf16.gmra.mrb[0].mxu0 %v2674
    %v2734 = vpop.f32.mrb[0].mxu0
    %v2735 = vadd.f32 %v2656, %v2734
    %v2736 = vpop.f32.mrb[0].mxu0
    %v2737 = vpop.f32.mrb[0].mxu0
    %v2738 = vadd.f32 %v2656, %v2737
    %v2739 = vpop.f32.mrb[0].mxu0
    %2740 = vdwg.mxu0
    %v2741 = vld [vmem:[#allocation22] sm:$0x1]
    %v2742 = vld [vmem:[#allocation23] sm:$0x1]
    %v2743 = vsel %vm563, %v2711, 0.0
    %v2744 = vsel %vm563, %v2714, 0.0
    %v2745 = vadd.f32 %v2743, %v2744
    %v2746 = vsel %vm563, %v2719, 0.0
    %v2747 = vadd.f32 %v2745, %v2746
    %v2748 = vsel %vm563, %v2722, 0.0
    %v2749 = vadd.f32 %v2747, %v2748
    %v2750 = vsel %vm563, %v2727, 0.0
    %v2751 = vadd.f32 %v2749, %v2750
    %v2752 = vsel %vm563, %v2730, 0.0
    %v2753 = vadd.f32 %v2751, %v2752
    %v2754 = vsel %vm563, %v2735, 0.0
    %v2755 = vadd.f32 %v2753, %v2754
    %v2756 = vsel %vm563, %v2738, 0.0
    %v2757 = vadd.f32 %v2755, %v2756
    %v2758 = vrot.slane %v2757, 4
    %v2759 = vadd.f32 %v2757, %v2758
    %v2760 = vrot.slane %v2759, 2
    %v2761 = vadd.f32 %v2759, %v2760
    %v2762 = vrot.slane %v2761, 1
    %v2763 = vadd.f32 %v2761, %v2762
    %v2764 = vmul.f32 %v2763, 0.015625
    %v2765 = vmul.f32 %v2711, %v2711
    %v2766 = vmul.f32 %v2714, %v2714
    %v2767 = vmul.f32 %v2719, %v2719
    %v2768 = vmul.f32 %v2722, %v2722
    %v2769 = vmul.f32 %v2727, %v2727
    %v2770 = vmul.f32 %v2730, %v2730
    %v2771 = vmul.f32 %v2735, %v2735
    %v2772 = vmul.f32 %v2738, %v2738
    %v2773 = vsel %vm563, %v2765, 0.0
    %v2774 = vsel %vm563, %v2766, 0.0
    %v2775 = vadd.f32 %v2773, %v2774
    %v2776 = vsel %vm563, %v2767, 0.0
    %v2777 = vadd.f32 %v2775, %v2776
    %v2778 = vsel %vm563, %v2768, 0.0
    %v2779 = vadd.f32 %v2777, %v2778
    %v2780 = vsel %vm563, %v2769, 0.0
    %v2781 = vadd.f32 %v2779, %v2780
    %v2782 = vsel %vm563, %v2770, 0.0
    %v2783 = vadd.f32 %v2781, %v2782
    %v2784 = vsel %vm563, %v2771, 0.0
    %v2785 = vadd.f32 %v2783, %v2784
    %v2786 = vsel %vm563, %v2772, 0.0
    %v2787 = vadd.f32 %v2785, %v2786
    %v2788 = vrot.slane %v2787, 4
    %v2789 = vadd.f32 %v2787, %v2788
    %v2790 = vrot.slane %v2789, 2
    %v2791 = vadd.f32 %v2789, %v2790
    %v2792 = vrot.slane %v2791, 1
    %v2793 = vadd.f32 %v2791, %v2792
    %v2794 = vmul.f32 %v2793, 0.015625
    %v2795 = vmul.f32 %v2764, %v2764
    %v2796 = vsub.f32 %v2794, %v2795
    %v2797 = vsub.f32 %v2711, %v2764
    %v2798 = vsub.f32 %v2714, %v2764
    %v2799 = vsub.f32 %v2719, %v2764
    %v2800 = vsub.f32 %v2722, %v2764
    %v2801 = vsub.f32 %v2727, %v2764
    %v2802 = vsub.f32 %v2730, %v2764
    %v2803 = vsub.f32 %v2735, %v2764
    %v2804 = vsub.f32 %v2738, %v2764
    %v2805 = vadd.f32 %v2796, 1e-05
    %v2806 = vrsqrt.pop %v2805
    %v2807 = vmul.f32 %v2797, %v2806
    %v2808 = vmul.f32 %v2798, %v2806
    %v2809 = vmul.f32 %v2799, %v2806
    %v2810 = vmul.f32 %v2800, %v2806
    %v2811 = vmul.f32 %v2801, %v2806
    %v2812 = vmul.f32 %v2802, %v2806
    %v2813 = vmul.f32 %v2803, %v2806
    %v2814 = vmul.f32 %v2804, %v2806
    %v2816 = vlaneseq
    %v2817 = vshrl.u32 %v2816, 7
    %v2818 = vsub.s32 0, %v2817
    %v2819 = vrot.slane %v2741, %v2818
    %v2821 = vmul.f32 %v2807, %v2819
    %v2822 = vmul.f32 %v2808, %v2819
    %v2823 = vmul.f32 %v2809, %v2819
    %v2824 = vmul.f32 %v2810, %v2819
    %v2825 = vmul.f32 %v2811, %v2819
    %v2826 = vmul.f32 %v2812, %v2819
    %v2827 = vmul.f32 %v2813, %v2819
    %v2828 = vmul.f32 %v2814, %v2819
    %v2830 = vlaneseq
    %v2831 = vshrl.u32 %v2830, 7
    %v2832 = vsub.s32 0, %v2831
    %v2833 = vrot.slane %v2742, %v2832
    %v2835 = vadd.f32 %v2821, %v2833
    %v2836 = vadd.f32 %v2822, %v2833
    %v2837 = vadd.f32 %v2823, %v2833
    %v2838 = vadd.f32 %v2824, %v2833
    %v2839 = vadd.f32 %v2825, %v2833
    %v2840 = vadd.f32 %v2826, %v2833
    %v2841 = vadd.f32 %v2827, %v2833
    %v2842 = vadd.f32 %v2828, %v2833
    %vm2843 = vcmp.gt.f32.partialorder %v2835, 0.0
    %vm2844 = vcmp.gt.f32.partialorder %v2836, 0.0
    %vm2845 = vcmp.gt.f32.partialorder %v2837, 0.0
    %vm2846 = vcmp.gt.f32.partialorder %v2838, 0.0
    %vm2847 = vcmp.gt.f32.partialorder %v2839, 0.0
    %vm2848 = vcmp.gt.f32.partialorder %v2840, 0.0
    %vm2849 = vcmp.gt.f32.partialorder %v2841, 0.0
    %vm2850 = vcmp.gt.f32.partialorder %v2842, 0.0
    %v2851 = vmin.f32 %v2835, 0.0
    %v2852 = vmin.f32 %v2836, 0.0
    %v2853 = vmin.f32 %v2837, 0.0
    %v2854 = vmin.f32 %v2838, 0.0
    %v2855 = vmin.f32 %v2839, 0.0
    %v2856 = vmin.f32 %v2840, 0.0
    %v2857 = vmin.f32 %v2841, 0.0
    %v2858 = vmin.f32 %v2842, 0.0
    %v2859 = vmul.f32 %v2851, 1.442695
    %v2860 = vpow.pop %v2859
    %v2861 = vmul.f32 %v2852, 1.442695
    %v2862 = vpow.pop %v2861
    %v2863 = vmul.f32 %v2853, 1.442695
    %v2864 = vpow.pop %v2863
    %v2865 = vmul.f32 %v2854, 1.442695
    %v2866 = vpow.pop %v2865
    %v2867 = vmul.f32 %v2855, 1.442695
    %v2868 = vpow.pop %v2867
    %v2869 = vmul.f32 %v2856, 1.442695
    %v2870 = vpow.pop %v2869
    %v2871 = vmul.f32 %v2857, 1.442695
    %v2872 = vpow.pop %v2871
    %v2873 = vmul.f32 %v2858, 1.442695
    %v2874 = vpow.pop %v2873
    %v2875 = vsub.f32 %v2860, 1.0
    %v2876 = vsub.f32 %v2862, 1.0
    %v2877 = vsub.f32 %v2864, 1.0
    %v2878 = vsub.f32 %v2866, 1.0
    %v2879 = vsub.f32 %v2868, 1.0
    %v2880 = vsub.f32 %v2870, 1.0
    %v2881 = vsub.f32 %v2872, 1.0
    %v2882 = vsub.f32 %v2874, 1.0
    %v2883 = vsel %vm2843, %v2835, %v2875
    %v2884 = vsel %vm2844, %v2836, %v2876
    %v2885 = vsel %vm2845, %v2837, %v2877
    %v2886 = vsel %vm2846, %v2838, %v2878
    %v2887 = vsel %vm2847, %v2839, %v2879
    %v2888 = vsel %vm2848, %v2840, %v2880
    %v2889 = vsel %vm2849, %v2841, %v2881
    %v2890 = vsel %vm2850, %v2842, %v2882
    %v2891 = vpack.c.bf16 %v2884, %v2883
    %v2892 = vpack.c.bf16 %v2886, %v2885
    %v2893 = vpack.c.bf16 %v2888, %v2887
    %v2894 = vpack.c.bf16 %v2890, %v2889
    %v2895 = vld [vmem:[%s23] sm:$0xf]
    %v2896 = vld [vmem:[%s23 + $0x4] sm:$0xf]
    %v2897 = vld [vmem:[#allocation25] sm:$0x1]
    %v2899 = vlaneseq
    %v2900 = vshrl.u32 %v2899, 7
    %v2901 = vsub.s32 0, %v2900
    %v2902 = vrot.slane %v2897, %v2901
    %v2906 = vunpack.c.l.b16 %v2895
    %v2907 = vunpack.c.l.b16 %v2896
    %v2908 = vpack.c.b16 %v2907, %v2906
    %v2911 = vsel %vm563, %v2891, 0
    %v2914 = vsel %vm563, %v2892, 0
    %v2917 = vsel %vm563, %v2893, 0
    %v2920 = vsel %vm563, %v2894, 0
    %2922 = vmatprep.subr.bf16.mxu0 0
    %2923 = vmatpush1.bf16.msra.mxu0 %v2908
    %2924 = vmatprep.subr.bf16.mxu0 0
    %2925 = vmatpush1.bf16.msra.mxu0 0
    %2926 = vmatprep.subr.bf16.mxu0 0
    %2927 = vmatpush1.bf16.msra.mxu0 0
    %2928 = vmatprep.subr.bf16.mxu0 0
    %2929 = vmatpush1.bf16.msra.mxu0 0
    %2930 = vmatprep.subr.bf16.mxu0 0
    %2931 = vmatpush1.bf16.msra.mxu0 0
    %2932 = vmatprep.subr.bf16.mxu0 0
    %2933 = vmatpush1.bf16.msra.mxu0 0
    %2934 = vmatprep.subr.bf16.mxu0 0
    %2935 = vmatpush1.bf16.msra.mxu0 0
    %2936 = vmatprep.subr.bf16.mxu0 0
    %2937 = vmatpush1.bf16.msra.mxu0 0
    %2938 = vmatprep.subr.bf16.mxu0 0
    %2939 = vmatpush1.bf16.msra.mxu0 0
    %2940 = vmatprep.subr.bf16.mxu0 0
    %2941 = vmatpush1.bf16.msra.mxu0 0
    %2942 = vmatprep.subr.bf16.mxu0 0
    %2943 = vmatpush1.bf16.msra.mxu0 0
    %2944 = vmatprep.subr.bf16.mxu0 0
    %2945 = vmatpush1.bf16.msra.mxu0 0
    %2946 = vmatprep.subr.bf16.mxu0 0
    %2947 = vmatpush1.bf16.msra.mxu0 0
    %2948 = vmatprep.subr.bf16.mxu0 0
    %2949 = vmatpush1.bf16.msra.mxu0 0
    %2950 = vmatprep.subr.bf16.mxu0 0
    %2951 = vmatpush1.bf16.msra.mxu0 0
    %2952 = vmatprep.subr.bf16.mxu0 0
    %2953 = vmatpush1.bf16.msra.mxu0 0
    %2954 = vmatprep.mubr.bf16.mxu0 0
    %2955 = vmatmul.mubr.bf16.gmra.mrb[0].mxu0 %v2911
    %v2956 = vpop.f32.mrb[0].mxu0
    %v2957 = vadd.f32 %v2902, %v2956
    %v2958 = vpop.f32.mrb[0].mxu0
    %v2959 = vpop.f32.mrb[0].mxu0
    %v2960 = vadd.f32 %v2902, %v2959
    %v2961 = vpop.f32.mrb[0].mxu0
    %2962 = vmatprep.mubr.bf16.mxu0 0
    %2963 = vmatmul.mubr.bf16.gmra.mrb[0].mxu0 %v2914
    %v2964 = vpop.f32.mrb[0].mxu0
    %v2965 = vadd.f32 %v2902, %v2964
    %v2966 = vpop.f32.mrb[0].mxu0
    %v2967 = vpop.f32.mrb[0].mxu0
    %v2968 = vadd.f32 %v2902, %v2967
    %v2969 = vpop.f32.mrb[0].mxu0
    %2970 = vmatprep.mubr.bf16.mxu0 0
    %2971 = vmatmul.mubr.bf16.gmra.mrb[0].mxu0 %v2917
    %v2972 = vpop.f32.mrb[0].mxu0
    %v2973 = vadd.f32 %v2902, %v2972
    %v2974 = vpop.f32.mrb[0].mxu0
    %v2975 = vpop.f32.mrb[0].mxu0
    %v2976 = vadd.f32 %v2902, %v2975
    %v2977 = vpop.f32.mrb[0].mxu0
    %2978 = vmatprep.mubr.bf16.mxu0 0
    %2979 = vmatmul.mubr.bf16.gmra.mrb[0].mxu0 %v2920
    %v2980 = vpop.f32.mrb[0].mxu0
    %v2981 = vadd.f32 %v2902, %v2980
    %v2982 = vpop.f32.mrb[0].mxu0
    %v2983 = vpop.f32.mrb[0].mxu0
    %v2984 = vadd.f32 %v2902, %v2983
    %v2985 = vpop.f32.mrb[0].mxu0
    %2986 = vdwg.mxu0
    %v2987 = vld [vmem:[#allocation26] sm:$0x1]
    %v2988 = vld [vmem:[#allocation28] sm:$0x1]
    %v2989 = vsel %vm563, %v2957, 0.0
    %v2990 = vsel %vm563, %v2960, 0.0
    %v2991 = vadd.f32 %v2989, %v2990
    %v2992 = vsel %vm563, %v2965, 0.0
    %v2993 = vadd.f32 %v2991, %v2992
    %v2994 = vsel %vm563, %v2968, 0.0
    %v2995 = vadd.f32 %v2993, %v2994
    %v2996 = vsel %vm563, %v2973, 0.0
    %v2997 = vadd.f32 %v2995, %v2996
    %v2998 = vsel %vm563, %v2976, 0.0
    %v2999 = vadd.f32 %v2997, %v2998
    %v3000 = vsel %vm563, %v2981, 0.0
    %v3001 = vadd.f32 %v2999, %v3000
    %v3002 = vsel %vm563, %v2984, 0.0
    %v3003 = vadd.f32 %v3001, %v3002
    %v3004 = vrot.slane %v3003, 4
    %v3005 = vadd.f32 %v3003, %v3004
    %v3006 = vrot.slane %v3005, 2
    %v3007 = vadd.f32 %v3005, %v3006
    %v3008 = vrot.slane %v3007, 1
    %v3009 = vadd.f32 %v3007, %v3008
    %v3010 = vmul.f32 %v3009, 0.015625
    %v3011 = vmul.f32 %v2957, %v2957
    %v3012 = vmul.f32 %v2960, %v2960
    %v3013 = vmul.f32 %v2965, %v2965
    %v3014 = vmul.f32 %v2968, %v2968
    %v3015 = vmul.f32 %v2973, %v2973
    %v3016 = vmul.f32 %v2976, %v2976
    %v3017 = vmul.f32 %v2981, %v2981
    %v3018 = vmul.f32 %v2984, %v2984
    %v3019 = vsel %vm563, %v3011, 0.0
    %v3020 = vsel %vm563, %v3012, 0.0
    %v3021 = vadd.f32 %v3019, %v3020
    %v3022 = vsel %vm563, %v3013, 0.0
    %v3023 = vadd.f32 %v3021, %v3022
    %v3024 = vsel %vm563, %v3014, 0.0
    %v3025 = vadd.f32 %v3023, %v3024
    %v3026 = vsel %vm563, %v3015, 0.0
    %v3027 = vadd.f32 %v3025, %v3026
    %v3028 = vsel %vm563, %v3016, 0.0
    %v3029 = vadd.f32 %v3027, %v3028
    %v3030 = vsel %vm563, %v3017, 0.0
    %v3031 = vadd.f32 %v3029, %v3030
    %v3032 = vsel %vm563, %v3018, 0.0
    %v3033 = vadd.f32 %v3031, %v3032
    %v3034 = vrot.slane %v3033, 4
    %v3035 = vadd.f32 %v3033, %v3034
    %v3036 = vrot.slane %v3035, 2
    %v3037 = vadd.f32 %v3035, %v3036
    %v3038 = vrot.slane %v3037, 1
    %v3039 = vadd.f32 %v3037, %v3038
    %v3040 = vmul.f32 %v3039, 0.015625
    %v3041 = vmul.f32 %v3010, %v3010
    %v3042 = vsub.f32 %v3040, %v3041
    %v3043 = vsub.f32 %v2957, %v3010
    %v3044 = vsub.f32 %v2960, %v3010
    %v3045 = vsub.f32 %v2965, %v3010
    %v3046 = vsub.f32 %v2968, %v3010
    %v3047 = vsub.f32 %v2973, %v3010
    %v3048 = vsub.f32 %v2976, %v3010
    %v3049 = vsub.f32 %v2981, %v3010
    %v3050 = vsub.f32 %v2984, %v3010
    %v3051 = vadd.f32 %v3042, 1e-05
    %v3052 = vrsqrt.pop %v3051
    %v3053 = vmul.f32 %v3043, %v3052
    %v3054 = vmul.f32 %v3044, %v3052
    %v3055 = vmul.f32 %v3045, %v3052
    %v3056 = vmul.f32 %v3046, %v3052
    %v3057 = vmul.f32 %v3047, %v3052
    %v3058 = vmul.f32 %v3048, %v3052
    %v3059 = vmul.f32 %v3049, %v3052
    %v3060 = vmul.f32 %v3050, %v3052
    %v3062 = vlaneseq
    %v3063 = vshrl.u32 %v3062, 7
    %v3064 = vsub.s32 0, %v3063
    %v3065 = vrot.slane %v2987, %v3064
    %v3067 = vmul.f32 %v3053, %v3065
    %v3068 = vmul.f32 %v3054, %v3065
    %v3069 = vmul.f32 %v3055, %v3065
    %v3070 = vmul.f32 %v3056, %v3065
    %v3071 = vmul.f32 %v3057, %v3065
    %v3072 = vmul.f32 %v3058, %v3065
    %v3073 = vmul.f32 %v3059, %v3065
    %v3074 = vmul.f32 %v3060, %v3065
    %v3076 = vlaneseq
    %v3077 = vshrl.u32 %v3076, 7
    %v3078 = vsub.s32 0, %v3077
    %v3079 = vrot.slane %v2988, %v3078
    %v3081 = vadd.f32 %v3067, %v3079
    %v3082 = vadd.f32 %v3068, %v3079
    %v3083 = vadd.f32 %v3069, %v3079
    %v3084 = vadd.f32 %v3070, %v3079
    %v3085 = vadd.f32 %v3071, %v3079
    %v3086 = vadd.f32 %v3072, %v3079
    %v3087 = vadd.f32 %v3073, %v3079
    %v3088 = vadd.f32 %v3074, %v3079
    %vm3089 = vcmp.gt.f32.partialorder %v3081, 0.0
    %vm3090 = vcmp.gt.f32.partialorder %v3082, 0.0
    %vm3091 = vcmp.gt.f32.partialorder %v3083, 0.0
    %vm3092 = vcmp.gt.f32.partialorder %v3084, 0.0
    %vm3093 = vcmp.gt.f32.partialorder %v3085, 0.0
    %vm3094 = vcmp.gt.f32.partialorder %v3086, 0.0
    %vm3095 = vcmp.gt.f32.partialorder %v3087, 0.0
    %vm3096 = vcmp.gt.f32.partialorder %v3088, 0.0
    %v3097 = vmin.f32 %v3081, 0.0
    %v3098 = vmin.f32 %v3082, 0.0
    %v3099 = vmin.f32 %v3083, 0.0
    %v3100 = vmin.f32 %v3084, 0.0
    %v3101 = vmin.f32 %v3085, 0.0
    %v3102 = vmin.f32 %v3086, 0.0
    %v3103 = vmin.f32 %v3087, 0.0
    %v3104 = vmin.f32 %v3088, 0.0
    %v3105 = vmul.f32 %v3097, 1.442695
    %v3106 = vpow.pop %v3105
    %v3107 = vmul.f32 %v3098, 1.442695
    %v3108 = vpow.pop %v3107
    %v3109 = vmul.f32 %v3099, 1.442695
    %v3110 = vpow.pop %v3109
    %v3111 = vmul.f32 %v3100, 1.442695
    %v3112 = vpow.pop %v3111
    %v3113 = vmul.f32 %v3101, 1.442695
    %v3114 = vpow.pop %v3113
    %v3115 = vmul.f32 %v3102, 1.442695
    %v3116 = vpow.pop %v3115
    %v3117 = vmul.f32 %v3103, 1.442695
    %v3118 = vpow.pop %v3117
    %v3119 = vmul.f32 %v3104, 1.442695
    %v3120 = vpow.pop %v3119
    %v3121 = vsub.f32 %v3106, 1.0
    %v3122 = vsub.f32 %v3108, 1.0
    %v3123 = vsub.f32 %v3110, 1.0
    %v3124 = vsub.f32 %v3112, 1.0
    %v3125 = vsub.f32 %v3114, 1.0
    %v3126 = vsub.f32 %v3116, 1.0
    %v3127 = vsub.f32 %v3118, 1.0
    %v3128 = vsub.f32 %v3120, 1.0
    %v3129 = vsel %vm3089, %v3081, %v3121
    %v3130 = vsel %vm3090, %v3082, %v3122
    %v3131 = vsel %vm3091, %v3083, %v3123
    %v3132 = vsel %vm3092, %v3084, %v3124
    %v3133 = vsel %vm3093, %v3085, %v3125
    %v3134 = vsel %vm3094, %v3086, %v3126
    %v3135 = vsel %vm3095, %v3087, %v3127
    %v3136 = vsel %vm3096, %v3088, %v3128
    %3137 = vst.msk [vmem:[#allocation29] sm:$0xff] %vm563, %v2637
    %3138 = vst.msk [vmem:[#allocation29 + $0x8] sm:$0xff] %vm563, %v2638
    %3139 = vst.msk [vmem:[#allocation29 + $0x10] sm:$0xff] %vm563, %v2639
    %3140 = vst.msk [vmem:[#allocation29 + $0x18] sm:$0xff] %vm563, %v2640
    %3141 = vst.msk [vmem:[#allocation29 + $0x20] sm:$0xff] %vm563, %v2641
    %3142 = vst.msk [vmem:[#allocation29 + $0x28] sm:$0xff] %vm563, %v2642
    %3143 = vst.msk [vmem:[#allocation29 + $0x30] sm:$0xff] %vm563, %v2643
    %3144 = vst.msk [vmem:[#allocation29 + $0x38] sm:$0xff] %vm563, %v2644
    %3145 = vst.msk [vmem:[#allocation30] sm:$0xff] %vm563, %v3129
    %3146 = vst.msk [vmem:[#allocation30 + $0x8] sm:$0xff] %vm563, %v3130
    %3147 = vst.msk [vmem:[#allocation30 + $0x10] sm:$0xff] %vm563, %v3131
    %3148 = vst.msk [vmem:[#allocation30 + $0x18] sm:$0xff] %vm563, %v3132
    %3149 = vst.msk [vmem:[#allocation30 + $0x20] sm:$0xff] %vm563, %v3133
    %3150 = vst.msk [vmem:[#allocation30 + $0x28] sm:$0xff] %vm563, %v3134
    %3151 = vst.msk [vmem:[#allocation30 + $0x30] sm:$0xff] %vm563, %v3135
    %3152 = vst.msk [vmem:[#allocation30 + $0x38] sm:$0xff] %vm563, %v3136
    // Predicated region
    $region178: #{rnn_energy_net_forward.1} parent=1 // pred_check
      _
    $region179: #{rnn_energy_net_forward.1} parent=1 // pred_check_branch
      %3154 = sbr.rel (0) target = $region181
    $region180: #{rnn_energy_net_forward.1} parent=1 // pred_region
      %s3156 = ssub.s32 1024, 1024
      %3157 = vsyncadd [#allocation4], %s3156
      %s3158 = sshll.u32 [#allocation29], 4
      %s3159 = int_to_ptr.vmem [resolvable:$true] %s3158
      %3164 = dma.vmem_to_hbm [thread:$0]  %s3159, 1024, %s27, [#allocation4], 128, 128, 8
    $region181: #{rnn_energy_net_forward.1} parent=1 // pred_fallthru
      _
    // Predicated region
    $region182: #{rnn_energy_net_forward.1} parent=1 // pred_check
      _
    $region183: #{rnn_energy_net_forward.1} parent=1 // pred_check_branch
      %3166 = sbr.rel (0) target = $region185
    $region184: #{rnn_energy_net_forward.1} parent=1 // pred_region
      %s3168 = ssub.s32 1024, 1024
      %3169 = vsyncadd [#allocation31], %s3168
      %s3170 = sshll.u32 [#allocation30], 4
      %s3171 = int_to_ptr.vmem [resolvable:$true] %s3170
      %3176 = dma.vmem_to_hbm [thread:$0]  %s3171, 1024, %s28, [#allocation31], 128, 128, 8
    $region185: #{rnn_energy_net_forward.1} parent=1 // pred_fallthru
      _
    // Predicated region
    $region186: #{rnn_energy_net_forward.1} parent=1 // pred_check
      _
    $region187: #{rnn_energy_net_forward.1} parent=1 // pred_check_branch
      %3178 = sbr.rel (0) target = $region189
    $region188: #{rnn_energy_net_forward.1} parent=1 // pred_region
      %3179 = dma.done [#allocation4], 1024
    $region189: #{rnn_energy_net_forward.1} parent=1 // pred_fallthru
      _
    // Predicated region
    $region190: #{rnn_energy_net_forward.1} parent=1 // pred_check
      _
    $region191: #{rnn_energy_net_forward.1} parent=1 // pred_check_branch
      %3181 = sbr.rel (0) target = $region193
    $region192: #{rnn_energy_net_forward.1} parent=1 // pred_region
      %3182 = dma.done [#allocation31], 1024
    $region193: #{rnn_energy_net_forward.1} parent=1 // pred_fallthru
      _
    %3183 = vsyncpa [#allocation3], 1
    %3184 = vsyncpa [#allocation6], 1
    %3185 = vsyncpa [#allocation9], 1
    %3186 = vsyncpa [#allocation12], 1
    %3187 = vsyncpa [#allocation15], 1
    %3188 = vsyncpa [#allocation18], 1
    %3189 = vsyncpa [#allocation21], 1
    %3190 = vsyncpa [#allocation24], 1
    %3191 = vsyncpa [#allocation27], 1
    %3192 = vsyncpa [#allocation4], 1
    %3193 = vsyncpa [#allocation31], 1

</llo_original>
